<compile_context>
chip_gen: v6e
topology: v6e:2x2x1
jax: 0.10.0
libtpu: 0.0.40
codegen_flags: <defaults>
</compile_context>

<pallas_src>
import functools

import jax
import jax.numpy as jnp
from jax.experimental import pallas as pl
from jax.experimental.pallas import tpu as pltpu

NC = 1        # output channels
NGF = 28
NZ = 100      # latent dim
BN_EPS = 1e-5
LANES = 128   # TPU lane width: every GEMM output is padded to this many cols
GEMM_DTYPE = jnp.bfloat16

CH = (NZ, 4 * NGF, 2 * NGF, NGF, NC)             # (100, 112, 56, 28, 1)
KSZ = (4, 3, 4, 4)                               # kernel sizes per layer
_LAYER_SPECS = ((1, 0), (2, 1), (2, 1), (2, 1))  # (stride, padding) per layer

VMEM_LIMIT = 32 * 1024 * 1024


def _round_up(n, m):
    return ((n + m - 1) // m) * m


# ----------------------------------------------------------------------------
# Pallas kernels
# ----------------------------------------------------------------------------
def _gemm_bn_relu_kernel(a_ref, b_ref, gamma_ref, beta_ref, o_ref, *,
                         m_true, n_spatial):
    """o = relu(BN(a @ b)), fused epilogue on the VMEM-resident accumulator.

    Accumulator columns are `n_spatial` groups of 128 channels ((ho, wo, co)
    groups for layer 0, a single group for layer 1).  BatchNorm is PyTorch
    train-mode: per-channel biased statistics over the m_true * n_spatial
    real elements.  Zero padding rows contribute exactly 0 to both running
    sums, so dividing by the true count keeps stats exact.
    """
    acc = jnp.dot(a_ref[...], b_ref[...], preferred_element_type=jnp.float32)
    c = gamma_ref.shape[-1]
    s_sum = jnp.zeros((1, c), jnp.float32)
    s_sq = jnp.zeros((1, c), jnp.float32)
    for s in range(n_spatial):                   # static, 128-lane-aligned slices
        blk = acc[:, s * c:(s + 1) * c]
        s_sum = s_sum + jnp.sum(blk, axis=0, keepdims=True)
        s_sq = s_sq + jnp.sum(blk * blk, axis=0, keepdims=True)
    cnt = float(m_true * n_spatial)
    mean = s_sum / cnt
    var = s_sq / cnt - mean * mean               # biased variance
    inv_std = jax.lax.rsqrt(var + BN_EPS)
    scale = gamma_ref[...] * inv_std             # (1, C); padded gammas are 0
    shift = beta_ref[...] - mean * scale         # (1, C)
    for s in range(n_spatial):
        blk = acc[:, s * c:(s + 1) * c]
        o_ref[:, s * c:(s + 1) * c] = jnp.maximum(
            blk * scale + shift, 0.0).astype(o_ref.dtype)


def _gemm4_bn_relu_kernel(a_ref, b_ref, gamma_ref, beta_ref, o_ref, *, m_true):
    """Four parity GEMMs (sub-pixel ConvTranspose2d) + global BN(train)+ReLU.

    a_ref: (4, Mp, K)   one zero-free im2col matrix per output parity
    b_ref: (4, K, 128)  the matching 2x2 sub-kernel per parity
    BN statistics are accumulated over all 4 parities so they match the
    per-channel statistics of the full (N, C, H, W) layer output.
    """
    n_out = gamma_ref.shape[-1]
    accs = []
    s_sum = jnp.zeros((1, n_out), jnp.float32)
    s_sq = jnp.zeros((1, n_out), jnp.float32)
    for p in range(4):
        acc = jnp.dot(a_ref[p], b_ref[p], preferred_element_type=jnp.float32)
        accs.append(acc)
        s_sum = s_sum + jnp.sum(acc, axis=0, keepdims=True)
        s_sq = s_sq + jnp.sum(acc * acc, axis=0, keepdims=True)
    cnt = float(4 * m_true)
    mean = s_sum / cnt
    var = s_sq / cnt - mean * mean
    inv_std = jax.lax.rsqrt(var + BN_EPS)
    scale = gamma_ref[...] * inv_std
    shift = beta_ref[...] - mean * scale
    for p in range(4):
        o_ref[p] = jnp.maximum(accs[p] * scale + shift, 0.0).astype(o_ref.dtype)


def _gemm_tanh_kernel(a_ref, b_ref, o_ref):
    acc = jnp.dot(a_ref[...], b_ref[...], preferred_element_type=jnp.float32)
    o_ref[...] = jnp.tanh(acc).astype(o_ref.dtype)


# ----------------------------------------------------------------------------
# pallas_call wrappers
# ----------------------------------------------------------------------------
def gemm_bn_relu(a, b, gamma, beta, *, m_true, n_spatial,
                 out_dtype=GEMM_DTYPE):
    """Single-block GEMM + fused BatchNorm(train)+ReLU (layers 0-1)."""
    mp, k = a.shape
    _, n = b.shape
    return pl.pallas_call(
        functools.partial(_gemm_bn_relu_kernel, m_true=m_true,
                          n_spatial=n_spatial),
        out_shape=jax.ShapeDtypeStruct((mp, n), out_dtype),
        grid=(1,),
        in_specs=[
            pl.BlockSpec((mp, k), lambda i: (0, 0)),
            pl.BlockSpec((k, n), lambda i: (0, 0)),
            pl.BlockSpec((1, LANES), lambda i: (0, 0)),
            pl.BlockSpec((1, LANES), lambda i: (0, 0)),
        ],
        out_specs=pl.BlockSpec((mp, n), lambda i: (0, 0)),
        compiler_params=pltpu.CompilerParams(
            dimension_semantics=("arbitrary",),
            vmem_limit_bytes=VMEM_LIMIT),
    )(a, b, gamma, beta)


def gemm4_bn_relu(a, b, gamma, beta, *, m_true, out_dtype=GEMM_DTYPE):
    """4-parity sub-pixel GEMM + fused global BatchNorm(train)+ReLU (layer 2)."""
    p4, mp, k = a.shape
    _, _, n = b.shape
    return pl.pallas_call(
        functools.partial(_gemm4_bn_relu_kernel, m_true=m_true),
        out_shape=jax.ShapeDtypeStruct((p4, mp, n), out_dtype),
        grid=(1,),
        in_specs=[
            pl.BlockSpec((p4, mp, k), lambda i: (0, 0, 0)),
            pl.BlockSpec((p4, k, n), lambda i: (0, 0, 0)),
            pl.BlockSpec((1, LANES), lambda i: (0, 0)),
            pl.BlockSpec((1, LANES), lambda i: (0, 0)),
        ],
        out_specs=pl.BlockSpec((p4, mp, n), lambda i: (0, 0, 0)),
        compiler_params=pltpu.CompilerParams(
            dimension_semantics=("arbitrary",),
            vmem_limit_bytes=VMEM_LIMIT),
    )(a, b, gamma, beta)


def gemm4_tanh(a, b, *, tm):
    """4-parity sub-pixel GEMM + fused tanh (layer 3).

    Parities (and row tiles, when the batch is large) shard across a
    "parallel" grid, using both TensorCores on v7x.
    """
    p4, mp, k = a.shape
    _, _, n = b.shape
    assert mp % tm == 0
    return pl.pallas_call(
        _gemm_tanh_kernel,
        out_shape=jax.ShapeDtypeStruct((p4, mp, n), jnp.float32),
        grid=(p4, mp // tm),
        in_specs=[
            pl.BlockSpec((None, tm, k), lambda p, i: (p, i, 0)),
            pl.BlockSpec((None, k, n), lambda p, i: (p, 0, 0)),
        ],
        out_specs=pl.BlockSpec((None, tm, n), lambda p, i: (p, i, 0)),
        compiler_params=pltpu.CompilerParams(
            dimension_semantics=("parallel", "parallel"),
            vmem_limit_bytes=VMEM_LIMIT),
    )(a, b)


# ----------------------------------------------------------------------------
# ConvTranspose2d -> GEMM lowerings (plain-JAX glue, NHWC, bf16)
# ----------------------------------------------------------------------------
def _im2col_convT(h_nhwc, k, stride, pad):
    """Zero-dilated im2col lowering (used only for the tiny k=3 layer 1).

    A[(n*Ho+ho)*Wo+wo, (a*k+b)*Cin + ci] = padded/dilated input patch value.
    """
    n, h, w, cin = h_nhwc.shape
    hd, wd = (h - 1) * stride + 1, (w - 1) * stride + 1
    z = jnp.zeros((n, hd, wd, cin), h_nhwc.dtype)
    z = z.at[:, ::stride, ::stride, :].set(h_nhwc)
    p = k - 1 - pad
    z = jnp.pad(z, ((0, 0), (p, p), (p, p), (0, 0)))
    ho = hd + 2 * p - k + 1
    wo = wd + 2 * p - k + 1
    cols = [z[:, a:a + ho, b:b + wo, :] for a in range(k) for b in range(k)]
    patches = jnp.stack(cols, axis=3)            # (N, Ho, Wo, k*k, Cin)
    return patches.reshape(n * ho * wo, k * k * cin), ho, wo


def _im2col_subpixel(h_nhwc):
    """Sub-pixel (output-parity) im2col for ConvTranspose2d(k=4, s=2, p=1).

    Output position (oh, ow) = (2*i + r, 2*j + c); for each parity (r, c) only
    a 2x2 sub-kernel and a 2x2 input window contribute, so the A matrices are
    dense (no structural zeros).  Input pixel for parity r, tap a, row i is
    xp[i + r + a] where xp is the input padded by 1 (matching kernel row
    kh = 3 - 2*a - r).
    Returns A of shape (4, N*Hi*Wi, 4*Cin), parity index p = r*2 + c.
    """
    n, hi, wi, cin = h_nhwc.shape
    xp = jnp.pad(h_nhwc, ((0, 0), (1, 1), (1, 1), (0, 0)))
    mats = []
    for r in (0, 1):
        for c in (0, 1):
            taps = [xp[:, r + a:r + a + hi, c + b:c + b + wi, :]
                    for a in (0, 1) for b in (0, 1)]
            patch = jnp.stack(taps, axis=3)      # (N, Hi, Wi, 4, Cin)
            mats.append(patch.reshape(n * hi * wi, 4 * cin))
    return jnp.stack(mats, axis=0), hi, wi       # (4, M, 4*Cin)


def _subpixel_weight(w):
    """Per-parity 2x2 sub-kernels of a (Cin, Cout, 4, 4) ConvTranspose2d weight,
    rows ordered (a, b, ci) to match `_im2col_subpixel`, cout zero-padded to 128.
    """
    cin, cout = w.shape[0], w.shape[1]
    mats = []
    for r in (0, 1):
        for c in (0, 1):
            taps = [w[:, :, 3 - 2 * a - r, 3 - 2 * b - c]
                    for a in (0, 1) for b in (0, 1)]      # each (Cin, Cout)
            brc = jnp.stack(taps, axis=0).reshape(4 * cin, cout)
            mats.append(jnp.pad(brc, ((0, 0), (0, LANES - cout))))
    return jnp.stack(mats, axis=0)               # (4, 4*Cin, 128)


def _interleave_parities(y, n, hs, ws, cout):
    """(4, N*Hs*Ws, C) parity outputs -> (N, 2*Hs, 2*Ws, C) NHWC image."""
    y = y.reshape(2, 2, n, hs, ws, cout)         # (r, c, n, i, j, co)
    y = y.transpose(2, 3, 0, 4, 1, 5)            # (n, i, r, j, c, co)
    return y.reshape(n, 2 * hs, 2 * ws, cout)


# ----------------------------------------------------------------------------
# Parameters
# ----------------------------------------------------------------------------
def init_params(key):
    """DCGAN-style init with PyTorch layouts: w (Cin,Cout,k,k), gamma/beta (C,)."""
    keys = jax.random.split(key, 8)
    params = {}
    for li in range(4):
        cin, cout, k = CH[li], CH[li + 1], KSZ[li]
        params[f"w{li}"] = 0.02 * jax.random.normal(
            keys[li], (cin, cout, k, k), jnp.float32)
        if li < 3:
            params[f"gamma{li}"] = 1.0 + 0.02 * jax.random.normal(
                keys[4 + li], (cout,), jnp.float32)
            params[f"beta{li}"] = jnp.zeros((cout,), jnp.float32)
    return params


def prepare_gemm_params(params):
    """Re-layout PyTorch-style weights into lane-padded bf16 GEMM operands."""
    gp = {}
    # layer 0: 1x1 input -> dense.  B0[ci, (ho*4+wo)*128 + co] = w0[ci,co,ho,wo]
    b0 = jnp.transpose(params["w0"], (0, 2, 3, 1))          # (nz, 4, 4, Cout)
    b0 = jnp.pad(b0, ((0, 0), (0, 0), (0, 0), (0, LANES - CH[1])))
    gp["B0"] = b0.reshape(NZ, KSZ[0] * KSZ[0] * LANES).astype(GEMM_DTYPE)
    # layer 1: equivalent stride-1 conv weight (flipped, in/out swapped),
    # rows ordered (a, b, ci) to match the zero-dilated im2col columns.
    w = params["w1"]                                        # (Cin, Cout, 3, 3)
    cin, cout, k, _ = w.shape
    wf = jnp.flip(w, (2, 3)).transpose(2, 3, 0, 1)          # (k, k, Cin, Cout)
    wf = jnp.pad(wf, ((0, 0), (0, 0), (0, 0), (0, LANES - cout)))
    gp["B1"] = wf.reshape(k * k * cin, LANES).astype(GEMM_DTYPE)
    # layers 2-3: sub-pixel 2x2 sub-kernels per output parity.
    gp["B2"] = _subpixel_weight(params["w2"]).astype(GEMM_DTYPE)
    gp["B3"] = _subpixel_weight(params["w3"]).astype(GEMM_DTYPE)
    # gamma is ZERO-padded (not one-padded) so padded channels stay exactly 0.
    for li in (0, 1, 2):
        c = CH[li + 1]
        gp[f"gamma{li}"] = jnp.pad(params[f"gamma{li}"].reshape(1, c),
                                   ((0, 0), (0, LANES - c)))
        gp[f"beta{li}"] = jnp.pad(params[f"beta{li}"].reshape(1, c),
                                  ((0, 0), (0, LANES - c)))
    return gp


# ----------------------------------------------------------------------------
# Generator forward (public API: NCHW in, NCHW out, like the PyTorch module)
# ----------------------------------------------------------------------------
def generator_forward(x_nchw, gp):
    n = x_nchw.shape[0]

    # -- layer 0: ConvT(nz->112, k=4, s=1, p=0) on a 1x1 input == dense layer
    x2d = x_nchw.reshape(n, NZ).astype(GEMM_DTYPE)
    mp = _round_up(n, 16)
    x2d = jnp.pad(x2d, ((0, mp - n), (0, 0)))
    y = gemm_bn_relu(x2d, gp["B0"], gp["gamma0"], gp["beta0"],
                     m_true=n, n_spatial=KSZ[0] * KSZ[0])        # (mp, 16*128)
    h = y[:n].reshape(n, KSZ[0], KSZ[0], LANES)[..., :CH[1]]     # (n,4,4,112)

    # -- layer 1: k=3, s=2, p=1 via zero-dilated im2col + fused BN+ReLU
    a, ho, wo = _im2col_convT(h, KSZ[1], *_LAYER_SPECS[1])
    m = n * ho * wo
    mp = _round_up(m, 16)
    a = jnp.pad(a, ((0, mp - m), (0, 0)))
    y = gemm_bn_relu(a, gp["B1"], gp["gamma1"], gp["beta1"],
                     m_true=m, n_spatial=1)                      # (mp, 128)
    h = y[:m, :CH[2]].reshape(n, ho, wo, CH[2])                  # (n,7,7,56)

    # -- layer 2: k=4, s=2, p=1 via sub-pixel GEMMs + fused global BN+ReLU
    a4, hs, ws = _im2col_subpixel(h)                             # (4, m, 4*56)
    m = n * hs * ws
    mp = _round_up(m, 16)
    a4 = jnp.pad(a4, ((0, 0), (0, mp - m), (0, 0)))
    y = gemm4_bn_relu(a4, gp["B2"], gp["gamma2"], gp["beta2"], m_true=m)
    h = _interleave_parities(y[:, :m, :CH[3]], n, hs, ws, CH[3])  # (n,14,14,28)

    # -- layer 3: k=4, s=2, p=1 via sub-pixel GEMMs + fused tanh
    a4, hs, ws = _im2col_subpixel(h)                             # (4, m, 4*28)
    m = n * hs * ws
    if m > 2048:                       # tile rows at larger batches
        tm = 512
        mp = _round_up(m, tm)
    else:
        mp = _round_up(m, 16)
        tm = mp
    a4 = jnp.pad(a4, ((0, 0), (0, mp - m), (0, 0)))
    y = gemm4_tanh(a4, gp["B3"], tm=tm)                          # (4, mp, 128)
    out = _interleave_parities(y[:, :m, :NC], n, hs, ws, NC)     # (n,28,28,1)
    return out.transpose(0, 3, 1, 2)                             # (n,1,28,28)


# ----------------------------------------------------------------------------
# Plain-XLA reference (PyTorch ConvTranspose2d + train-mode BN semantics)
# ----------------------------------------------------------------------------
def reference_forward(x_nchw, params):
    h = x_nchw
    for li, (stride, pad) in enumerate(_LAYER_SPECS):
        w = params[f"w{li}"]
        k = w.shape[2]
        r = jnp.flip(w, (2, 3)).transpose(1, 0, 2, 3)            # (Cout,Cin,k,k)
        h = jax.lax.conv_general_dilated(
            h, r, window_strides=(1, 1),
            padding=[(k - 1 - pad, k - 1 - pad)] * 2,
            lhs_dilation=(stride, stride),
            dimension_numbers=("NCHW", "OIHW", "NCHW"),
            precision=jax.lax.Precision.HIGHEST)
        if li < 3:
            g = params[f"gamma{li}"].reshape(1, -1, 1, 1)
            b = params[f"beta{li}"].reshape(1, -1, 1, 1)
            mean = jnp.mean(h, axis=(0, 2, 3), keepdims=True)
            var = jnp.mean(jnp.square(h - mean), axis=(0, 2, 3), keepdims=True)
            h = jnp.maximum((h - mean) * jax.lax.rsqrt(var + BN_EPS) * g + b, 0.0)
        else:
            h = jnp.tanh(h)
    return h


if __name__ == "__main__":
    key = jax.random.PRNGKey(0)
    pkey, xkey = jax.random.split(key)
    params = init_params(pkey)
    gemm_params = prepare_gemm_params(params)

    batch = 2
    x = jax.random.normal(xkey, (batch, NZ, 1, 1), jnp.float32)  # latent input

    fwd = jax.jit(generator_forward)
    out = jax.block_until_ready(fwd(x, gemm_params))

    assert out.shape == (batch, NC, 28, 28), out.shape
    assert out.dtype == jnp.float32
    assert bool(jnp.all(jnp.isfinite(out)))
    assert bool(jnp.all(jnp.abs(out) <= 1.0 + 1e-6))             # tanh range

    # numerical check against a plain-XLA f32 reference of the PyTorch module
    # (tolerance accounts for bf16 GEMM operands / activations).
    ref = jax.block_until_ready(jax.jit(reference_forward)(x, params))
    max_err = float(jnp.max(jnp.abs(out - ref)))
    assert max_err < 6e-2, f"max abs error vs reference: {max_err}"

    print("KERNEL_OK")
</pallas_src>

<mosaic_0001>
module attributes {stable_mosaic.version = 11 : i64} {
  func.func @_gemm_bn_relu_kernel(%arg0: i32, %arg1: memref<16x100xbf16, #tpu.memory_space<vmem>>, %arg2: memref<100x2048xbf16, #tpu.memory_space<vmem>>, %arg3: memref<1x128xf32, #tpu.memory_space<vmem>>, %arg4: memref<1x128xf32, #tpu.memory_space<vmem>>, %arg5: memref<16x2048xbf16, #tpu.memory_space<vmem>>) attributes {dimension_semantics = [#tpu.dimension_semantics<arbitrary>], iteration_bounds = array<i64: 1>, scalar_prefetch = 0 : i64, scratch_operands = 0 : i64, tpu.core_type = #tpu.core_type<tc>, window_params = [{pipeline_mode = #tpu.pipeline_mode<synchronous>, transform_indices = @transform_0, window_bounds = array<i64: 16, 100>}, {pipeline_mode = #tpu.pipeline_mode<synchronous>, transform_indices = @transform_1, window_bounds = array<i64: 100, 2048>}, {pipeline_mode = #tpu.pipeline_mode<synchronous>, transform_indices = @transform_2, window_bounds = array<i64: 1, 128>}, {pipeline_mode = #tpu.pipeline_mode<synchronous>, transform_indices = @transform_3, window_bounds = array<i64: 1, 128>}, {pipeline_mode = #tpu.pipeline_mode<synchronous>, transform_indices = @transform_4, window_bounds = array<i64: 16, 2048>}]} {
    %c0 = arith.constant 0 : index
    %c0_0 = arith.constant 0 : index
    %0 = vector.load %arg1[%c0, %c0_0] : memref<16x100xbf16, #tpu.memory_space<vmem>>, vector<16x100xbf16>
    %c0_1 = arith.constant 0 : index
    %c0_2 = arith.constant 0 : index
    %1 = vector.load %arg2[%c0_1, %c0_2] : memref<100x2048xbf16, #tpu.memory_space<vmem>>, vector<100x2048xbf16>
    %cst = arith.constant dense<0.000000e+00> : vector<16x2048xf32>
    %2 = tpu.matmul %0, %1, %cst {dimension_numbers = #tpu.dot_dimension_numbers<[1], [0], [0], [1], [0, 0, 1, 1], [], []>} : vector<16x100xbf16>, vector<100x2048xbf16>, vector<16x2048xf32> -> vector<16x2048xf32>
    %cst_3 = arith.constant 0.000000e+00 : f32
    %3 = vector.broadcast %cst_3 : f32 to vector<1x128xf32>
    %cst_4 = arith.constant 0.000000e+00 : f32
    %4 = vector.broadcast %cst_4 : f32 to vector<1x128xf32>
    %5 = vector.extract_strided_slice %2 {offsets = [0, 0], sizes = [16, 128], strides = [1, 1]} : vector<16x2048xf32> to vector<16x128xf32>
    %cst_5 = arith.constant dense<0.000000e+00> : vector<128xf32>
    %6 = vector.multi_reduction <add>, %5, %cst_5 [0] : vector<16x128xf32> to vector<128xf32>
    %7 = vector.shape_cast %6 : vector<128xf32> to vector<1x128xf32>
    %8 = arith.addf %3, %7 : vector<1x128xf32>
    %9 = arith.mulf %5, %5 : vector<16x128xf32>
    %cst_6 = arith.constant dense<0.000000e+00> : vector<128xf32>
    %10 = vector.multi_reduction <add>, %9, %cst_6 [0] : vector<16x128xf32> to vector<128xf32>
    %11 = vector.shape_cast %10 : vector<128xf32> to vector<1x128xf32>
    %12 = arith.addf %4, %11 : vector<1x128xf32>
    %13 = vector.extract_strided_slice %2 {offsets = [0, 128], sizes = [16, 128], strides = [1, 1]} : vector<16x2048xf32> to vector<16x128xf32>
    %cst_7 = arith.constant dense<0.000000e+00> : vector<128xf32>
    %14 = vector.multi_reduction <add>, %13, %cst_7 [0] : vector<16x128xf32> to vector<128xf32>
    %15 = vector.shape_cast %14 : vector<128xf32> to vector<1x128xf32>
    %16 = arith.addf %8, %15 : vector<1x128xf32>
    %17 = arith.mulf %13, %13 : vector<16x128xf32>
    %cst_8 = arith.constant dense<0.000000e+00> : vector<128xf32>
    %18 = vector.multi_reduction <add>, %17, %cst_8 [0] : vector<16x128xf32> to vector<128xf32>
    %19 = vector.shape_cast %18 : vector<128xf32> to vector<1x128xf32>
    %20 = arith.addf %12, %19 : vector<1x128xf32>
    %21 = vector.extract_strided_slice %2 {offsets = [0, 256], sizes = [16, 128], strides = [1, 1]} : vector<16x2048xf32> to vector<16x128xf32>
    %cst_9 = arith.constant dense<0.000000e+00> : vector<128xf32>
    %22 = vector.multi_reduction <add>, %21, %cst_9 [0] : vector<16x128xf32> to vector<128xf32>
    %23 = vector.shape_cast %22 : vector<128xf32> to vector<1x128xf32>
    %24 = arith.addf %16, %23 : vector<1x128xf32>
    %25 = arith.mulf %21, %21 : vector<16x128xf32>
    %cst_10 = arith.constant dense<0.000000e+00> : vector<128xf32>
    %26 = vector.multi_reduction <add>, %25, %cst_10 [0] : vector<16x128xf32> to vector<128xf32>
    %27 = vector.shape_cast %26 : vector<128xf32> to vector<1x128xf32>
    %28 = arith.addf %20, %27 : vector<1x128xf32>
    %29 = vector.extract_strided_slice %2 {offsets = [0, 384], sizes = [16, 128], strides = [1, 1]} : vector<16x2048xf32> to vector<16x128xf32>
    %cst_11 = arith.constant dense<0.000000e+00> : vector<128xf32>
    %30 = vector.multi_reduction <add>, %29, %cst_11 [0] : vector<16x128xf32> to vector<128xf32>
    %31 = vector.shape_cast %30 : vector<128xf32> to vector<1x128xf32>
    %32 = arith.addf %24, %31 : vector<1x128xf32>
    %33 = arith.mulf %29, %29 : vector<16x128xf32>
    %cst_12 = arith.constant dense<0.000000e+00> : vector<128xf32>
    %34 = vector.multi_reduction <add>, %33, %cst_12 [0] : vector<16x128xf32> to vector<128xf32>
    %35 = vector.shape_cast %34 : vector<128xf32> to vector<1x128xf32>
    %36 = arith.addf %28, %35 : vector<1x128xf32>
    %37 = vector.extract_strided_slice %2 {offsets = [0, 512], sizes = [16, 128], strides = [1, 1]} : vector<16x2048xf32> to vector<16x128xf32>
    %cst_13 = arith.constant dense<0.000000e+00> : vector<128xf32>
    %38 = vector.multi_reduction <add>, %37, %cst_13 [0] : vector<16x128xf32> to vector<128xf32>
    %39 = vector.shape_cast %38 : vector<128xf32> to vector<1x128xf32>
    %40 = arith.addf %32, %39 : vector<1x128xf32>
    %41 = arith.mulf %37, %37 : vector<16x128xf32>
    %cst_14 = arith.constant dense<0.000000e+00> : vector<128xf32>
    %42 = vector.multi_reduction <add>, %41, %cst_14 [0] : vector<16x128xf32> to vector<128xf32>
    %43 = vector.shape_cast %42 : vector<128xf32> to vector<1x128xf32>
    %44 = arith.addf %36, %43 : vector<1x128xf32>
    %45 = vector.extract_strided_slice %2 {offsets = [0, 640], sizes = [16, 128], strides = [1, 1]} : vector<16x2048xf32> to vector<16x128xf32>
    %cst_15 = arith.constant dense<0.000000e+00> : vector<128xf32>
    %46 = vector.multi_reduction <add>, %45, %cst_15 [0] : vector<16x128xf32> to vector<128xf32>
    %47 = vector.shape_cast %46 : vector<128xf32> to vector<1x128xf32>
    %48 = arith.addf %40, %47 : vector<1x128xf32>
    %49 = arith.mulf %45, %45 : vector<16x128xf32>
    %cst_16 = arith.constant dense<0.000000e+00> : vector<128xf32>
    %50 = vector.multi_reduction <add>, %49, %cst_16 [0] : vector<16x128xf32> to vector<128xf32>
    %51 = vector.shape_cast %50 : vector<128xf32> to vector<1x128xf32>
    %52 = arith.addf %44, %51 : vector<1x128xf32>
    %53 = vector.extract_strided_slice %2 {offsets = [0, 768], sizes = [16, 128], strides = [1, 1]} : vector<16x2048xf32> to vector<16x128xf32>
    %cst_17 = arith.constant dense<0.000000e+00> : vector<128xf32>
    %54 = vector.multi_reduction <add>, %53, %cst_17 [0] : vector<16x128xf32> to vector<128xf32>
    %55 = vector.shape_cast %54 : vector<128xf32> to vector<1x128xf32>
    %56 = arith.addf %48, %55 : vector<1x128xf32>
    %57 = arith.mulf %53, %53 : vector<16x128xf32>
    %cst_18 = arith.constant dense<0.000000e+00> : vector<128xf32>
    %58 = vector.multi_reduction <add>, %57, %cst_18 [0] : vector<16x128xf32> to vector<128xf32>
    %59 = vector.shape_cast %58 : vector<128xf32> to vector<1x128xf32>
    %60 = arith.addf %52, %59 : vector<1x128xf32>
    %61 = vector.extract_strided_slice %2 {offsets = [0, 896], sizes = [16, 128], strides = [1, 1]} : vector<16x2048xf32> to vector<16x128xf32>
    %cst_19 = arith.constant dense<0.000000e+00> : vector<128xf32>
    %62 = vector.multi_reduction <add>, %61, %cst_19 [0] : vector<16x128xf32> to vector<128xf32>
    %63 = vector.shape_cast %62 : vector<128xf32> to vector<1x128xf32>
    %64 = arith.addf %56, %63 : vector<1x128xf32>
    %65 = arith.mulf %61, %61 : vector<16x128xf32>
    %cst_20 = arith.constant dense<0.000000e+00> : vector<128xf32>
    %66 = vector.multi_reduction <add>, %65, %cst_20 [0] : vector<16x128xf32> to vector<128xf32>
    %67 = vector.shape_cast %66 : vector<128xf32> to vector<1x128xf32>
    %68 = arith.addf %60, %67 : vector<1x128xf32>
    %69 = vector.extract_strided_slice %2 {offsets = [0, 1024], sizes = [16, 128], strides = [1, 1]} : vector<16x2048xf32> to vector<16x128xf32>
    %cst_21 = arith.constant dense<0.000000e+00> : vector<128xf32>
    %70 = vector.multi_reduction <add>, %69, %cst_21 [0] : vector<16x128xf32> to vector<128xf32>
    %71 = vector.shape_cast %70 : vector<128xf32> to vector<1x128xf32>
    %72 = arith.addf %64, %71 : vector<1x128xf32>
    %73 = arith.mulf %69, %69 : vector<16x128xf32>
    %cst_22 = arith.constant dense<0.000000e+00> : vector<128xf32>
    %74 = vector.multi_reduction <add>, %73, %cst_22 [0] : vector<16x128xf32> to vector<128xf32>
    %75 = vector.shape_cast %74 : vector<128xf32> to vector<1x128xf32>
    %76 = arith.addf %68, %75 : vector<1x128xf32>
    %77 = vector.extract_strided_slice %2 {offsets = [0, 1152], sizes = [16, 128], strides = [1, 1]} : vector<16x2048xf32> to vector<16x128xf32>
    %cst_23 = arith.constant dense<0.000000e+00> : vector<128xf32>
    %78 = vector.multi_reduction <add>, %77, %cst_23 [0] : vector<16x128xf32> to vector<128xf32>
    %79 = vector.shape_cast %78 : vector<128xf32> to vector<1x128xf32>
    %80 = arith.addf %72, %79 : vector<1x128xf32>
    %81 = arith.mulf %77, %77 : vector<16x128xf32>
    %cst_24 = arith.constant dense<0.000000e+00> : vector<128xf32>
    %82 = vector.multi_reduction <add>, %81, %cst_24 [0] : vector<16x128xf32> to vector<128xf32>
    %83 = vector.shape_cast %82 : vector<128xf32> to vector<1x128xf32>
    %84 = arith.addf %76, %83 : vector<1x128xf32>
    %85 = vector.extract_strided_slice %2 {offsets = [0, 1280], sizes = [16, 128], strides = [1, 1]} : vector<16x2048xf32> to vector<16x128xf32>
    %cst_25 = arith.constant dense<0.000000e+00> : vector<128xf32>
    %86 = vector.multi_reduction <add>, %85, %cst_25 [0] : vector<16x128xf32> to vector<128xf32>
    %87 = vector.shape_cast %86 : vector<128xf32> to vector<1x128xf32>
    %88 = arith.addf %80, %87 : vector<1x128xf32>
    %89 = arith.mulf %85, %85 : vector<16x128xf32>
    %cst_26 = arith.constant dense<0.000000e+00> : vector<128xf32>
    %90 = vector.multi_reduction <add>, %89, %cst_26 [0] : vector<16x128xf32> to vector<128xf32>
    %91 = vector.shape_cast %90 : vector<128xf32> to vector<1x128xf32>
    %92 = arith.addf %84, %91 : vector<1x128xf32>
    %93 = vector.extract_strided_slice %2 {offsets = [0, 1408], sizes = [16, 128], strides = [1, 1]} : vector<16x2048xf32> to vector<16x128xf32>
    %cst_27 = arith.constant dense<0.000000e+00> : vector<128xf32>
    %94 = vector.multi_reduction <add>, %93, %cst_27 [0] : vector<16x128xf32> to vector<128xf32>
    %95 = vector.shape_cast %94 : vector<128xf32> to vector<1x128xf32>
    %96 = arith.addf %88, %95 : vector<1x128xf32>
    %97 = arith.mulf %93, %93 : vector<16x128xf32>
    %cst_28 = arith.constant dense<0.000000e+00> : vector<128xf32>
    %98 = vector.multi_reduction <add>, %97, %cst_28 [0] : vector<16x128xf32> to vector<128xf32>
    %99 = vector.shape_cast %98 : vector<128xf32> to vector<1x128xf32>
    %100 = arith.addf %92, %99 : vector<1x128xf32>
    %101 = vector.extract_strided_slice %2 {offsets = [0, 1536], sizes = [16, 128], strides = [1, 1]} : vector<16x2048xf32> to vector<16x128xf32>
    %cst_29 = arith.constant dense<0.000000e+00> : vector<128xf32>
    %102 = vector.multi_reduction <add>, %101, %cst_29 [0] : vector<16x128xf32> to vector<128xf32>
    %103 = vector.shape_cast %102 : vector<128xf32> to vector<1x128xf32>
    %104 = arith.addf %96, %103 : vector<1x128xf32>
    %105 = arith.mulf %101, %101 : vector<16x128xf32>
    %cst_30 = arith.constant dense<0.000000e+00> : vector<128xf32>
    %106 = vector.multi_reduction <add>, %105, %cst_30 [0] : vector<16x128xf32> to vector<128xf32>
    %107 = vector.shape_cast %106 : vector<128xf32> to vector<1x128xf32>
    %108 = arith.addf %100, %107 : vector<1x128xf32>
    %109 = vector.extract_strided_slice %2 {offsets = [0, 1664], sizes = [16, 128], strides = [1, 1]} : vector<16x2048xf32> to vector<16x128xf32>
    %cst_31 = arith.constant dense<0.000000e+00> : vector<128xf32>
    %110 = vector.multi_reduction <add>, %109, %cst_31 [0] : vector<16x128xf32> to vector<128xf32>
    %111 = vector.shape_cast %110 : vector<128xf32> to vector<1x128xf32>
    %112 = arith.addf %104, %111 : vector<1x128xf32>
    %113 = arith.mulf %109, %109 : vector<16x128xf32>
    %cst_32 = arith.constant dense<0.000000e+00> : vector<128xf32>
    %114 = vector.multi_reduction <add>, %113, %cst_32 [0] : vector<16x128xf32> to vector<128xf32>
    %115 = vector.shape_cast %114 : vector<128xf32> to vector<1x128xf32>
    %116 = arith.addf %108, %115 : vector<1x128xf32>
    %117 = vector.extract_strided_slice %2 {offsets = [0, 1792], sizes = [16, 128], strides = [1, 1]} : vector<16x2048xf32> to vector<16x128xf32>
    %cst_33 = arith.constant dense<0.000000e+00> : vector<128xf32>
    %118 = vector.multi_reduction <add>, %117, %cst_33 [0] : vector<16x128xf32> to vector<128xf32>
    %119 = vector.shape_cast %118 : vector<128xf32> to vector<1x128xf32>
    %120 = arith.addf %112, %119 : vector<1x128xf32>
    %121 = arith.mulf %117, %117 : vector<16x128xf32>
    %cst_34 = arith.constant dense<0.000000e+00> : vector<128xf32>
    %122 = vector.multi_reduction <add>, %121, %cst_34 [0] : vector<16x128xf32> to vector<128xf32>
    %123 = vector.shape_cast %122 : vector<128xf32> to vector<1x128xf32>
    %124 = arith.addf %116, %123 : vector<1x128xf32>
    %125 = vector.extract_strided_slice %2 {offsets = [0, 1920], sizes = [16, 128], strides = [1, 1]} : vector<16x2048xf32> to vector<16x128xf32>
    %cst_35 = arith.constant dense<0.000000e+00> : vector<128xf32>
    %126 = vector.multi_reduction <add>, %125, %cst_35 [0] : vector<16x128xf32> to vector<128xf32>
    %127 = vector.shape_cast %126 : vector<128xf32> to vector<1x128xf32>
    %128 = arith.addf %120, %127 : vector<1x128xf32>
    %129 = arith.mulf %125, %125 : vector<16x128xf32>
    %cst_36 = arith.constant dense<0.000000e+00> : vector<128xf32>
    %130 = vector.multi_reduction <add>, %129, %cst_36 [0] : vector<16x128xf32> to vector<128xf32>
    %131 = vector.shape_cast %130 : vector<128xf32> to vector<1x128xf32>
    %132 = arith.addf %124, %131 : vector<1x128xf32>
    %cst_37 = arith.constant 3.200000e+01 : f32
    %133 = vector.broadcast %cst_37 : f32 to vector<1x128xf32>
    %134 = arith.divf %128, %133 : vector<1x128xf32>
    %cst_38 = arith.constant 3.200000e+01 : f32
    %135 = vector.broadcast %cst_38 : f32 to vector<1x128xf32>
    %136 = arith.divf %132, %135 : vector<1x128xf32>
    %137 = arith.mulf %134, %134 : vector<1x128xf32>
    %138 = arith.subf %136, %137 : vector<1x128xf32>
    %cst_39 = arith.constant 9.99999974E-6 : f32
    %139 = vector.broadcast %cst_39 : f32 to vector<1x128xf32>
    %140 = arith.addf %138, %139 : vector<1x128xf32>
    %141 = math.rsqrt %140 : vector<1x128xf32>
    %c0_40 = arith.constant 0 : index
    %c0_41 = arith.constant 0 : index
    %142 = vector.load %arg3[%c0_40, %c0_41] : memref<1x128xf32, #tpu.memory_space<vmem>>, vector<1x128xf32>
    %143 = arith.mulf %142, %141 : vector<1x128xf32>
    %c0_42 = arith.constant 0 : index
    %c0_43 = arith.constant 0 : index
    %144 = vector.load %arg4[%c0_42, %c0_43] : memref<1x128xf32, #tpu.memory_space<vmem>>, vector<1x128xf32>
    %145 = arith.mulf %134, %143 : vector<1x128xf32>
    %146 = arith.subf %144, %145 : vector<1x128xf32>
    %147 = vector.extract_strided_slice %2 {offsets = [0, 0], sizes = [16, 128], strides = [1, 1]} : vector<16x2048xf32> to vector<16x128xf32>
    %148 = vector.broadcast %143 : vector<1x128xf32> to vector<16x128xf32>
    %149 = arith.mulf %147, %148 : vector<16x128xf32>
    %150 = vector.broadcast %146 : vector<1x128xf32> to vector<16x128xf32>
    %151 = arith.addf %149, %150 : vector<16x128xf32>
    %cst_44 = arith.constant 0.000000e+00 : f32
    %152 = vector.broadcast %cst_44 : f32 to vector<16x128xf32>
    %153 = arith.maximumf %151, %152 : vector<16x128xf32>
    %154 = arith.truncf %153 : vector<16x128xf32> to vector<16x128xbf16>
    %c0_45 = arith.constant 0 : index
    %c0_46 = arith.constant 0 : index
    %155 = vector.load %arg5[%c0_45, %c0_46] : memref<16x2048xbf16, #tpu.memory_space<vmem>>, vector<16x128xbf16>
    tpu.vector_store %arg5[%c0_45, %c0_46], %154 {strides = array<i32>} : memref<16x2048xbf16, #tpu.memory_space<vmem>>, vector<16x128xbf16>,
    %156 = vector.extract_strided_slice %2 {offsets = [0, 128], sizes = [16, 128], strides = [1, 1]} : vector<16x2048xf32> to vector<16x128xf32>
    %157 = vector.broadcast %143 : vector<1x128xf32> to vector<16x128xf32>
    %158 = arith.mulf %156, %157 : vector<16x128xf32>
    %159 = vector.broadcast %146 : vector<1x128xf32> to vector<16x128xf32>
    %160 = arith.addf %158, %159 : vector<16x128xf32>
    %cst_47 = arith.constant 0.000000e+00 : f32
    %161 = vector.broadcast %cst_47 : f32 to vector<16x128xf32>
    %162 = arith.maximumf %160, %161 : vector<16x128xf32>
    %163 = arith.truncf %162 : vector<16x128xf32> to vector<16x128xbf16>
    %c0_48 = arith.constant 0 : index
    %c128 = arith.constant 128 : index
    %164 = vector.load %arg5[%c0_48, %c128] : memref<16x2048xbf16, #tpu.memory_space<vmem>>, vector<16x128xbf16>
    tpu.vector_store %arg5[%c0_48, %c128], %163 {strides = array<i32>} : memref<16x2048xbf16, #tpu.memory_space<vmem>>, vector<16x128xbf16>,
    %165 = vector.extract_strided_slice %2 {offsets = [0, 256], sizes = [16, 128], strides = [1, 1]} : vector<16x2048xf32> to vector<16x128xf32>
    %166 = vector.broadcast %143 : vector<1x128xf32> to vector<16x128xf32>
    %167 = arith.mulf %165, %166 : vector<16x128xf32>
    %168 = vector.broadcast %146 : vector<1x128xf32> to vector<16x128xf32>
    %169 = arith.addf %167, %168 : vector<16x128xf32>
    %cst_49 = arith.constant 0.000000e+00 : f32
    %170 = vector.broadcast %cst_49 : f32 to vector<16x128xf32>
    %171 = arith.maximumf %169, %170 : vector<16x128xf32>
    %172 = arith.truncf %171 : vector<16x128xf32> to vector<16x128xbf16>
    %c0_50 = arith.constant 0 : index
    %c256 = arith.constant 256 : index
    %173 = vector.load %arg5[%c0_50, %c256] : memref<16x2048xbf16, #tpu.memory_space<vmem>>, vector<16x128xbf16>
    tpu.vector_store %arg5[%c0_50, %c256], %172 {strides = array<i32>} : memref<16x2048xbf16, #tpu.memory_space<vmem>>, vector<16x128xbf16>,
    %174 = vector.extract_strided_slice %2 {offsets = [0, 384], sizes = [16, 128], strides = [1, 1]} : vector<16x2048xf32> to vector<16x128xf32>
    %175 = vector.broadcast %143 : vector<1x128xf32> to vector<16x128xf32>
    %176 = arith.mulf %174, %175 : vector<16x128xf32>
    %177 = vector.broadcast %146 : vector<1x128xf32> to vector<16x128xf32>
    %178 = arith.addf %176, %177 : vector<16x128xf32>
    %cst_51 = arith.constant 0.000000e+00 : f32
    %179 = vector.broadcast %cst_51 : f32 to vector<16x128xf32>
    %180 = arith.maximumf %178, %179 : vector<16x128xf32>
    %181 = arith.truncf %180 : vector<16x128xf32> to vector<16x128xbf16>
    %c0_52 = arith.constant 0 : index
    %c384 = arith.constant 384 : index
    %182 = vector.load %arg5[%c0_52, %c384] : memref<16x2048xbf16, #tpu.memory_space<vmem>>, vector<16x128xbf16>
    tpu.vector_store %arg5[%c0_52, %c384], %181 {strides = array<i32>} : memref<16x2048xbf16, #tpu.memory_space<vmem>>, vector<16x128xbf16>,
    %183 = vector.extract_strided_slice %2 {offsets = [0, 512], sizes = [16, 128], strides = [1, 1]} : vector<16x2048xf32> to vector<16x128xf32>
    %184 = vector.broadcast %143 : vector<1x128xf32> to vector<16x128xf32>
    %185 = arith.mulf %183, %184 : vector<16x128xf32>
    %186 = vector.broadcast %146 : vector<1x128xf32> to vector<16x128xf32>
    %187 = arith.addf %185, %186 : vector<16x128xf32>
    %cst_53 = arith.constant 0.000000e+00 : f32
    %188 = vector.broadcast %cst_53 : f32 to vector<16x128xf32>
    %189 = arith.maximumf %187, %188 : vector<16x128xf32>
    %190 = arith.truncf %189 : vector<16x128xf32> to vector<16x128xbf16>
    %c0_54 = arith.constant 0 : index
    %c512 = arith.constant 512 : index
    %191 = vector.load %arg5[%c0_54, %c512] : memref<16x2048xbf16, #tpu.memory_space<vmem>>, vector<16x128xbf16>
    tpu.vector_store %arg5[%c0_54, %c512], %190 {strides = array<i32>} : memref<16x2048xbf16, #tpu.memory_space<vmem>>, vector<16x128xbf16>,
    %192 = vector.extract_strided_slice %2 {offsets = [0, 640], sizes = [16, 128], strides = [1, 1]} : vector<16x2048xf32> to vector<16x128xf32>
    %193 = vector.broadcast %143 : vector<1x128xf32> to vector<16x128xf32>
    %194 = arith.mulf %192, %193 : vector<16x128xf32>
    %195 = vector.broadcast %146 : vector<1x128xf32> to vector<16x128xf32>
    %196 = arith.addf %194, %195 : vector<16x128xf32>
    %cst_55 = arith.constant 0.000000e+00 : f32
    %197 = vector.broadcast %cst_55 : f32 to vector<16x128xf32>
    %198 = arith.maximumf %196, %197 : vector<16x128xf32>
    %199 = arith.truncf %198 : vector<16x128xf32> to vector<16x128xbf16>
    %c0_56 = arith.constant 0 : index
    %c640 = arith.constant 640 : index
    %200 = vector.load %arg5[%c0_56, %c640] : memref<16x2048xbf16, #tpu.memory_space<vmem>>, vector<16x128xbf16>
    tpu.vector_store %arg5[%c0_56, %c640], %199 {strides = array<i32>} : memref<16x2048xbf16, #tpu.memory_space<vmem>>, vector<16x128xbf16>,
    %201 = vector.extract_strided_slice %2 {offsets = [0, 768], sizes = [16, 128], strides = [1, 1]} : vector<16x2048xf32> to vector<16x128xf32>
    %202 = vector.broadcast %143 : vector<1x128xf32> to vector<16x128xf32>
    %203 = arith.mulf %201, %202 : vector<16x128xf32>
    %204 = vector.broadcast %146 : vector<1x128xf32> to vector<16x128xf32>
    %205 = arith.addf %203, %204 : vector<16x128xf32>
    %cst_57 = arith.constant 0.000000e+00 : f32
    %206 = vector.broadcast %cst_57 : f32 to vector<16x128xf32>
    %207 = arith.maximumf %205, %206 : vector<16x128xf32>
    %208 = arith.truncf %207 : vector<16x128xf32> to vector<16x128xbf16>
    %c0_58 = arith.constant 0 : index
    %c768 = arith.constant 768 : index
    %209 = vector.load %arg5[%c0_58, %c768] : memref<16x2048xbf16, #tpu.memory_space<vmem>>, vector<16x128xbf16>
    tpu.vector_store %arg5[%c0_58, %c768], %208 {strides = array<i32>} : memref<16x2048xbf16, #tpu.memory_space<vmem>>, vector<16x128xbf16>,
    %210 = vector.extract_strided_slice %2 {offsets = [0, 896], sizes = [16, 128], strides = [1, 1]} : vector<16x2048xf32> to vector<16x128xf32>
    %211 = vector.broadcast %143 : vector<1x128xf32> to vector<16x128xf32>
    %212 = arith.mulf %210, %211 : vector<16x128xf32>
    %213 = vector.broadcast %146 : vector<1x128xf32> to vector<16x128xf32>
    %214 = arith.addf %212, %213 : vector<16x128xf32>
    %cst_59 = arith.constant 0.000000e+00 : f32
    %215 = vector.broadcast %cst_59 : f32 to vector<16x128xf32>
    %216 = arith.maximumf %214, %215 : vector<16x128xf32>
    %217 = arith.truncf %216 : vector<16x128xf32> to vector<16x128xbf16>
    %c0_60 = arith.constant 0 : index
    %c896 = arith.constant 896 : index
    %218 = vector.load %arg5[%c0_60, %c896] : memref<16x2048xbf16, #tpu.memory_space<vmem>>, vector<16x128xbf16>
    tpu.vector_store %arg5[%c0_60, %c896], %217 {strides = array<i32>} : memref<16x2048xbf16, #tpu.memory_space<vmem>>, vector<16x128xbf16>,
    %219 = vector.extract_strided_slice %2 {offsets = [0, 1024], sizes = [16, 128], strides = [1, 1]} : vector<16x2048xf32> to vector<16x128xf32>
    %220 = vector.broadcast %143 : vector<1x128xf32> to vector<16x128xf32>
    %221 = arith.mulf %219, %220 : vector<16x128xf32>
    %222 = vector.broadcast %146 : vector<1x128xf32> to vector<16x128xf32>
    %223 = arith.addf %221, %222 : vector<16x128xf32>
    %cst_61 = arith.constant 0.000000e+00 : f32
    %224 = vector.broadcast %cst_61 : f32 to vector<16x128xf32>
    %225 = arith.maximumf %223, %224 : vector<16x128xf32>
    %226 = arith.truncf %225 : vector<16x128xf32> to vector<16x128xbf16>
    %c0_62 = arith.constant 0 : index
    %c1024 = arith.constant 1024 : index
    %227 = vector.load %arg5[%c0_62, %c1024] : memref<16x2048xbf16, #tpu.memory_space<vmem>>, vector<16x128xbf16>
    tpu.vector_store %arg5[%c0_62, %c1024], %226 {strides = array<i32>} : memref<16x2048xbf16, #tpu.memory_space<vmem>>, vector<16x128xbf16>,
    %228 = vector.extract_strided_slice %2 {offsets = [0, 1152], sizes = [16, 128], strides = [1, 1]} : vector<16x2048xf32> to vector<16x128xf32>
    %229 = vector.broadcast %143 : vector<1x128xf32> to vector<16x128xf32>
    %230 = arith.mulf %228, %229 : vector<16x128xf32>
    %231 = vector.broadcast %146 : vector<1x128xf32> to vector<16x128xf32>
    %232 = arith.addf %230, %231 : vector<16x128xf32>
    %cst_63 = arith.constant 0.000000e+00 : f32
    %233 = vector.broadcast %cst_63 : f32 to vector<16x128xf32>
    %234 = arith.maximumf %232, %233 : vector<16x128xf32>
    %235 = arith.truncf %234 : vector<16x128xf32> to vector<16x128xbf16>
    %c0_64 = arith.constant 0 : index
    %c1152 = arith.constant 1152 : index
    %236 = vector.load %arg5[%c0_64, %c1152] : memref<16x2048xbf16, #tpu.memory_space<vmem>>, vector<16x128xbf16>
    tpu.vector_store %arg5[%c0_64, %c1152], %235 {strides = array<i32>} : memref<16x2048xbf16, #tpu.memory_space<vmem>>, vector<16x128xbf16>,
    %237 = vector.extract_strided_slice %2 {offsets = [0, 1280], sizes = [16, 128], strides = [1, 1]} : vector<16x2048xf32> to vector<16x128xf32>
    %238 = vector.broadcast %143 : vector<1x128xf32> to vector<16x128xf32>
    %239 = arith.mulf %237, %238 : vector<16x128xf32>
    %240 = vector.broadcast %146 : vector<1x128xf32> to vector<16x128xf32>
    %241 = arith.addf %239, %240 : vector<16x128xf32>
    %cst_65 = arith.constant 0.000000e+00 : f32
    %242 = vector.broadcast %cst_65 : f32 to vector<16x128xf32>
    %243 = arith.maximumf %241, %242 : vector<16x128xf32>
    %244 = arith.truncf %243 : vector<16x128xf32> to vector<16x128xbf16>
    %c0_66 = arith.constant 0 : index
    %c1280 = arith.constant 1280 : index
    %245 = vector.load %arg5[%c0_66, %c1280] : memref<16x2048xbf16, #tpu.memory_space<vmem>>, vector<16x128xbf16>
    tpu.vector_store %arg5[%c0_66, %c1280], %244 {strides = array<i32>} : memref<16x2048xbf16, #tpu.memory_space<vmem>>, vector<16x128xbf16>,
    %246 = vector.extract_strided_slice %2 {offsets = [0, 1408], sizes = [16, 128], strides = [1, 1]} : vector<16x2048xf32> to vector<16x128xf32>
    %247 = vector.broadcast %143 : vector<1x128xf32> to vector<16x128xf32>
    %248 = arith.mulf %246, %247 : vector<16x128xf32>
    %249 = vector.broadcast %146 : vector<1x128xf32> to vector<16x128xf32>
    %250 = arith.addf %248, %249 : vector<16x128xf32>
    %cst_67 = arith.constant 0.000000e+00 : f32
    %251 = vector.broadcast %cst_67 : f32 to vector<16x128xf32>
    %252 = arith.maximumf %250, %251 : vector<16x128xf32>
    %253 = arith.truncf %252 : vector<16x128xf32> to vector<16x128xbf16>
    %c0_68 = arith.constant 0 : index
    %c1408 = arith.constant 1408 : index
    %254 = vector.load %arg5[%c0_68, %c1408] : memref<16x2048xbf16, #tpu.memory_space<vmem>>, vector<16x128xbf16>
    tpu.vector_store %arg5[%c0_68, %c1408], %253 {strides = array<i32>} : memref<16x2048xbf16, #tpu.memory_space<vmem>>, vector<16x128xbf16>,
    %255 = vector.extract_strided_slice %2 {offsets = [0, 1536], sizes = [16, 128], strides = [1, 1]} : vector<16x2048xf32> to vector<16x128xf32>
    %256 = vector.broadcast %143 : vector<1x128xf32> to vector<16x128xf32>
    %257 = arith.mulf %255, %256 : vector<16x128xf32>
    %258 = vector.broadcast %146 : vector<1x128xf32> to vector<16x128xf32>
    %259 = arith.addf %257, %258 : vector<16x128xf32>
    %cst_69 = arith.constant 0.000000e+00 : f32
    %260 = vector.broadcast %cst_69 : f32 to vector<16x128xf32>
    %261 = arith.maximumf %259, %260 : vector<16x128xf32>
    %262 = arith.truncf %261 : vector<16x128xf32> to vector<16x128xbf16>
    %c0_70 = arith.constant 0 : index
    %c1536 = arith.constant 1536 : index
    %263 = vector.load %arg5[%c0_70, %c1536] : memref<16x2048xbf16, #tpu.memory_space<vmem>>, vector<16x128xbf16>
    tpu.vector_store %arg5[%c0_70, %c1536], %262 {strides = array<i32>} : memref<16x2048xbf16, #tpu.memory_space<vmem>>, vector<16x128xbf16>,
    %264 = vector.extract_strided_slice %2 {offsets = [0, 1664], sizes = [16, 128], strides = [1, 1]} : vector<16x2048xf32> to vector<16x128xf32>
    %265 = vector.broadcast %143 : vector<1x128xf32> to vector<16x128xf32>
    %266 = arith.mulf %264, %265 : vector<16x128xf32>
    %267 = vector.broadcast %146 : vector<1x128xf32> to vector<16x128xf32>
    %268 = arith.addf %266, %267 : vector<16x128xf32>
    %cst_71 = arith.constant 0.000000e+00 : f32
    %269 = vector.broadcast %cst_71 : f32 to vector<16x128xf32>
    %270 = arith.maximumf %268, %269 : vector<16x128xf32>
    %271 = arith.truncf %270 : vector<16x128xf32> to vector<16x128xbf16>
    %c0_72 = arith.constant 0 : index
    %c1664 = arith.constant 1664 : index
    %272 = vector.load %arg5[%c0_72, %c1664] : memref<16x2048xbf16, #tpu.memory_space<vmem>>, vector<16x128xbf16>
    tpu.vector_store %arg5[%c0_72, %c1664], %271 {strides = array<i32>} : memref<16x2048xbf16, #tpu.memory_space<vmem>>, vector<16x128xbf16>,
    %273 = vector.extract_strided_slice %2 {offsets = [0, 1792], sizes = [16, 128], strides = [1, 1]} : vector<16x2048xf32> to vector<16x128xf32>
    %274 = vector.broadcast %143 : vector<1x128xf32> to vector<16x128xf32>
    %275 = arith.mulf %273, %274 : vector<16x128xf32>
    %276 = vector.broadcast %146 : vector<1x128xf32> to vector<16x128xf32>
    %277 = arith.addf %275, %276 : vector<16x128xf32>
    %cst_73 = arith.constant 0.000000e+00 : f32
    %278 = vector.broadcast %cst_73 : f32 to vector<16x128xf32>
    %279 = arith.maximumf %277, %278 : vector<16x128xf32>
    %280 = arith.truncf %279 : vector<16x128xf32> to vector<16x128xbf16>
    %c0_74 = arith.constant 0 : index
    %c1792 = arith.constant 1792 : index
    %281 = vector.load %arg5[%c0_74, %c1792] : memref<16x2048xbf16, #tpu.memory_space<vmem>>, vector<16x128xbf16>
    tpu.vector_store %arg5[%c0_74, %c1792], %280 {strides = array<i32>} : memref<16x2048xbf16, #tpu.memory_space<vmem>>, vector<16x128xbf16>,
    %282 = vector.extract_strided_slice %2 {offsets = [0, 1920], sizes = [16, 128], strides = [1, 1]} : vector<16x2048xf32> to vector<16x128xf32>
    %283 = vector.broadcast %143 : vector<1x128xf32> to vector<16x128xf32>
    %284 = arith.mulf %282, %283 : vector<16x128xf32>
    %285 = vector.broadcast %146 : vector<1x128xf32> to vector<16x128xf32>
    %286 = arith.addf %284, %285 : vector<16x128xf32>
    %cst_75 = arith.constant 0.000000e+00 : f32
    %287 = vector.broadcast %cst_75 : f32 to vector<16x128xf32>
    %288 = arith.maximumf %286, %287 : vector<16x128xf32>
    %289 = arith.truncf %288 : vector<16x128xf32> to vector<16x128xbf16>
    %c0_76 = arith.constant 0 : index
    %c1920 = arith.constant 1920 : index
    %290 = vector.load %arg5[%c0_76, %c1920] : memref<16x2048xbf16, #tpu.memory_space<vmem>>, vector<16x128xbf16>
    tpu.vector_store %arg5[%c0_76, %c1920], %289 {strides = array<i32>} : memref<16x2048xbf16, #tpu.memory_space<vmem>>, vector<16x128xbf16>,
    return
  }
  func.func @transform_0(%arg0: i32) -> (i32, i32) {
    %c0_i32 = arith.constant 0 : i32
    %c0_i32_0 = arith.constant 0 : i32
    %c0_i32_1 = arith.constant 0 : i32
    return %c0_i32, %c0_i32_0 : i32, i32
  }
  func.func @transform_1(%arg0: i32) -> (i32, i32) {
    %c0_i32 = arith.constant 0 : i32
    %c0_i32_0 = arith.constant 0 : i32
    %c0_i32_1 = arith.constant 0 : i32
    return %c0_i32, %c0_i32_0 : i32, i32
  }
  func.func @transform_2(%arg0: i32) -> (i32, i32) {
    %c0_i32 = arith.constant 0 : i32
    %c0_i32_0 = arith.constant 0 : i32
    %c0_i32_1 = arith.constant 0 : i32
    return %c0_i32, %c0_i32_0 : i32, i32
  }
  func.func @transform_3(%arg0: i32) -> (i32, i32) {
    %c0_i32 = arith.constant 0 : i32
    %c0_i32_0 = arith.constant 0 : i32
    %c0_i32_1 = arith.constant 0 : i32
    return %c0_i32, %c0_i32_0 : i32, i32
  }
  func.func @transform_4(%arg0: i32) -> (i32, i32) {
    %c0_i32 = arith.constant 0 : i32
    %c0_i32_0 = arith.constant 0 : i32
    %c0_i32_1 = arith.constant 0 : i32
    return %c0_i32, %c0_i32_0 : i32, i32
  }
}

module attributes {stable_mosaic.version = 11 : i64} {
  func.func @_gemm_bn_relu_kernel(%arg0: i32, %arg1: memref<112x1008xbf16, #tpu.memory_space<vmem>>, %arg2: memref<1008x128xbf16, #tpu.memory_space<vmem>>, %arg3: memref<1x128xf32, #tpu.memory_space<vmem>>, %arg4: memref<1x128xf32, #tpu.memory_space<vmem>>, %arg5: memref<112x128xbf16, #tpu.memory_space<vmem>>) attributes {dimension_semantics = [#tpu.dimension_semantics<arbitrary>], iteration_bounds = array<i64: 1>, scalar_prefetch = 0 : i64, scratch_operands = 0 : i64, tpu.core_type = #tpu.core_type<tc>, window_params = [{pipeline_mode = #tpu.pipeline_mode<synchronous>, transform_indices = @transform_0, window_bounds = array<i64: 112, 1008>}, {pipeline_mode = #tpu.pipeline_mode<synchronous>, transform_indices = @transform_1, window_bounds = array<i64: 1008, 128>}, {pipeline_mode = #tpu.pipeline_mode<synchronous>, transform_indices = @transform_2, window_bounds = array<i64: 1, 128>}, {pipeline_mode = #tpu.pipeline_mode<synchronous>, transform_indices = @transform_3, window_bounds = array<i64: 1, 128>}, {pipeline_mode = #tpu.pipeline_mode<synchronous>, transform_indices = @transform_4, window_bounds = array<i64: 112, 128>}]} {
    %c0 = arith.constant 0 : index
    %c0_0 = arith.constant 0 : index
    %0 = vector.load %arg1[%c0, %c0_0] : memref<112x1008xbf16, #tpu.memory_space<vmem>>, vector<112x1008xbf16>
    %c0_1 = arith.constant 0 : index
    %c0_2 = arith.constant 0 : index
    %1 = vector.load %arg2[%c0_1, %c0_2] : memref<1008x128xbf16, #tpu.memory_space<vmem>>, vector<1008x128xbf16>
    %cst = arith.constant dense<0.000000e+00> : vector<112x128xf32>
    %2 = tpu.matmul %0, %1, %cst {dimension_numbers = #tpu.dot_dimension_numbers<[1], [0], [0], [1], [0, 0, 1, 1], [], []>} : vector<112x1008xbf16>, vector<1008x128xbf16>, vector<112x128xf32> -> vector<112x128xf32>
    %cst_3 = arith.constant 0.000000e+00 : f32
    %3 = vector.broadcast %cst_3 : f32 to vector<1x128xf32>
    %cst_4 = arith.constant 0.000000e+00 : f32
    %4 = vector.broadcast %cst_4 : f32 to vector<1x128xf32>
    %cst_5 = arith.constant dense<0.000000e+00> : vector<128xf32>
    %5 = vector.multi_reduction <add>, %2, %cst_5 [0] : vector<112x128xf32> to vector<128xf32>
    %6 = vector.shape_cast %5 : vector<128xf32> to vector<1x128xf32>
    %7 = arith.addf %3, %6 : vector<1x128xf32>
    %8 = arith.mulf %2, %2 : vector<112x128xf32>
    %cst_6 = arith.constant dense<0.000000e+00> : vector<128xf32>
    %9 = vector.multi_reduction <add>, %8, %cst_6 [0] : vector<112x128xf32> to vector<128xf32>
    %10 = vector.shape_cast %9 : vector<128xf32> to vector<1x128xf32>
    %11 = arith.addf %4, %10 : vector<1x128xf32>
    %cst_7 = arith.constant 9.800000e+01 : f32
    %12 = vector.broadcast %cst_7 : f32 to vector<1x128xf32>
    %13 = arith.divf %7, %12 : vector<1x128xf32>
    %cst_8 = arith.constant 9.800000e+01 : f32
    %14 = vector.broadcast %cst_8 : f32 to vector<1x128xf32>
    %15 = arith.divf %11, %14 : vector<1x128xf32>
    %16 = arith.mulf %13, %13 : vector<1x128xf32>
    %17 = arith.subf %15, %16 : vector<1x128xf32>
    %cst_9 = arith.constant 9.99999974E-6 : f32
    %18 = vector.broadcast %cst_9 : f32 to vector<1x128xf32>
    %19 = arith.addf %17, %18 : vector<1x128xf32>
    %20 = math.rsqrt %19 : vector<1x128xf32>
    %c0_10 = arith.constant 0 : index
    %c0_11 = arith.constant 0 : index
    %21 = vector.load %arg3[%c0_10, %c0_11] : memref<1x128xf32, #tpu.memory_space<vmem>>, vector<1x128xf32>
    %22 = arith.mulf %21, %20 : vector<1x128xf32>
    %c0_12 = arith.constant 0 : index
    %c0_13 = arith.constant 0 : index
    %23 = vector.load %arg4[%c0_12, %c0_13] : memref<1x128xf32, #tpu.memory_space<vmem>>, vector<1x128xf32>
    %24 = arith.mulf %13, %22 : vector<1x128xf32>
    %25 = arith.subf %23, %24 : vector<1x128xf32>
    %26 = vector.broadcast %22 : vector<1x128xf32> to vector<112x128xf32>
    %27 = arith.mulf %2, %26 : vector<112x128xf32>
    %28 = vector.broadcast %25 : vector<1x128xf32> to vector<112x128xf32>
    %29 = arith.addf %27, %28 : vector<112x128xf32>
    %cst_14 = arith.constant 0.000000e+00 : f32
    %30 = vector.broadcast %cst_14 : f32 to vector<112x128xf32>
    %31 = arith.maximumf %29, %30 : vector<112x128xf32>
    %32 = arith.truncf %31 : vector<112x128xf32> to vector<112x128xbf16>
    %c0_15 = arith.constant 0 : index
    %c0_16 = arith.constant 0 : index
    %33 = vector.load %arg5[%c0_15, %c0_16] : memref<112x128xbf16, #tpu.memory_space<vmem>>, vector<112x128xbf16>
    tpu.vector_store %arg5[%c0_15, %c0_16], %32 {strides = array<i32>} : memref<112x128xbf16, #tpu.memory_space<vmem>>, vector<112x128xbf16>,
    return
  }
  func.func @transform_0(%arg0: i32) -> (i32, i32) {
    %c0_i32 = arith.constant 0 : i32
    %c0_i32_0 = arith.constant 0 : i32
    %c0_i32_1 = arith.constant 0 : i32
    return %c0_i32, %c0_i32_0 : i32, i32
  }
  func.func @transform_1(%arg0: i32) -> (i32, i32) {
    %c0_i32 = arith.constant 0 : i32
    %c0_i32_0 = arith.constant 0 : i32
    %c0_i32_1 = arith.constant 0 : i32
    return %c0_i32, %c0_i32_0 : i32, i32
  }
  func.func @transform_2(%arg0: i32) -> (i32, i32) {
    %c0_i32 = arith.constant 0 : i32
    %c0_i32_0 = arith.constant 0 : i32
    %c0_i32_1 = arith.constant 0 : i32
    return %c0_i32, %c0_i32_0 : i32, i32
  }
  func.func @transform_3(%arg0: i32) -> (i32, i32) {
    %c0_i32 = arith.constant 0 : i32
    %c0_i32_0 = arith.constant 0 : i32
    %c0_i32_1 = arith.constant 0 : i32
    return %c0_i32, %c0_i32_0 : i32, i32
  }
  func.func @transform_4(%arg0: i32) -> (i32, i32) {
    %c0_i32 = arith.constant 0 : i32
    %c0_i32_0 = arith.constant 0 : i32
    %c0_i32_1 = arith.constant 0 : i32
    return %c0_i32, %c0_i32_0 : i32, i32
  }
}

module attributes {stable_mosaic.version = 11 : i64} {
  func.func @_gemm4_bn_relu_kernel(%arg0: i32, %arg1: memref<4x112x224xbf16, #tpu.memory_space<vmem>>, %arg2: memref<4x224x128xbf16, #tpu.memory_space<vmem>>, %arg3: memref<1x128xf32, #tpu.memory_space<vmem>>, %arg4: memref<1x128xf32, #tpu.memory_space<vmem>>, %arg5: memref<4x112x128xbf16, #tpu.memory_space<vmem>>) attributes {dimension_semantics = [#tpu.dimension_semantics<arbitrary>], iteration_bounds = array<i64: 1>, scalar_prefetch = 0 : i64, scratch_operands = 0 : i64, tpu.core_type = #tpu.core_type<tc>, window_params = [{pipeline_mode = #tpu.pipeline_mode<synchronous>, transform_indices = @transform_0, window_bounds = array<i64: 4, 112, 224>}, {pipeline_mode = #tpu.pipeline_mode<synchronous>, transform_indices = @transform_1, window_bounds = array<i64: 4, 224, 128>}, {pipeline_mode = #tpu.pipeline_mode<synchronous>, transform_indices = @transform_2, window_bounds = array<i64: 1, 128>}, {pipeline_mode = #tpu.pipeline_mode<synchronous>, transform_indices = @transform_3, window_bounds = array<i64: 1, 128>}, {pipeline_mode = #tpu.pipeline_mode<synchronous>, transform_indices = @transform_4, window_bounds = array<i64: 4, 112, 128>}]} {
    %cst = arith.constant 0.000000e+00 : f32
    %0 = vector.broadcast %cst : f32 to vector<1x128xf32>
    %cst_0 = arith.constant 0.000000e+00 : f32
    %1 = vector.broadcast %cst_0 : f32 to vector<1x128xf32>
    %c0 = arith.constant 0 : index
    %c0_1 = arith.constant 0 : index
    %c0_2 = arith.constant 0 : index
    %2 = vector.load %arg1[%c0, %c0_1, %c0_2] : memref<4x112x224xbf16, #tpu.memory_space<vmem>>, vector<1x112x224xbf16>
    %3 = vector.shape_cast %2 : vector<1x112x224xbf16> to vector<112x224xbf16>
    %c0_3 = arith.constant 0 : index
    %c0_4 = arith.constant 0 : index
    %c0_5 = arith.constant 0 : index
    %4 = vector.load %arg2[%c0_3, %c0_4, %c0_5] : memref<4x224x128xbf16, #tpu.memory_space<vmem>>, vector<1x224x128xbf16>
    %5 = vector.shape_cast %4 : vector<1x224x128xbf16> to vector<224x128xbf16>
    %cst_6 = arith.constant dense<0.000000e+00> : vector<112x128xf32>
    %6 = tpu.matmul %3, %5, %cst_6 {dimension_numbers = #tpu.dot_dimension_numbers<[1], [0], [0], [1], [0, 0, 1, 1], [], []>} : vector<112x224xbf16>, vector<224x128xbf16>, vector<112x128xf32> -> vector<112x128xf32>
    %cst_7 = arith.constant dense<0.000000e+00> : vector<128xf32>
    %7 = vector.multi_reduction <add>, %6, %cst_7 [0] : vector<112x128xf32> to vector<128xf32>
    %8 = vector.shape_cast %7 : vector<128xf32> to vector<1x128xf32>
    %9 = arith.addf %0, %8 : vector<1x128xf32>
    %10 = arith.mulf %6, %6 : vector<112x128xf32>
    %cst_8 = arith.constant dense<0.000000e+00> : vector<128xf32>
    %11 = vector.multi_reduction <add>, %10, %cst_8 [0] : vector<112x128xf32> to vector<128xf32>
    %12 = vector.shape_cast %11 : vector<128xf32> to vector<1x128xf32>
    %13 = arith.addf %1, %12 : vector<1x128xf32>
    %c1 = arith.constant 1 : index
    %c0_9 = arith.constant 0 : index
    %c0_10 = arith.constant 0 : index
    %14 = vector.load %arg1[%c1, %c0_9, %c0_10] : memref<4x112x224xbf16, #tpu.memory_space<vmem>>, vector<1x112x224xbf16>
    %15 = vector.shape_cast %14 : vector<1x112x224xbf16> to vector<112x224xbf16>
    %c1_11 = arith.constant 1 : index
    %c0_12 = arith.constant 0 : index
    %c0_13 = arith.constant 0 : index
    %16 = vector.load %arg2[%c1_11, %c0_12, %c0_13] : memref<4x224x128xbf16, #tpu.memory_space<vmem>>, vector<1x224x128xbf16>
    %17 = vector.shape_cast %16 : vector<1x224x128xbf16> to vector<224x128xbf16>
    %cst_14 = arith.constant dense<0.000000e+00> : vector<112x128xf32>
    %18 = tpu.matmul %15, %17, %cst_14 {dimension_numbers = #tpu.dot_dimension_numbers<[1], [0], [0], [1], [0, 0, 1, 1], [], []>} : vector<112x224xbf16>, vector<224x128xbf16>, vector<112x128xf32> -> vector<112x128xf32>
    %cst_15 = arith.constant dense<0.000000e+00> : vector<128xf32>
    %19 = vector.multi_reduction <add>, %18, %cst_15 [0] : vector<112x128xf32> to vector<128xf32>
    %20 = vector.shape_cast %19 : vector<128xf32> to vector<1x128xf32>
    %21 = arith.addf %9, %20 : vector<1x128xf32>
    %22 = arith.mulf %18, %18 : vector<112x128xf32>
    %cst_16 = arith.constant dense<0.000000e+00> : vector<128xf32>
    %23 = vector.multi_reduction <add>, %22, %cst_16 [0] : vector<112x128xf32> to vector<128xf32>
    %24 = vector.shape_cast %23 : vector<128xf32> to vector<1x128xf32>
    %25 = arith.addf %13, %24 : vector<1x128xf32>
    %c2 = arith.constant 2 : index
    %c0_17 = arith.constant 0 : index
    %c0_18 = arith.constant 0 : index
    %26 = vector.load %arg1[%c2, %c0_17, %c0_18] : memref<4x112x224xbf16, #tpu.memory_space<vmem>>, vector<1x112x224xbf16>
    %27 = vector.shape_cast %26 : vector<1x112x224xbf16> to vector<112x224xbf16>
    %c2_19 = arith.constant 2 : index
    %c0_20 = arith.constant 0 : index
    %c0_21 = arith.constant 0 : index
    %28 = vector.load %arg2[%c2_19, %c0_20, %c0_21] : memref<4x224x128xbf16, #tpu.memory_space<vmem>>, vector<1x224x128xbf16>
    %29 = vector.shape_cast %28 : vector<1x224x128xbf16> to vector<224x128xbf16>
    %cst_22 = arith.constant dense<0.000000e+00> : vector<112x128xf32>
    %30 = tpu.matmul %27, %29, %cst_22 {dimension_numbers = #tpu.dot_dimension_numbers<[1], [0], [0], [1], [0, 0, 1, 1], [], []>} : vector<112x224xbf16>, vector<224x128xbf16>, vector<112x128xf32> -> vector<112x128xf32>
    %cst_23 = arith.constant dense<0.000000e+00> : vector<128xf32>
    %31 = vector.multi_reduction <add>, %30, %cst_23 [0] : vector<112x128xf32> to vector<128xf32>
    %32 = vector.shape_cast %31 : vector<128xf32> to vector<1x128xf32>
    %33 = arith.addf %21, %32 : vector<1x128xf32>
    %34 = arith.mulf %30, %30 : vector<112x128xf32>
    %cst_24 = arith.constant dense<0.000000e+00> : vector<128xf32>
    %35 = vector.multi_reduction <add>, %34, %cst_24 [0] : vector<112x128xf32> to vector<128xf32>
    %36 = vector.shape_cast %35 : vector<128xf32> to vector<1x128xf32>
    %37 = arith.addf %25, %36 : vector<1x128xf32>
    %c3 = arith.constant 3 : index
    %c0_25 = arith.constant 0 : index
    %c0_26 = arith.constant 0 : index
    %38 = vector.load %arg1[%c3, %c0_25, %c0_26] : memref<4x112x224xbf16, #tpu.memory_space<vmem>>, vector<1x112x224xbf16>
    %39 = vector.shape_cast %38 : vector<1x112x224xbf16> to vector<112x224xbf16>
    %c3_27 = arith.constant 3 : index
    %c0_28 = arith.constant 0 : index
    %c0_29 = arith.constant 0 : index
    %40 = vector.load %arg2[%c3_27, %c0_28, %c0_29] : memref<4x224x128xbf16, #tpu.memory_space<vmem>>, vector<1x224x128xbf16>
    %41 = vector.shape_cast %40 : vector<1x224x128xbf16> to vector<224x128xbf16>
    %cst_30 = arith.constant dense<0.000000e+00> : vector<112x128xf32>
    %42 = tpu.matmul %39, %41, %cst_30 {dimension_numbers = #tpu.dot_dimension_numbers<[1], [0], [0], [1], [0, 0, 1, 1], [], []>} : vector<112x224xbf16>, vector<224x128xbf16>, vector<112x128xf32> -> vector<112x128xf32>
    %cst_31 = arith.constant dense<0.000000e+00> : vector<128xf32>
    %43 = vector.multi_reduction <add>, %42, %cst_31 [0] : vector<112x128xf32> to vector<128xf32>
    %44 = vector.shape_cast %43 : vector<128xf32> to vector<1x128xf32>
    %45 = arith.addf %33, %44 : vector<1x128xf32>
    %46 = arith.mulf %42, %42 : vector<112x128xf32>
    %cst_32 = arith.constant dense<0.000000e+00> : vector<128xf32>
    %47 = vector.multi_reduction <add>, %46, %cst_32 [0] : vector<112x128xf32> to vector<128xf32>
    %48 = vector.shape_cast %47 : vector<128xf32> to vector<1x128xf32>
    %49 = arith.addf %37, %48 : vector<1x128xf32>
    %cst_33 = arith.constant 3.920000e+02 : f32
    %50 = vector.broadcast %cst_33 : f32 to vector<1x128xf32>
    %51 = arith.divf %45, %50 : vector<1x128xf32>
    %cst_34 = arith.constant 3.920000e+02 : f32
    %52 = vector.broadcast %cst_34 : f32 to vector<1x128xf32>
    %53 = arith.divf %49, %52 : vector<1x128xf32>
    %54 = arith.mulf %51, %51 : vector<1x128xf32>
    %55 = arith.subf %53, %54 : vector<1x128xf32>
    %cst_35 = arith.constant 9.99999974E-6 : f32
    %56 = vector.broadcast %cst_35 : f32 to vector<1x128xf32>
    %57 = arith.addf %55, %56 : vector<1x128xf32>
    %58 = math.rsqrt %57 : vector<1x128xf32>
    %c0_36 = arith.constant 0 : index
    %c0_37 = arith.constant 0 : index
    %59 = vector.load %arg3[%c0_36, %c0_37] : memref<1x128xf32, #tpu.memory_space<vmem>>, vector<1x128xf32>
    %60 = arith.mulf %59, %58 : vector<1x128xf32>
    %c0_38 = arith.constant 0 : index
    %c0_39 = arith.constant 0 : index
    %61 = vector.load %arg4[%c0_38, %c0_39] : memref<1x128xf32, #tpu.memory_space<vmem>>, vector<1x128xf32>
    %62 = arith.mulf %51, %60 : vector<1x128xf32>
    %63 = arith.subf %61, %62 : vector<1x128xf32>
    %64 = vector.broadcast %60 : vector<1x128xf32> to vector<112x128xf32>
    %65 = arith.mulf %6, %64 : vector<112x128xf32>
    %66 = vector.broadcast %63 : vector<1x128xf32> to vector<112x128xf32>
    %67 = arith.addf %65, %66 : vector<112x128xf32>
    %cst_40 = arith.constant 0.000000e+00 : f32
    %68 = vector.broadcast %cst_40 : f32 to vector<112x128xf32>
    %69 = arith.maximumf %67, %68 : vector<112x128xf32>
    %70 = arith.truncf %69 : vector<112x128xf32> to vector<112x128xbf16>
    %c0_41 = arith.constant 0 : index
    %c0_42 = arith.constant 0 : index
    %c0_43 = arith.constant 0 : index
    %71 = vector.load %arg5[%c0_41, %c0_42, %c0_43] : memref<4x112x128xbf16, #tpu.memory_space<vmem>>, vector<1x112x128xbf16>
    %72 = vector.shape_cast %71 : vector<1x112x128xbf16> to vector<112x128xbf16>
    %73 = vector.shape_cast %70 : vector<112x128xbf16> to vector<1x112x128xbf16>
    tpu.vector_store %arg5[%c0_41, %c0_42, %c0_43], %73 {strides = array<i32>} : memref<4x112x128xbf16, #tpu.memory_space<vmem>>, vector<1x112x128xbf16>,
    %74 = vector.broadcast %60 : vector<1x128xf32> to vector<112x128xf32>
    %75 = arith.mulf %18, %74 : vector<112x128xf32>
    %76 = vector.broadcast %63 : vector<1x128xf32> to vector<112x128xf32>
    %77 = arith.addf %75, %76 : vector<112x128xf32>
    %cst_44 = arith.constant 0.000000e+00 : f32
    %78 = vector.broadcast %cst_44 : f32 to vector<112x128xf32>
    %79 = arith.maximumf %77, %78 : vector<112x128xf32>
    %80 = arith.truncf %79 : vector<112x128xf32> to vector<112x128xbf16>
    %c1_45 = arith.constant 1 : index
    %c0_46 = arith.constant 0 : index
    %c0_47 = arith.constant 0 : index
    %81 = vector.load %arg5[%c1_45, %c0_46, %c0_47] : memref<4x112x128xbf16, #tpu.memory_space<vmem>>, vector<1x112x128xbf16>
    %82 = vector.shape_cast %81 : vector<1x112x128xbf16> to vector<112x128xbf16>
    %83 = vector.shape_cast %80 : vector<112x128xbf16> to vector<1x112x128xbf16>
    tpu.vector_store %arg5[%c1_45, %c0_46, %c0_47], %83 {strides = array<i32>} : memref<4x112x128xbf16, #tpu.memory_space<vmem>>, vector<1x112x128xbf16>,
    %84 = vector.broadcast %60 : vector<1x128xf32> to vector<112x128xf32>
    %85 = arith.mulf %30, %84 : vector<112x128xf32>
    %86 = vector.broadcast %63 : vector<1x128xf32> to vector<112x128xf32>
    %87 = arith.addf %85, %86 : vector<112x128xf32>
    %cst_48 = arith.constant 0.000000e+00 : f32
    %88 = vector.broadcast %cst_48 : f32 to vector<112x128xf32>
    %89 = arith.maximumf %87, %88 : vector<112x128xf32>
    %90 = arith.truncf %89 : vector<112x128xf32> to vector<112x128xbf16>
    %c2_49 = arith.constant 2 : index
    %c0_50 = arith.constant 0 : index
    %c0_51 = arith.constant 0 : index
    %91 = vector.load %arg5[%c2_49, %c0_50, %c0_51] : memref<4x112x128xbf16, #tpu.memory_space<vmem>>, vector<1x112x128xbf16>
    %92 = vector.shape_cast %91 : vector<1x112x128xbf16> to vector<112x128xbf16>
    %93 = vector.shape_cast %90 : vector<112x128xbf16> to vector<1x112x128xbf16>
    tpu.vector_store %arg5[%c2_49, %c0_50, %c0_51], %93 {strides = array<i32>} : memref<4x112x128xbf16, #tpu.memory_space<vmem>>, vector<1x112x128xbf16>,
    %94 = vector.broadcast %60 : vector<1x128xf32> to vector<112x128xf32>
    %95 = arith.mulf %42, %94 : vector<112x128xf32>
    %96 = vector.broadcast %63 : vector<1x128xf32> to vector<112x128xf32>
    %97 = arith.addf %95, %96 : vector<112x128xf32>
    %cst_52 = arith.constant 0.000000e+00 : f32
    %98 = vector.broadcast %cst_52 : f32 to vector<112x128xf32>
    %99 = arith.maximumf %97, %98 : vector<112x128xf32>
    %100 = arith.truncf %99 : vector<112x128xf32> to vector<112x128xbf16>
    %c3_53 = arith.constant 3 : index
    %c0_54 = arith.constant 0 : index
    %c0_55 = arith.constant 0 : index
    %101 = vector.load %arg5[%c3_53, %c0_54, %c0_55] : memref<4x112x128xbf16, #tpu.memory_space<vmem>>, vector<1x112x128xbf16>
    %102 = vector.shape_cast %101 : vector<1x112x128xbf16> to vector<112x128xbf16>
    %103 = vector.shape_cast %100 : vector<112x128xbf16> to vector<1x112x128xbf16>
    tpu.vector_store %arg5[%c3_53, %c0_54, %c0_55], %103 {strides = array<i32>} : memref<4x112x128xbf16, #tpu.memory_space<vmem>>, vector<1x112x128xbf16>,
    return
  }
  func.func @transform_0(%arg0: i32) -> (i32, i32, i32) {
    %c0_i32 = arith.constant 0 : i32
    %c0_i32_0 = arith.constant 0 : i32
    %c0_i32_1 = arith.constant 0 : i32
    %c0_i32_2 = arith.constant 0 : i32
    return %c0_i32, %c0_i32_0, %c0_i32_1 : i32, i32, i32
  }
  func.func @transform_1(%arg0: i32) -> (i32, i32, i32) {
    %c0_i32 = arith.constant 0 : i32
    %c0_i32_0 = arith.constant 0 : i32
    %c0_i32_1 = arith.constant 0 : i32
    %c0_i32_2 = arith.constant 0 : i32
    return %c0_i32, %c0_i32_0, %c0_i32_1 : i32, i32, i32
  }
  func.func @transform_2(%arg0: i32) -> (i32, i32) {
    %c0_i32 = arith.constant 0 : i32
    %c0_i32_0 = arith.constant 0 : i32
    %c0_i32_1 = arith.constant 0 : i32
    return %c0_i32, %c0_i32_0 : i32, i32
  }
  func.func @transform_3(%arg0: i32) -> (i32, i32) {
    %c0_i32 = arith.constant 0 : i32
    %c0_i32_0 = arith.constant 0 : i32
    %c0_i32_1 = arith.constant 0 : i32
    return %c0_i32, %c0_i32_0 : i32, i32
  }
  func.func @transform_4(%arg0: i32) -> (i32, i32, i32) {
    %c0_i32 = arith.constant 0 : i32
    %c0_i32_0 = arith.constant 0 : i32
    %c0_i32_1 = arith.constant 0 : i32
    %c0_i32_2 = arith.constant 0 : i32
    return %c0_i32, %c0_i32_0, %c0_i32_1 : i32, i32, i32
  }
}

module attributes {stable_mosaic.version = 11 : i64} {
  func.func @_gemm_tanh_kernel(%arg0: i32, %arg1: i32, %arg2: memref<1x400x112xbf16, #tpu.memory_space<vmem>>, %arg3: memref<1x112x128xbf16, #tpu.memory_space<vmem>>, %arg4: memref<1x400x128xf32, #tpu.memory_space<vmem>>) attributes {dimension_semantics = [#tpu.dimension_semantics<parallel>, #tpu.dimension_semantics<parallel>], iteration_bounds = array<i64: 4, 1>, scalar_prefetch = 0 : i64, scratch_operands = 0 : i64, tpu.core_type = #tpu.core_type<tc>, window_params = [{transform_indices = @transform_0, window_bounds = array<i64: 1, 400, 112>}, {transform_indices = @transform_1, window_bounds = array<i64: 1, 112, 128>}, {transform_indices = @transform_2, window_bounds = array<i64: 1, 400, 128>}]} {
    %c0 = arith.constant 0 : index
    %c0_0 = arith.constant 0 : index
    %c0_1 = arith.constant 0 : index
    %0 = vector.load %arg2[%c0, %c0_0, %c0_1] : memref<1x400x112xbf16, #tpu.memory_space<vmem>>, vector<1x400x112xbf16>
    %1 = vector.shape_cast %0 : vector<1x400x112xbf16> to vector<400x112xbf16>
    %c0_2 = arith.constant 0 : index
    %c0_3 = arith.constant 0 : index
    %c0_4 = arith.constant 0 : index
    %2 = vector.load %arg3[%c0_2, %c0_3, %c0_4] : memref<1x112x128xbf16, #tpu.memory_space<vmem>>, vector<1x112x128xbf16>
    %3 = vector.shape_cast %2 : vector<1x112x128xbf16> to vector<112x128xbf16>
    %cst = arith.constant dense<0.000000e+00> : vector<400x128xf32>
    %4 = tpu.matmul %1, %3, %cst {dimension_numbers = #tpu.dot_dimension_numbers<[1], [0], [0], [1], [0, 0, 1, 1], [], []>} : vector<400x112xbf16>, vector<112x128xbf16>, vector<400x128xf32> -> vector<400x128xf32>
    %5 = math.tanh %4 : vector<400x128xf32>
    %c0_5 = arith.constant 0 : index
    %c0_6 = arith.constant 0 : index
    %c0_7 = arith.constant 0 : index
    %6 = vector.load %arg4[%c0_5, %c0_6, %c0_7] : memref<1x400x128xf32, #tpu.memory_space<vmem>>, vector<1x400x128xf32>
    %7 = vector.shape_cast %6 : vector<1x400x128xf32> to vector<400x128xf32>
    %8 = vector.shape_cast %5 : vector<400x128xf32> to vector<1x400x128xf32>
    tpu.vector_store %arg4[%c0_5, %c0_6, %c0_7], %8 {strides = array<i32>} : memref<1x400x128xf32, #tpu.memory_space<vmem>>, vector<1x400x128xf32>,
    return
  }
  func.func @transform_0(%arg0: i32, %arg1: i32) -> (i32, i32, i32) {
    %c0_i32 = arith.constant 0 : i32
    %c0_i32_0 = arith.constant 0 : i32
    return %arg0, %arg1, %c0_i32 : i32, i32, i32
  }
  func.func @transform_1(%arg0: i32, %arg1: i32) -> (i32, i32, i32) {
    %c0_i32 = arith.constant 0 : i32
    %c0_i32_0 = arith.constant 0 : i32
    %c0_i32_1 = arith.constant 0 : i32
    return %arg0, %c0_i32, %c0_i32_0 : i32, i32, i32
  }
  func.func @transform_2(%arg0: i32, %arg1: i32) -> (i32, i32, i32) {
    %c0_i32 = arith.constant 0 : i32
    %c0_i32_0 = arith.constant 0 : i32
    return %arg0, %arg1, %c0_i32 : i32, i32, i32
  }
}

</mosaic_0001>

<llo_original>
// kernel: generator_forward.4
$region0: #{generator_forward.4}
  #allocation0 [shape = 'u32[]', space=smem, size = 0x4, offset = 0x4, fixed_abs, tag = 'smem constant byte address 0x4 - core index']
  #allocation1 [shape = 'u32[144,128]{1,0:T(1,128)}', space=vmem, size = 0x12000, scoped, tag = 'internal scratch']
  %s0 = inlined_call_operand.vmem [shape: bf16[16,100], index: 0, kind: input, shape index: {}]
  %s1 = inlined_call_operand.hbm [shape: bf16[100,2048], index: 1, kind: input, shape index: {}]
  %s2 = inlined_call_operand.vmem [shape: f32[1,128], index: 2, kind: input, shape index: {}]
  %s3 = inlined_call_operand.vmem [shape: f32[1,128], index: 3, kind: input, shape index: {}]
  %s4 = inlined_call_operand.vmem [shape: bf16[16,2048], index: 4, kind: output, shape index: {}]
  %s5 = sld [smem:[#allocation0]]
  $region30: #{generator_forward.4} parent=0
    _
  %s7 = ssub.s32 1, %s5
  %s8 = scalar_select 0, %s7, %s5
  $region1: #{generator_forward.4} parent=0
    #allocation2 [shape = 'u8[425984]{0}', space=vmem, size = 0x68000, scoped, tag = 'input window, operand 1, single buffered']
    #allocation3 [shape = 's32[1]{0}', space=sflag, size = 0x4, scoped, tag = 'scoped memory for generator_forward.4']
    %9 = vsyncpa [#allocation3], 0
    // Predicated region
    $region2: #{generator_forward.4} parent=1 // pred_check
      _
    $region3: #{generator_forward.4} parent=1 // pred_check_branch
      %11 = sbr.rel (0) target = $region5
    $region4: #{generator_forward.4} parent=1 // pred_region
      _
    $region5: #{generator_forward.4} parent=1 // pred_fallthru
      _
    // Predicated region
    $region6: #{generator_forward.4} parent=1 // pred_check
      _
    $region7: #{generator_forward.4} parent=1 // pred_check_branch
      %13 = sbr.rel (0) target = $region9
    $region8: #{generator_forward.4} parent=1 // pred_region
      %s15 = ssub.s32 13312, 13312
      %16 = vsyncadd [#allocation3], %s15
      %s17 = sshll.u32 [#allocation2], 4
      %s18 = int_to_ptr.vmem [resolvable:$true] %s17
      %23 = dma.hbm_to_vmem [thread:$0]  %s1, 13312, %s18, [#allocation3], 1024, 1024, 64
    $region9: #{generator_forward.4} parent=1 // pred_fallthru
      _
    // Predicated region
    $region10: #{generator_forward.4} parent=1 // pred_check
      _
    $region11: #{generator_forward.4} parent=1 // pred_check_branch
      %25 = sbr.rel (0) target = $region13
    $region12: #{generator_forward.4} parent=1 // pred_region
      _
    $region13: #{generator_forward.4} parent=1 // pred_fallthru
      _
    // Predicated region
    $region14: #{generator_forward.4} parent=1 // pred_check
      _
    $region15: #{generator_forward.4} parent=1 // pred_check_branch
      %27 = sbr.rel (0) target = $region17
    $region16: #{generator_forward.4} parent=1 // pred_region
      _
    $region17: #{generator_forward.4} parent=1 // pred_fallthru
      _
    // Predicated region
    $region18: #{generator_forward.4} parent=1 // pred_check
      _
    $region19: #{generator_forward.4} parent=1 // pred_check_branch
      %29 = sbr.rel (0) target = $region21
    $region20: #{generator_forward.4} parent=1 // pred_region
      %30 = dma.done [#allocation3], 13312
    $region21: #{generator_forward.4} parent=1 // pred_fallthru
      _
    %v32 = vld [vmem:[%s0] sm:$0xf]
    %v33 = vld [vmem:[%s0 + $0x4] sm:$0xf]
    %v34 = vld [vmem:[#allocation2] sm:$0xff]
    %v35 = vld [vmem:[#allocation2 + $0x8] sm:$0xff]
    %v36 = vld [vmem:[#allocation2 + $0x10] sm:$0xff]
    %v37 = vld [vmem:[#allocation2 + $0x18] sm:$0xff]
    %v38 = vld [vmem:[#allocation2 + $0x20] sm:$0xff]
    %v39 = vld [vmem:[#allocation2 + $0x28] sm:$0xff]
    %v40 = vld [vmem:[#allocation2 + $0x30] sm:$0xff]
    %v41 = vld [vmem:[#allocation2 + $0x38] sm:$0xff]
    %v42 = vld [vmem:[#allocation2 + $0x40] sm:$0xff]
    %v43 = vld [vmem:[#allocation2 + $0x48] sm:$0xff]
    %v44 = vld [vmem:[#allocation2 + $0x50] sm:$0xff]
    %v45 = vld [vmem:[#allocation2 + $0x58] sm:$0xff]
    %v46 = vld [vmem:[#allocation2 + $0x60] sm:$0xff]
    %v47 = vld [vmem:[#allocation2 + $0x68] sm:$0xff]
    %v48 = vld [vmem:[#allocation2 + $0x70] sm:$0xff]
    %v49 = vld [vmem:[#allocation2 + $0x78] sm:$0xff]
    %v50 = vld [vmem:[#allocation2 + $0x80] sm:$0xff]
    %v51 = vld [vmem:[#allocation2 + $0x88] sm:$0xff]
    %v52 = vld [vmem:[#allocation2 + $0x90] sm:$0xff]
    %v53 = vld [vmem:[#allocation2 + $0x98] sm:$0xff]
    %v54 = vld [vmem:[#allocation2 + $0xa0] sm:$0xff]
    %v55 = vld [vmem:[#allocation2 + $0xa8] sm:$0xff]
    %v56 = vld [vmem:[#allocation2 + $0xb0] sm:$0xff]
    %v57 = vld [vmem:[#allocation2 + $0xb8] sm:$0xff]
    %v58 = vld [vmem:[#allocation2 + $0xc0] sm:$0xff]
    %v59 = vld [vmem:[#allocation2 + $0xc8] sm:$0xff]
    %v60 = vld [vmem:[#allocation2 + $0xd0] sm:$0xff]
    %v61 = vld [vmem:[#allocation2 + $0xd8] sm:$0xff]
    %v62 = vld [vmem:[#allocation2 + $0xe0] sm:$0xff]
    %v63 = vld [vmem:[#allocation2 + $0xe8] sm:$0xff]
    %v64 = vld [vmem:[#allocation2 + $0xf0] sm:$0xff]
    %v65 = vld [vmem:[#allocation2 + $0xf8] sm:$0xff]
    %v66 = vld [vmem:[#allocation2 + $0x100] sm:$0xff]
    %v67 = vld [vmem:[#allocation2 + $0x108] sm:$0xff]
    %v68 = vld [vmem:[#allocation2 + $0x110] sm:$0xff]
    %v69 = vld [vmem:[#allocation2 + $0x118] sm:$0xff]
    %v70 = vld [vmem:[#allocation2 + $0x120] sm:$0xff]
    %v71 = vld [vmem:[#allocation2 + $0x128] sm:$0xff]
    %v72 = vld [vmem:[#allocation2 + $0x130] sm:$0xff]
    %v73 = vld [vmem:[#allocation2 + $0x138] sm:$0xff]
    %v74 = vld [vmem:[#allocation2 + $0x140] sm:$0xff]
    %v75 = vld [vmem:[#allocation2 + $0x148] sm:$0xff]
    %v76 = vld [vmem:[#allocation2 + $0x150] sm:$0xff]
    %v77 = vld [vmem:[#allocation2 + $0x158] sm:$0xff]
    %v78 = vld [vmem:[#allocation2 + $0x160] sm:$0xff]
    %v79 = vld [vmem:[#allocation2 + $0x168] sm:$0xff]
    %v80 = vld [vmem:[#allocation2 + $0x170] sm:$0xff]
    %v81 = vld [vmem:[#allocation2 + $0x178] sm:$0xff]
    %v82 = vld [vmem:[#allocation2 + $0x180] sm:$0xff]
    %v83 = vld [vmem:[#allocation2 + $0x188] sm:$0xff]
    %v84 = vld [vmem:[#allocation2 + $0x190] sm:$0xff]
    %v85 = vld [vmem:[#allocation2 + $0x198] sm:$0xff]
    %v86 = vld [vmem:[#allocation2 + $0x1a0] sm:$0xff]
    %v87 = vld [vmem:[#allocation2 + $0x1a8] sm:$0xff]
    %v88 = vld [vmem:[#allocation2 + $0x1b0] sm:$0xff]
    %v89 = vld [vmem:[#allocation2 + $0x1b8] sm:$0xff]
    %v90 = vld [vmem:[#allocation2 + $0x1c0] sm:$0xff]
    %v91 = vld [vmem:[#allocation2 + $0x1c8] sm:$0xff]
    %v92 = vld [vmem:[#allocation2 + $0x1d0] sm:$0xff]
    %v93 = vld [vmem:[#allocation2 + $0x1d8] sm:$0xff]
    %v94 = vld [vmem:[#allocation2 + $0x1e0] sm:$0xff]
    %v95 = vld [vmem:[#allocation2 + $0x1e8] sm:$0xff]
    %v96 = vld [vmem:[#allocation2 + $0x1f0] sm:$0xff]
    %v97 = vld [vmem:[#allocation2 + $0x1f8] sm:$0xff]
    %v98 = vld [vmem:[#allocation2 + $0x200] sm:$0xff]
    %v99 = vld [vmem:[#allocation2 + $0x208] sm:$0xff]
    %v100 = vld [vmem:[#allocation2 + $0x210] sm:$0xff]
    %v101 = vld [vmem:[#allocation2 + $0x218] sm:$0xff]
    %v102 = vld [vmem:[#allocation2 + $0x220] sm:$0xff]
    %v103 = vld [vmem:[#allocation2 + $0x228] sm:$0xff]
    %v104 = vld [vmem:[#allocation2 + $0x230] sm:$0xff]
    %v105 = vld [vmem:[#allocation2 + $0x238] sm:$0xff]
    %v106 = vld [vmem:[#allocation2 + $0x240] sm:$0xff]
    %v107 = vld [vmem:[#allocation2 + $0x248] sm:$0xff]
    %v108 = vld [vmem:[#allocation2 + $0x250] sm:$0xff]
    %v109 = vld [vmem:[#allocation2 + $0x258] sm:$0xff]
    %v110 = vld [vmem:[#allocation2 + $0x260] sm:$0xff]
    %v111 = vld [vmem:[#allocation2 + $0x268] sm:$0xff]
    %v112 = vld [vmem:[#allocation2 + $0x270] sm:$0xff]
    %v113 = vld [vmem:[#allocation2 + $0x278] sm:$0xff]
    %v114 = vld [vmem:[#allocation2 + $0x280] sm:$0xff]
    %v115 = vld [vmem:[#allocation2 + $0x288] sm:$0xff]
    %v116 = vld [vmem:[#allocation2 + $0x290] sm:$0xff]
    %v117 = vld [vmem:[#allocation2 + $0x298] sm:$0xff]
    %v118 = vld [vmem:[#allocation2 + $0x2a0] sm:$0xff]
    %v119 = vld [vmem:[#allocation2 + $0x2a8] sm:$0xff]
    %v120 = vld [vmem:[#allocation2 + $0x2b0] sm:$0xff]
    %v121 = vld [vmem:[#allocation2 + $0x2b8] sm:$0xff]
    %v122 = vld [vmem:[#allocation2 + $0x2c0] sm:$0xff]
    %v123 = vld [vmem:[#allocation2 + $0x2c8] sm:$0xff]
    %v124 = vld [vmem:[#allocation2 + $0x2d0] sm:$0xff]
    %v125 = vld [vmem:[#allocation2 + $0x2d8] sm:$0xff]
    %v126 = vld [vmem:[#allocation2 + $0x2e0] sm:$0xff]
    %v127 = vld [vmem:[#allocation2 + $0x2e8] sm:$0xff]
    %v128 = vld [vmem:[#allocation2 + $0x2f0] sm:$0xff]
    %v129 = vld [vmem:[#allocation2 + $0x2f8] sm:$0xff]
    %v130 = vld [vmem:[#allocation2 + $0x300] sm:$0x33]
    %v131 = vld [vmem:[#allocation2 + $0x308] sm:$0x33]
    %v132 = vld [vmem:[#allocation2 + $0x310] sm:$0x33]
    %v133 = vld [vmem:[#allocation2 + $0x318] sm:$0x33]
    %v134 = vld [vmem:[#allocation2 + $0x320] sm:$0x33]
    %v135 = vld [vmem:[#allocation2 + $0x328] sm:$0x33]
    %v136 = vld [vmem:[#allocation2 + $0x330] sm:$0x33]
    %v137 = vld [vmem:[#allocation2 + $0x338] sm:$0x33]
    %v140 = vunpack.c.l.b16 %v32
    %v141 = vunpack.c.l.b16 %v33
    %v142 = vpack.c.b16 %v141, %v140
    %v247 = vunpack.c.l.b16 %v34
    %v248 = vunpack.c.h.b16 %v34
    %v249 = vunpack.c.l.b16 %v35
    %v250 = vunpack.c.h.b16 %v35
    %v251 = vunpack.c.l.b16 %v36
    %v252 = vunpack.c.h.b16 %v36
    %v253 = vunpack.c.l.b16 %v37
    %v254 = vunpack.c.h.b16 %v37
    %v255 = vunpack.c.l.b16 %v38
    %v256 = vunpack.c.h.b16 %v38
    %v257 = vunpack.c.l.b16 %v39
    %v258 = vunpack.c.h.b16 %v39
    %v259 = vunpack.c.l.b16 %v40
    %v260 = vunpack.c.h.b16 %v40
    %v261 = vunpack.c.l.b16 %v41
    %v262 = vunpack.c.h.b16 %v41
    %v263 = vunpack.c.l.b16 %v42
    %v264 = vunpack.c.h.b16 %v42
    %v265 = vunpack.c.l.b16 %v43
    %v266 = vunpack.c.h.b16 %v43
    %v267 = vunpack.c.l.b16 %v44
    %v268 = vunpack.c.h.b16 %v44
    %v269 = vunpack.c.l.b16 %v45
    %v270 = vunpack.c.h.b16 %v45
    %v271 = vunpack.c.l.b16 %v46
    %v272 = vunpack.c.h.b16 %v46
    %v273 = vunpack.c.l.b16 %v47
    %v274 = vunpack.c.h.b16 %v47
    %v275 = vunpack.c.l.b16 %v48
    %v276 = vunpack.c.h.b16 %v48
    %v277 = vunpack.c.l.b16 %v49
    %v278 = vunpack.c.h.b16 %v49
    %v279 = vunpack.c.l.b16 %v50
    %v280 = vunpack.c.h.b16 %v50
    %v281 = vunpack.c.l.b16 %v51
    %v282 = vunpack.c.h.b16 %v51
    %v283 = vunpack.c.l.b16 %v52
    %v284 = vunpack.c.h.b16 %v52
    %v285 = vunpack.c.l.b16 %v53
    %v286 = vunpack.c.h.b16 %v53
    %v287 = vunpack.c.l.b16 %v54
    %v288 = vunpack.c.h.b16 %v54
    %v289 = vunpack.c.l.b16 %v55
    %v290 = vunpack.c.h.b16 %v55
    %v291 = vunpack.c.l.b16 %v56
    %v292 = vunpack.c.h.b16 %v56
    %v293 = vunpack.c.l.b16 %v57
    %v294 = vunpack.c.h.b16 %v57
    %v295 = vunpack.c.l.b16 %v58
    %v296 = vunpack.c.h.b16 %v58
    %v297 = vunpack.c.l.b16 %v59
    %v298 = vunpack.c.h.b16 %v59
    %v299 = vunpack.c.l.b16 %v60
    %v300 = vunpack.c.h.b16 %v60
    %v301 = vunpack.c.l.b16 %v61
    %v302 = vunpack.c.h.b16 %v61
    %v303 = vunpack.c.l.b16 %v62
    %v304 = vunpack.c.h.b16 %v62
    %v305 = vunpack.c.l.b16 %v63
    %v306 = vunpack.c.h.b16 %v63
    %v307 = vunpack.c.l.b16 %v64
    %v308 = vunpack.c.h.b16 %v64
    %v309 = vunpack.c.l.b16 %v65
    %v310 = vunpack.c.h.b16 %v65
    %v311 = vunpack.c.l.b16 %v66
    %v312 = vunpack.c.h.b16 %v66
    %v313 = vunpack.c.l.b16 %v67
    %v314 = vunpack.c.h.b16 %v67
    %v315 = vunpack.c.l.b16 %v68
    %v316 = vunpack.c.h.b16 %v68
    %v317 = vunpack.c.l.b16 %v69
    %v318 = vunpack.c.h.b16 %v69
    %v319 = vunpack.c.l.b16 %v70
    %v320 = vunpack.c.h.b16 %v70
    %v321 = vunpack.c.l.b16 %v71
    %v322 = vunpack.c.h.b16 %v71
    %v323 = vunpack.c.l.b16 %v72
    %v324 = vunpack.c.h.b16 %v72
    %v325 = vunpack.c.l.b16 %v73
    %v326 = vunpack.c.h.b16 %v73
    %v327 = vunpack.c.l.b16 %v74
    %v328 = vunpack.c.h.b16 %v74
    %v329 = vunpack.c.l.b16 %v75
    %v330 = vunpack.c.h.b16 %v75
    %v331 = vunpack.c.l.b16 %v76
    %v332 = vunpack.c.h.b16 %v76
    %v333 = vunpack.c.l.b16 %v77
    %v334 = vunpack.c.h.b16 %v77
    %v335 = vunpack.c.l.b16 %v78
    %v336 = vunpack.c.h.b16 %v78
    %v337 = vunpack.c.l.b16 %v79
    %v338 = vunpack.c.h.b16 %v79
    %v339 = vunpack.c.l.b16 %v80
    %v340 = vunpack.c.h.b16 %v80
    %v341 = vunpack.c.l.b16 %v81
    %v342 = vunpack.c.h.b16 %v81
    %v343 = vunpack.c.l.b16 %v82
    %v344 = vunpack.c.h.b16 %v82
    %v345 = vunpack.c.l.b16 %v83
    %v346 = vunpack.c.h.b16 %v83
    %v347 = vunpack.c.l.b16 %v84
    %v348 = vunpack.c.h.b16 %v84
    %v349 = vunpack.c.l.b16 %v85
    %v350 = vunpack.c.h.b16 %v85
    %v351 = vunpack.c.l.b16 %v86
    %v352 = vunpack.c.h.b16 %v86
    %v353 = vunpack.c.l.b16 %v87
    %v354 = vunpack.c.h.b16 %v87
    %v355 = vunpack.c.l.b16 %v88
    %v356 = vunpack.c.h.b16 %v88
    %v357 = vunpack.c.l.b16 %v89
    %v358 = vunpack.c.h.b16 %v89
    %v359 = vunpack.c.l.b16 %v90
    %v360 = vunpack.c.h.b16 %v90
    %v361 = vunpack.c.l.b16 %v91
    %v362 = vunpack.c.h.b16 %v91
    %v363 = vunpack.c.l.b16 %v92
    %v364 = vunpack.c.h.b16 %v92
    %v365 = vunpack.c.l.b16 %v93
    %v366 = vunpack.c.h.b16 %v93
    %v367 = vunpack.c.l.b16 %v94
    %v368 = vunpack.c.h.b16 %v94
    %v369 = vunpack.c.l.b16 %v95
    %v370 = vunpack.c.h.b16 %v95
    %v371 = vunpack.c.l.b16 %v96
    %v372 = vunpack.c.h.b16 %v96
    %v373 = vunpack.c.l.b16 %v97
    %v374 = vunpack.c.h.b16 %v97
    %v375 = vunpack.c.l.b16 %v98
    %v376 = vunpack.c.h.b16 %v98
    %v377 = vunpack.c.l.b16 %v99
    %v378 = vunpack.c.h.b16 %v99
    %v379 = vunpack.c.l.b16 %v100
    %v380 = vunpack.c.h.b16 %v100
    %v381 = vunpack.c.l.b16 %v101
    %v382 = vunpack.c.h.b16 %v101
    %v383 = vunpack.c.l.b16 %v102
    %v384 = vunpack.c.h.b16 %v102
    %v385 = vunpack.c.l.b16 %v103
    %v386 = vunpack.c.h.b16 %v103
    %v387 = vunpack.c.l.b16 %v104
    %v388 = vunpack.c.h.b16 %v104
    %v389 = vunpack.c.l.b16 %v105
    %v390 = vunpack.c.h.b16 %v105
    %v391 = vunpack.c.l.b16 %v106
    %v392 = vunpack.c.h.b16 %v106
    %v393 = vunpack.c.l.b16 %v107
    %v394 = vunpack.c.h.b16 %v107
    %v395 = vunpack.c.l.b16 %v108
    %v396 = vunpack.c.h.b16 %v108
    %v397 = vunpack.c.l.b16 %v109
    %v398 = vunpack.c.h.b16 %v109
    %v399 = vunpack.c.l.b16 %v110
    %v400 = vunpack.c.h.b16 %v110
    %v401 = vunpack.c.l.b16 %v111
    %v402 = vunpack.c.h.b16 %v111
    %v403 = vunpack.c.l.b16 %v112
    %v404 = vunpack.c.h.b16 %v112
    %v405 = vunpack.c.l.b16 %v113
    %v406 = vunpack.c.h.b16 %v113
    %v407 = vunpack.c.l.b16 %v114
    %v408 = vunpack.c.h.b16 %v114
    %v409 = vunpack.c.l.b16 %v115
    %v410 = vunpack.c.h.b16 %v115
    %v411 = vunpack.c.l.b16 %v116
    %v412 = vunpack.c.h.b16 %v116
    %v413 = vunpack.c.l.b16 %v117
    %v414 = vunpack.c.h.b16 %v117
    %v415 = vunpack.c.l.b16 %v118
    %v416 = vunpack.c.h.b16 %v118
    %v417 = vunpack.c.l.b16 %v119
    %v418 = vunpack.c.h.b16 %v119
    %v419 = vunpack.c.l.b16 %v120
    %v420 = vunpack.c.h.b16 %v120
    %v421 = vunpack.c.l.b16 %v121
    %v422 = vunpack.c.h.b16 %v121
    %v423 = vunpack.c.l.b16 %v122
    %v424 = vunpack.c.h.b16 %v122
    %v425 = vunpack.c.l.b16 %v123
    %v426 = vunpack.c.h.b16 %v123
    %v427 = vunpack.c.l.b16 %v124
    %v428 = vunpack.c.h.b16 %v124
    %v429 = vunpack.c.l.b16 %v125
    %v430 = vunpack.c.h.b16 %v125
    %v431 = vunpack.c.l.b16 %v126
    %v432 = vunpack.c.h.b16 %v126
    %v433 = vunpack.c.l.b16 %v127
    %v434 = vunpack.c.h.b16 %v127
    %v435 = vunpack.c.l.b16 %v128
    %v436 = vunpack.c.h.b16 %v128
    %v437 = vunpack.c.l.b16 %v129
    %v438 = vunpack.c.h.b16 %v129
    %v439 = vunpack.c.l.b16 %v130
    %v440 = vunpack.c.h.b16 %v130
    %v441 = vunpack.c.l.b16 %v131
    %v442 = vunpack.c.h.b16 %v131
    %v443 = vunpack.c.l.b16 %v132
    %v444 = vunpack.c.h.b16 %v132
    %v445 = vunpack.c.l.b16 %v133
    %v446 = vunpack.c.h.b16 %v133
    %v447 = vunpack.c.l.b16 %v134
    %v448 = vunpack.c.h.b16 %v134
    %v449 = vunpack.c.l.b16 %v135
    %v450 = vunpack.c.h.b16 %v135
    %v451 = vunpack.c.l.b16 %v136
    %v452 = vunpack.c.h.b16 %v136
    %v453 = vunpack.c.l.b16 %v137
    %v454 = vunpack.c.h.b16 %v137
    %v455 = vpack.c.b16 %v263, %v247
    %v456 = vpack.c.b16 %v264, %v248
    %v457 = vpack.c.b16 %v265, %v249
    %v458 = vpack.c.b16 %v266, %v250
    %v459 = vpack.c.b16 %v267, %v251
    %v460 = vpack.c.b16 %v268, %v252
    %v461 = vpack.c.b16 %v269, %v253
    %v462 = vpack.c.b16 %v270, %v254
    %v463 = vpack.c.b16 %v271, %v255
    %v464 = vpack.c.b16 %v272, %v256
    %v465 = vpack.c.b16 %v273, %v257
    %v466 = vpack.c.b16 %v274, %v258
    %v467 = vpack.c.b16 %v275, %v259
    %v468 = vpack.c.b16 %v276, %v260
    %v469 = vpack.c.b16 %v277, %v261
    %v470 = vpack.c.b16 %v278, %v262
    %v471 = vpack.c.b16 %v295, %v279
    %v472 = vpack.c.b16 %v296, %v280
    %v473 = vpack.c.b16 %v297, %v281
    %v474 = vpack.c.b16 %v298, %v282
    %v475 = vpack.c.b16 %v299, %v283
    %v476 = vpack.c.b16 %v300, %v284
    %v477 = vpack.c.b16 %v301, %v285
    %v478 = vpack.c.b16 %v302, %v286
    %v479 = vpack.c.b16 %v303, %v287
    %v480 = vpack.c.b16 %v304, %v288
    %v481 = vpack.c.b16 %v305, %v289
    %v482 = vpack.c.b16 %v306, %v290
    %v483 = vpack.c.b16 %v307, %v291
    %v484 = vpack.c.b16 %v308, %v292
    %v485 = vpack.c.b16 %v309, %v293
    %v486 = vpack.c.b16 %v310, %v294
    %v487 = vpack.c.b16 %v327, %v311
    %v488 = vpack.c.b16 %v328, %v312
    %v489 = vpack.c.b16 %v329, %v313
    %v490 = vpack.c.b16 %v330, %v314
    %v491 = vpack.c.b16 %v331, %v315
    %v492 = vpack.c.b16 %v332, %v316
    %v493 = vpack.c.b16 %v333, %v317
    %v494 = vpack.c.b16 %v334, %v318
    %v495 = vpack.c.b16 %v335, %v319
    %v496 = vpack.c.b16 %v336, %v320
    %v497 = vpack.c.b16 %v337, %v321
    %v498 = vpack.c.b16 %v338, %v322
    %v499 = vpack.c.b16 %v339, %v323
    %v500 = vpack.c.b16 %v340, %v324
    %v501 = vpack.c.b16 %v341, %v325
    %v502 = vpack.c.b16 %v342, %v326
    %v503 = vpack.c.b16 %v359, %v343
    %v504 = vpack.c.b16 %v360, %v344
    %v505 = vpack.c.b16 %v361, %v345
    %v506 = vpack.c.b16 %v362, %v346
    %v507 = vpack.c.b16 %v363, %v347
    %v508 = vpack.c.b16 %v364, %v348
    %v509 = vpack.c.b16 %v365, %v349
    %v510 = vpack.c.b16 %v366, %v350
    %v511 = vpack.c.b16 %v367, %v351
    %v512 = vpack.c.b16 %v368, %v352
    %v513 = vpack.c.b16 %v369, %v353
    %v514 = vpack.c.b16 %v370, %v354
    %v515 = vpack.c.b16 %v371, %v355
    %v516 = vpack.c.b16 %v372, %v356
    %v517 = vpack.c.b16 %v373, %v357
    %v518 = vpack.c.b16 %v374, %v358
    %v519 = vpack.c.b16 %v391, %v375
    %v520 = vpack.c.b16 %v392, %v376
    %v521 = vpack.c.b16 %v393, %v377
    %v522 = vpack.c.b16 %v394, %v378
    %v523 = vpack.c.b16 %v395, %v379
    %v524 = vpack.c.b16 %v396, %v380
    %v525 = vpack.c.b16 %v397, %v381
    %v526 = vpack.c.b16 %v398, %v382
    %v527 = vpack.c.b16 %v399, %v383
    %v528 = vpack.c.b16 %v400, %v384
    %v529 = vpack.c.b16 %v401, %v385
    %v530 = vpack.c.b16 %v402, %v386
    %v531 = vpack.c.b16 %v403, %v387
    %v532 = vpack.c.b16 %v404, %v388
    %v533 = vpack.c.b16 %v405, %v389
    %v534 = vpack.c.b16 %v406, %v390
    %v535 = vpack.c.b16 %v423, %v407
    %v536 = vpack.c.b16 %v424, %v408
    %v537 = vpack.c.b16 %v425, %v409
    %v538 = vpack.c.b16 %v426, %v410
    %v539 = vpack.c.b16 %v427, %v411
    %v540 = vpack.c.b16 %v428, %v412
    %v541 = vpack.c.b16 %v429, %v413
    %v542 = vpack.c.b16 %v430, %v414
    %v543 = vpack.c.b16 %v431, %v415
    %v544 = vpack.c.b16 %v432, %v416
    %v545 = vpack.c.b16 %v433, %v417
    %v546 = vpack.c.b16 %v434, %v418
    %v547 = vpack.c.b16 %v435, %v419
    %v548 = vpack.c.b16 %v436, %v420
    %v549 = vpack.c.b16 %v437, %v421
    %v550 = vpack.c.b16 %v438, %v422
    %v551 = vpack.c.b16 %v439, %v439
    %v552 = vpack.c.b16 %v440, %v440
    %v553 = vpack.c.b16 %v441, %v441
    %v554 = vpack.c.b16 %v442, %v442
    %v555 = vpack.c.b16 %v443, %v443
    %v556 = vpack.c.b16 %v444, %v444
    %v557 = vpack.c.b16 %v445, %v445
    %v558 = vpack.c.b16 %v446, %v446
    %v559 = vpack.c.b16 %v447, %v447
    %v560 = vpack.c.b16 %v448, %v448
    %v561 = vpack.c.b16 %v449, %v449
    %v562 = vpack.c.b16 %v450, %v450
    %v563 = vpack.c.b16 %v451, %v451
    %v564 = vpack.c.b16 %v452, %v452
    %v565 = vpack.c.b16 %v453, %v453
    %v566 = vpack.c.b16 %v454, %v454
    %vm663 = vcmask 818176
    %v665 = vsel %vm663, %v142, 0
    %vm667 = vcmask 1041408
    %v669 = vsel %vm667, %v551, 0
    %v672 = vsel %vm667, %v552, 0
    %v675 = vsel %vm667, %v553, 0
    %v678 = vsel %vm667, %v554, 0
    %v681 = vsel %vm667, %v555, 0
    %v684 = vsel %vm667, %v556, 0
    %v687 = vsel %vm667, %v557, 0
    %v690 = vsel %vm667, %v558, 0
    %v693 = vsel %vm667, %v559, 0
    %v696 = vsel %vm667, %v560, 0
    %v699 = vsel %vm667, %v561, 0
    %v702 = vsel %vm667, %v562, 0
    %v705 = vsel %vm667, %v563, 0
    %v708 = vsel %vm667, %v564, 0
    %v711 = vsel %vm667, %v565, 0
    %v714 = vsel %vm667, %v566, 0
    %716 = vmatprep.subr.bf16.mxu0 0
    %717 = vmatpush1.bf16.msra.mxu0 0
    %718 = vmatprep.subr.bf16.mxu0 %v672
    %719 = vmatpush1.bf16.msra.mxu0 %v669
    %720 = vmatprep.subr.bf16.mxu0 %v536
    %721 = vmatpush1.bf16.msra.mxu0 %v535
    %722 = vmatprep.subr.bf16.mxu0 %v520
    %723 = vmatpush1.bf16.msra.mxu0 %v519
    %724 = vmatprep.subr.bf16.mxu0 %v504
    %725 = vmatpush1.bf16.msra.mxu0 %v503
    %726 = vmatprep.subr.bf16.mxu0 %v488
    %727 = vmatpush1.bf16.msra.mxu0 %v487
    %728 = vmatprep.subr.bf16.mxu0 %v472
    %729 = vmatpush1.bf16.msra.mxu0 %v471
    %730 = vmatprep.subr.bf16.mxu0 %v456
    %731 = vmatpush1.bf16.msra.mxu0 %v455
    %732 = vmatprep.subr.bf16.mxu0 0
    %733 = vmatpush2.bf16.msra.mxu0 0
    %734 = vmatprep.subr.bf16.mxu0 0
    %735 = vmatpush2.bf16.msra.mxu0 0
    %736 = vmatprep.subr.bf16.mxu0 0
    %737 = vmatpush2.bf16.msra.mxu0 0
    %738 = vmatprep.subr.bf16.mxu0 0
    %739 = vmatpush2.bf16.msra.mxu0 0
    %740 = vmatprep.subr.bf16.mxu0 0
    %741 = vmatpush2.bf16.msra.mxu0 0
    %742 = vmatprep.subr.bf16.mxu0 0
    %743 = vmatpush2.bf16.msra.mxu0 0
    %744 = vmatprep.subr.bf16.mxu0 0
    %745 = vmatpush2.bf16.msra.mxu0 0
    %746 = vmatprep.subr.bf16.mxu0 0
    %747 = vmatpush2.bf16.msra.mxu0 0
    %748 = vmatprep.mubr.bf16.mxu0 0
    %749 = vmatmul.mubr.bf16.gmra.mxu0 %v665
    %v750 = vpop.f32.mrf.mxu0
    %v751 = vadd.f32 0.0, %v750
    %v752 = vpop.f32.mrf.mxu0
    %v753 = vadd.f32 0.0, %v752
    %v754 = vpop.f32.mrf.mxu0
    %v755 = vadd.f32 0.0, %v754
    %v756 = vpop.f32.mrf.mxu0
    %v757 = vadd.f32 0.0, %v756
    %758 = vdwg.mxu0
    %759 = vmatprep.subr.bf16.mxu0 0
    %760 = vmatpush1.bf16.msra.mxu0 0
    %761 = vmatprep.subr.bf16.mxu0 %v678
    %762 = vmatpush1.bf16.msra.mxu0 %v675
    %763 = vmatprep.subr.bf16.mxu0 %v538
    %764 = vmatpush1.bf16.msra.mxu0 %v537
    %765 = vmatprep.subr.bf16.mxu0 %v522
    %766 = vmatpush1.bf16.msra.mxu0 %v521
    %767 = vmatprep.subr.bf16.mxu0 %v506
    %768 = vmatpush1.bf16.msra.mxu0 %v505
    %769 = vmatprep.subr.bf16.mxu0 %v490
    %770 = vmatpush1.bf16.msra.mxu0 %v489
    %771 = vmatprep.subr.bf16.mxu0 %v474
    %772 = vmatpush1.bf16.msra.mxu0 %v473
    %773 = vmatprep.subr.bf16.mxu0 %v458
    %774 = vmatpush1.bf16.msra.mxu0 %v457
    %775 = vmatprep.subr.bf16.mxu0 0
    %776 = vmatpush2.bf16.msra.mxu0 0
    %777 = vmatprep.subr.bf16.mxu0 0
    %778 = vmatpush2.bf16.msra.mxu0 0
    %779 = vmatprep.subr.bf16.mxu0 0
    %780 = vmatpush2.bf16.msra.mxu0 0
    %781 = vmatprep.subr.bf16.mxu0 0
    %782 = vmatpush2.bf16.msra.mxu0 0
    %783 = vmatprep.subr.bf16.mxu0 0
    %784 = vmatpush2.bf16.msra.mxu0 0
    %785 = vmatprep.subr.bf16.mxu0 0
    %786 = vmatpush2.bf16.msra.mxu0 0
    %787 = vmatprep.subr.bf16.mxu0 0
    %788 = vmatpush2.bf16.msra.mxu0 0
    %789 = vmatprep.subr.bf16.mxu0 0
    %790 = vmatpush2.bf16.msra.mxu0 0
    %791 = vmatprep.mubr.bf16.mxu0 0
    %792 = vmatmul.mubr.bf16.gmra.mxu0 %v665
    %v793 = vpop.f32.mrf.mxu0
    %v794 = vadd.f32 0.0, %v793
    %v795 = vpop.f32.mrf.mxu0
    %v796 = vadd.f32 0.0, %v795
    %v797 = vpop.f32.mrf.mxu0
    %v798 = vadd.f32 0.0, %v797
    %v799 = vpop.f32.mrf.mxu0
    %v800 = vadd.f32 0.0, %v799
    %801 = vdwg.mxu0
    %802 = vmatprep.subr.bf16.mxu0 0
    %803 = vmatpush1.bf16.msra.mxu0 0
    %804 = vmatprep.subr.bf16.mxu0 %v684
    %805 = vmatpush1.bf16.msra.mxu0 %v681
    %806 = vmatprep.subr.bf16.mxu0 %v540
    %807 = vmatpush1.bf16.msra.mxu0 %v539
    %808 = vmatprep.subr.bf16.mxu0 %v524
    %809 = vmatpush1.bf16.msra.mxu0 %v523
    %810 = vmatprep.subr.bf16.mxu0 %v508
    %811 = vmatpush1.bf16.msra.mxu0 %v507
    %812 = vmatprep.subr.bf16.mxu0 %v492
    %813 = vmatpush1.bf16.msra.mxu0 %v491
    %814 = vmatprep.subr.bf16.mxu0 %v476
    %815 = vmatpush1.bf16.msra.mxu0 %v475
    %816 = vmatprep.subr.bf16.mxu0 %v460
    %817 = vmatpush1.bf16.msra.mxu0 %v459
    %818 = vmatprep.subr.bf16.mxu0 0
    %819 = vmatpush2.bf16.msra.mxu0 0
    %820 = vmatprep.subr.bf16.mxu0 0
    %821 = vmatpush2.bf16.msra.mxu0 0
    %822 = vmatprep.subr.bf16.mxu0 0
    %823 = vmatpush2.bf16.msra.mxu0 0
    %824 = vmatprep.subr.bf16.mxu0 0
    %825 = vmatpush2.bf16.msra.mxu0 0
    %826 = vmatprep.subr.bf16.mxu0 0
    %827 = vmatpush2.bf16.msra.mxu0 0
    %828 = vmatprep.subr.bf16.mxu0 0
    %829 = vmatpush2.bf16.msra.mxu0 0
    %830 = vmatprep.subr.bf16.mxu0 0
    %831 = vmatpush2.bf16.msra.mxu0 0
    %832 = vmatprep.subr.bf16.mxu0 0
    %833 = vmatpush2.bf16.msra.mxu0 0
    %834 = vmatprep.mubr.bf16.mxu0 0
    %835 = vmatmul.mubr.bf16.gmra.mxu0 %v665
    %v836 = vpop.f32.mrf.mxu0
    %v837 = vadd.f32 0.0, %v836
    %v838 = vpop.f32.mrf.mxu0
    %v839 = vadd.f32 0.0, %v838
    %v840 = vpop.f32.mrf.mxu0
    %v841 = vadd.f32 0.0, %v840
    %v842 = vpop.f32.mrf.mxu0
    %v843 = vadd.f32 0.0, %v842
    %844 = vdwg.mxu0
    %845 = vmatprep.subr.bf16.mxu0 0
    %846 = vmatpush1.bf16.msra.mxu0 0
    %847 = vmatprep.subr.bf16.mxu0 %v690
    %848 = vmatpush1.bf16.msra.mxu0 %v687
    %849 = vmatprep.subr.bf16.mxu0 %v542
    %850 = vmatpush1.bf16.msra.mxu0 %v541
    %851 = vmatprep.subr.bf16.mxu0 %v526
    %852 = vmatpush1.bf16.msra.mxu0 %v525
    %853 = vmatprep.subr.bf16.mxu0 %v510
    %854 = vmatpush1.bf16.msra.mxu0 %v509
    %855 = vmatprep.subr.bf16.mxu0 %v494
    %856 = vmatpush1.bf16.msra.mxu0 %v493
    %857 = vmatprep.subr.bf16.mxu0 %v478
    %858 = vmatpush1.bf16.msra.mxu0 %v477
    %859 = vmatprep.subr.bf16.mxu0 %v462
    %860 = vmatpush1.bf16.msra.mxu0 %v461
    %861 = vmatprep.subr.bf16.mxu0 0
    %862 = vmatpush2.bf16.msra.mxu0 0
    %863 = vmatprep.subr.bf16.mxu0 0
    %864 = vmatpush2.bf16.msra.mxu0 0
    %865 = vmatprep.subr.bf16.mxu0 0
    %866 = vmatpush2.bf16.msra.mxu0 0
    %867 = vmatprep.subr.bf16.mxu0 0
    %868 = vmatpush2.bf16.msra.mxu0 0
    %869 = vmatprep.subr.bf16.mxu0 0
    %870 = vmatpush2.bf16.msra.mxu0 0
    %871 = vmatprep.subr.bf16.mxu0 0
    %872 = vmatpush2.bf16.msra.mxu0 0
    %873 = vmatprep.subr.bf16.mxu0 0
    %874 = vmatpush2.bf16.msra.mxu0 0
    %875 = vmatprep.subr.bf16.mxu0 0
    %876 = vmatpush2.bf16.msra.mxu0 0
    %877 = vmatprep.mubr.bf16.mxu0 0
    %878 = vmatmul.mubr.bf16.gmra.mxu0 %v665
    %v879 = vpop.f32.mrf.mxu0
    %v880 = vadd.f32 0.0, %v879
    %v881 = vpop.f32.mrf.mxu0
    %v882 = vadd.f32 0.0, %v881
    %v883 = vpop.f32.mrf.mxu0
    %v884 = vadd.f32 0.0, %v883
    %v885 = vpop.f32.mrf.mxu0
    %v886 = vadd.f32 0.0, %v885
    %887 = vdwg.mxu0
    %888 = vmatprep.subr.bf16.mxu0 0
    %889 = vmatpush1.bf16.msra.mxu0 0
    %890 = vmatprep.subr.bf16.mxu0 %v696
    %891 = vmatpush1.bf16.msra.mxu0 %v693
    %892 = vmatprep.subr.bf16.mxu0 %v544
    %893 = vmatpush1.bf16.msra.mxu0 %v543
    %894 = vmatprep.subr.bf16.mxu0 %v528
    %895 = vmatpush1.bf16.msra.mxu0 %v527
    %896 = vmatprep.subr.bf16.mxu0 %v512
    %897 = vmatpush1.bf16.msra.mxu0 %v511
    %898 = vmatprep.subr.bf16.mxu0 %v496
    %899 = vmatpush1.bf16.msra.mxu0 %v495
    %900 = vmatprep.subr.bf16.mxu0 %v480
    %901 = vmatpush1.bf16.msra.mxu0 %v479
    %902 = vmatprep.subr.bf16.mxu0 %v464
    %903 = vmatpush1.bf16.msra.mxu0 %v463
    %904 = vmatprep.subr.bf16.mxu0 0
    %905 = vmatpush2.bf16.msra.mxu0 0
    %906 = vmatprep.subr.bf16.mxu0 0
    %907 = vmatpush2.bf16.msra.mxu0 0
    %908 = vmatprep.subr.bf16.mxu0 0
    %909 = vmatpush2.bf16.msra.mxu0 0
    %910 = vmatprep.subr.bf16.mxu0 0
    %911 = vmatpush2.bf16.msra.mxu0 0
    %912 = vmatprep.subr.bf16.mxu0 0
    %913 = vmatpush2.bf16.msra.mxu0 0
    %914 = vmatprep.subr.bf16.mxu0 0
    %915 = vmatpush2.bf16.msra.mxu0 0
    %916 = vmatprep.subr.bf16.mxu0 0
    %917 = vmatpush2.bf16.msra.mxu0 0
    %918 = vmatprep.subr.bf16.mxu0 0
    %919 = vmatpush2.bf16.msra.mxu0 0
    %920 = vmatprep.mubr.bf16.mxu0 0
    %921 = vmatmul.mubr.bf16.gmra.mxu0 %v665
    %v922 = vpop.f32.mrf.mxu0
    %v923 = vadd.f32 0.0, %v922
    %v924 = vpop.f32.mrf.mxu0
    %v925 = vadd.f32 0.0, %v924
    %v926 = vpop.f32.mrf.mxu0
    %v927 = vadd.f32 0.0, %v926
    %v928 = vpop.f32.mrf.mxu0
    %v929 = vadd.f32 0.0, %v928
    %930 = vdwg.mxu0
    %931 = vmatprep.subr.bf16.mxu0 0
    %932 = vmatpush1.bf16.msra.mxu0 0
    %933 = vmatprep.subr.bf16.mxu0 %v702
    %934 = vmatpush1.bf16.msra.mxu0 %v699
    %935 = vmatprep.subr.bf16.mxu0 %v546
    %936 = vmatpush1.bf16.msra.mxu0 %v545
    %937 = vmatprep.subr.bf16.mxu0 %v530
    %938 = vmatpush1.bf16.msra.mxu0 %v529
    %939 = vmatprep.subr.bf16.mxu0 %v514
    %940 = vmatpush1.bf16.msra.mxu0 %v513
    %941 = vmatprep.subr.bf16.mxu0 %v498
    %942 = vmatpush1.bf16.msra.mxu0 %v497
    %943 = vmatprep.subr.bf16.mxu0 %v482
    %944 = vmatpush1.bf16.msra.mxu0 %v481
    %945 = vmatprep.subr.bf16.mxu0 %v466
    %946 = vmatpush1.bf16.msra.mxu0 %v465
    %947 = vmatprep.subr.bf16.mxu0 0
    %948 = vmatpush2.bf16.msra.mxu0 0
    %949 = vmatprep.subr.bf16.mxu0 0
    %950 = vmatpush2.bf16.msra.mxu0 0
    %951 = vmatprep.subr.bf16.mxu0 0
    %952 = vmatpush2.bf16.msra.mxu0 0
    %953 = vmatprep.subr.bf16.mxu0 0
    %954 = vmatpush2.bf16.msra.mxu0 0
    %955 = vmatprep.subr.bf16.mxu0 0
    %956 = vmatpush2.bf16.msra.mxu0 0
    %957 = vmatprep.subr.bf16.mxu0 0
    %958 = vmatpush2.bf16.msra.mxu0 0
    %959 = vmatprep.subr.bf16.mxu0 0
    %960 = vmatpush2.bf16.msra.mxu0 0
    %961 = vmatprep.subr.bf16.mxu0 0
    %962 = vmatpush2.bf16.msra.mxu0 0
    %963 = vmatprep.mubr.bf16.mxu0 0
    %964 = vmatmul.mubr.bf16.gmra.mxu0 %v665
    %v965 = vpop.f32.mrf.mxu0
    %v966 = vadd.f32 0.0, %v965
    %v967 = vpop.f32.mrf.mxu0
    %v968 = vadd.f32 0.0, %v967
    %v969 = vpop.f32.mrf.mxu0
    %v970 = vadd.f32 0.0, %v969
    %v971 = vpop.f32.mrf.mxu0
    %v972 = vadd.f32 0.0, %v971
    %973 = vdwg.mxu0
    %974 = vmatprep.subr.bf16.mxu0 0
    %975 = vmatpush1.bf16.msra.mxu0 0
    %976 = vmatprep.subr.bf16.mxu0 %v708
    %977 = vmatpush1.bf16.msra.mxu0 %v705
    %978 = vmatprep.subr.bf16.mxu0 %v548
    %979 = vmatpush1.bf16.msra.mxu0 %v547
    %980 = vmatprep.subr.bf16.mxu0 %v532
    %981 = vmatpush1.bf16.msra.mxu0 %v531
    %982 = vmatprep.subr.bf16.mxu0 %v516
    %983 = vmatpush1.bf16.msra.mxu0 %v515
    %984 = vmatprep.subr.bf16.mxu0 %v500
    %985 = vmatpush1.bf16.msra.mxu0 %v499
    %986 = vmatprep.subr.bf16.mxu0 %v484
    %987 = vmatpush1.bf16.msra.mxu0 %v483
    %988 = vmatprep.subr.bf16.mxu0 %v468
    %989 = vmatpush1.bf16.msra.mxu0 %v467
    %990 = vmatprep.subr.bf16.mxu0 0
    %991 = vmatpush2.bf16.msra.mxu0 0
    %992 = vmatprep.subr.bf16.mxu0 0
    %993 = vmatpush2.bf16.msra.mxu0 0
    %994 = vmatprep.subr.bf16.mxu0 0
    %995 = vmatpush2.bf16.msra.mxu0 0
    %996 = vmatprep.subr.bf16.mxu0 0
    %997 = vmatpush2.bf16.msra.mxu0 0
    %998 = vmatprep.subr.bf16.mxu0 0
    %999 = vmatpush2.bf16.msra.mxu0 0
    %1000 = vmatprep.subr.bf16.mxu0 0
    %1001 = vmatpush2.bf16.msra.mxu0 0
    %1002 = vmatprep.subr.bf16.mxu0 0
    %1003 = vmatpush2.bf16.msra.mxu0 0
    %1004 = vmatprep.subr.bf16.mxu0 0
    %1005 = vmatpush2.bf16.msra.mxu0 0
    %1006 = vmatprep.mubr.bf16.mxu0 0
    %1007 = vmatmul.mubr.bf16.gmra.mxu0 %v665
    %v1008 = vpop.f32.mrf.mxu0
    %v1009 = vadd.f32 0.0, %v1008
    %v1010 = vpop.f32.mrf.mxu0
    %v1011 = vadd.f32 0.0, %v1010
    %v1012 = vpop.f32.mrf.mxu0
    %v1013 = vadd.f32 0.0, %v1012
    %v1014 = vpop.f32.mrf.mxu0
    %v1015 = vadd.f32 0.0, %v1014
    %1016 = vdwg.mxu0
    %1017 = vmatprep.subr.bf16.mxu0 0
    %1018 = vmatpush1.bf16.msra.mxu0 0
    %1019 = vmatprep.subr.bf16.mxu0 %v714
    %1020 = vmatpush1.bf16.msra.mxu0 %v711
    %1021 = vmatprep.subr.bf16.mxu0 %v550
    %1022 = vmatpush1.bf16.msra.mxu0 %v549
    %1023 = vmatprep.subr.bf16.mxu0 %v534
    %1024 = vmatpush1.bf16.msra.mxu0 %v533
    %1025 = vmatprep.subr.bf16.mxu0 %v518
    %1026 = vmatpush1.bf16.msra.mxu0 %v517
    %1027 = vmatprep.subr.bf16.mxu0 %v502
    %1028 = vmatpush1.bf16.msra.mxu0 %v501
    %1029 = vmatprep.subr.bf16.mxu0 %v486
    %1030 = vmatpush1.bf16.msra.mxu0 %v485
    %1031 = vmatprep.subr.bf16.mxu0 %v470
    %1032 = vmatpush1.bf16.msra.mxu0 %v469
    %1033 = vmatprep.subr.bf16.mxu0 0
    %1034 = vmatpush2.bf16.msra.mxu0 0
    %1035 = vmatprep.subr.bf16.mxu0 0
    %1036 = vmatpush2.bf16.msra.mxu0 0
    %1037 = vmatprep.subr.bf16.mxu0 0
    %1038 = vmatpush2.bf16.msra.mxu0 0
    %1039 = vmatprep.subr.bf16.mxu0 0
    %1040 = vmatpush2.bf16.msra.mxu0 0
    %1041 = vmatprep.subr.bf16.mxu0 0
    %1042 = vmatpush2.bf16.msra.mxu0 0
    %1043 = vmatprep.subr.bf16.mxu0 0
    %1044 = vmatpush2.bf16.msra.mxu0 0
    %1045 = vmatprep.subr.bf16.mxu0 0
    %1046 = vmatpush2.bf16.msra.mxu0 0
    %1047 = vmatprep.subr.bf16.mxu0 0
    %1048 = vmatpush2.bf16.msra.mxu0 0
    %1049 = vmatprep.mubr.bf16.mxu0 0
    %1050 = vmatmul.mubr.bf16.gmra.mxu0 %v665
    %v1051 = vpop.f32.mrf.mxu0
    %v1052 = vadd.f32 0.0, %v1051
    %v1053 = vpop.f32.mrf.mxu0
    %v1054 = vadd.f32 0.0, %v1053
    %v1055 = vpop.f32.mrf.mxu0
    %v1056 = vadd.f32 0.0, %v1055
    %v1057 = vpop.f32.mrf.mxu0
    %v1058 = vadd.f32 0.0, %v1057
    %1059 = vdwg.mxu0
    %v1060 = vadd.f32 %v751, %v755
    %v1061 = vrot.slane %v1060, 4
    %v1062 = vadd.f32 %v1060, %v1061
    %v1063 = vrot.slane %v1062, 2
    %v1064 = vadd.f32 %v1062, %v1063
    %v1065 = vrot.slane %v1064, 1
    %v1066 = vadd.f32 %v1064, %v1065
    %v1067 = vadd.f32 %v1066, 0.0
    %v1068 = vmul.f32 %v751, %v751
    %v1069 = vmul.f32 %v755, %v755
    %v1070 = vadd.f32 %v1068, %v1069
    %v1071 = vrot.slane %v1070, 4
    %v1072 = vadd.f32 %v1070, %v1071
    %v1073 = vrot.slane %v1072, 2
    %v1074 = vadd.f32 %v1072, %v1073
    %v1075 = vrot.slane %v1074, 1
    %v1076 = vadd.f32 %v1074, %v1075
    %v1077 = vadd.f32 %v1076, 0.0
    %v1078 = vadd.f32 %v753, %v757
    %v1079 = vrot.slane %v1078, 4
    %v1080 = vadd.f32 %v1078, %v1079
    %v1081 = vrot.slane %v1080, 2
    %v1082 = vadd.f32 %v1080, %v1081
    %v1083 = vrot.slane %v1082, 1
    %v1084 = vadd.f32 %v1082, %v1083
    %v1085 = vadd.f32 %v1067, %v1084
    %v1086 = vmul.f32 %v753, %v753
    %v1087 = vmul.f32 %v757, %v757
    %v1088 = vadd.f32 %v1086, %v1087
    %v1089 = vrot.slane %v1088, 4
    %v1090 = vadd.f32 %v1088, %v1089
    %v1091 = vrot.slane %v1090, 2
    %v1092 = vadd.f32 %v1090, %v1091
    %v1093 = vrot.slane %v1092, 1
    %v1094 = vadd.f32 %v1092, %v1093
    %v1095 = vadd.f32 %v1077, %v1094
    %v1096 = vadd.f32 %v794, %v798
    %v1097 = vrot.slane %v1096, 4
    %v1098 = vadd.f32 %v1096, %v1097
    %v1099 = vrot.slane %v1098, 2
    %v1100 = vadd.f32 %v1098, %v1099
    %v1101 = vrot.slane %v1100, 1
    %v1102 = vadd.f32 %v1100, %v1101
    %v1103 = vadd.f32 %v1085, %v1102
    %v1104 = vmul.f32 %v794, %v794
    %v1105 = vmul.f32 %v798, %v798
    %v1106 = vadd.f32 %v1104, %v1105
    %v1107 = vrot.slane %v1106, 4
    %v1108 = vadd.f32 %v1106, %v1107
    %v1109 = vrot.slane %v1108, 2
    %v1110 = vadd.f32 %v1108, %v1109
    %v1111 = vrot.slane %v1110, 1
    %v1112 = vadd.f32 %v1110, %v1111
    %v1113 = vadd.f32 %v1095, %v1112
    %v1114 = vadd.f32 %v796, %v800
    %v1115 = vrot.slane %v1114, 4
    %v1116 = vadd.f32 %v1114, %v1115
    %v1117 = vrot.slane %v1116, 2
    %v1118 = vadd.f32 %v1116, %v1117
    %v1119 = vrot.slane %v1118, 1
    %v1120 = vadd.f32 %v1118, %v1119
    %v1121 = vadd.f32 %v1103, %v1120
    %v1122 = vmul.f32 %v796, %v796
    %v1123 = vmul.f32 %v800, %v800
    %v1124 = vadd.f32 %v1122, %v1123
    %v1125 = vrot.slane %v1124, 4
    %v1126 = vadd.f32 %v1124, %v1125
    %v1127 = vrot.slane %v1126, 2
    %v1128 = vadd.f32 %v1126, %v1127
    %v1129 = vrot.slane %v1128, 1
    %v1130 = vadd.f32 %v1128, %v1129
    %v1131 = vadd.f32 %v1113, %v1130
    %v1132 = vadd.f32 %v837, %v841
    %v1133 = vrot.slane %v1132, 4
    %v1134 = vadd.f32 %v1132, %v1133
    %v1135 = vrot.slane %v1134, 2
    %v1136 = vadd.f32 %v1134, %v1135
    %v1137 = vrot.slane %v1136, 1
    %v1138 = vadd.f32 %v1136, %v1137
    %v1139 = vadd.f32 %v1121, %v1138
    %v1140 = vmul.f32 %v837, %v837
    %v1141 = vmul.f32 %v841, %v841
    %v1142 = vadd.f32 %v1140, %v1141
    %v1143 = vrot.slane %v1142, 4
    %v1144 = vadd.f32 %v1142, %v1143
    %v1145 = vrot.slane %v1144, 2
    %v1146 = vadd.f32 %v1144, %v1145
    %v1147 = vrot.slane %v1146, 1
    %v1148 = vadd.f32 %v1146, %v1147
    %v1149 = vadd.f32 %v1131, %v1148
    %v1150 = vadd.f32 %v839, %v843
    %v1151 = vrot.slane %v1150, 4
    %v1152 = vadd.f32 %v1150, %v1151
    %v1153 = vrot.slane %v1152, 2
    %v1154 = vadd.f32 %v1152, %v1153
    %v1155 = vrot.slane %v1154, 1
    %v1156 = vadd.f32 %v1154, %v1155
    %v1157 = vadd.f32 %v1139, %v1156
    %v1158 = vmul.f32 %v839, %v839
    %v1159 = vmul.f32 %v843, %v843
    %v1160 = vadd.f32 %v1158, %v1159
    %v1161 = vrot.slane %v1160, 4
    %v1162 = vadd.f32 %v1160, %v1161
    %v1163 = vrot.slane %v1162, 2
    %v1164 = vadd.f32 %v1162, %v1163
    %v1165 = vrot.slane %v1164, 1
    %v1166 = vadd.f32 %v1164, %v1165
    %v1167 = vadd.f32 %v1149, %v1166
    %v1168 = vadd.f32 %v880, %v884
    %v1169 = vrot.slane %v1168, 4
    %v1170 = vadd.f32 %v1168, %v1169
    %v1171 = vrot.slane %v1170, 2
    %v1172 = vadd.f32 %v1170, %v1171
    %v1173 = vrot.slane %v1172, 1
    %v1174 = vadd.f32 %v1172, %v1173
    %v1175 = vadd.f32 %v1157, %v1174
    %v1176 = vmul.f32 %v880, %v880
    %v1177 = vmul.f32 %v884, %v884
    %v1178 = vadd.f32 %v1176, %v1177
    %v1179 = vrot.slane %v1178, 4
    %v1180 = vadd.f32 %v1178, %v1179
    %v1181 = vrot.slane %v1180, 2
    %v1182 = vadd.f32 %v1180, %v1181
    %v1183 = vrot.slane %v1182, 1
    %v1184 = vadd.f32 %v1182, %v1183
    %v1185 = vadd.f32 %v1167, %v1184
    %v1186 = vadd.f32 %v882, %v886
    %v1187 = vrot.slane %v1186, 4
    %v1188 = vadd.f32 %v1186, %v1187
    %v1189 = vrot.slane %v1188, 2
    %v1190 = vadd.f32 %v1188, %v1189
    %v1191 = vrot.slane %v1190, 1
    %v1192 = vadd.f32 %v1190, %v1191
    %v1193 = vadd.f32 %v1175, %v1192
    %v1194 = vmul.f32 %v882, %v882
    %v1195 = vmul.f32 %v886, %v886
    %v1196 = vadd.f32 %v1194, %v1195
    %v1197 = vrot.slane %v1196, 4
    %v1198 = vadd.f32 %v1196, %v1197
    %v1199 = vrot.slane %v1198, 2
    %v1200 = vadd.f32 %v1198, %v1199
    %v1201 = vrot.slane %v1200, 1
    %v1202 = vadd.f32 %v1200, %v1201
    %v1203 = vadd.f32 %v1185, %v1202
    %v1204 = vadd.f32 %v923, %v927
    %v1205 = vrot.slane %v1204, 4
    %v1206 = vadd.f32 %v1204, %v1205
    %v1207 = vrot.slane %v1206, 2
    %v1208 = vadd.f32 %v1206, %v1207
    %v1209 = vrot.slane %v1208, 1
    %v1210 = vadd.f32 %v1208, %v1209
    %v1211 = vadd.f32 %v1193, %v1210
    %v1212 = vmul.f32 %v923, %v923
    %v1213 = vmul.f32 %v927, %v927
    %v1214 = vadd.f32 %v1212, %v1213
    %v1215 = vrot.slane %v1214, 4
    %v1216 = vadd.f32 %v1214, %v1215
    %v1217 = vrot.slane %v1216, 2
    %v1218 = vadd.f32 %v1216, %v1217
    %v1219 = vrot.slane %v1218, 1
    %v1220 = vadd.f32 %v1218, %v1219
    %v1221 = vadd.f32 %v1203, %v1220
    %v1222 = vadd.f32 %v925, %v929
    %v1223 = vrot.slane %v1222, 4
    %v1224 = vadd.f32 %v1222, %v1223
    %v1225 = vrot.slane %v1224, 2
    %v1226 = vadd.f32 %v1224, %v1225
    %v1227 = vrot.slane %v1226, 1
    %v1228 = vadd.f32 %v1226, %v1227
    %v1229 = vadd.f32 %v1211, %v1228
    %v1230 = vmul.f32 %v925, %v925
    %v1231 = vmul.f32 %v929, %v929
    %v1232 = vadd.f32 %v1230, %v1231
    %v1233 = vrot.slane %v1232, 4
    %v1234 = vadd.f32 %v1232, %v1233
    %v1235 = vrot.slane %v1234, 2
    %v1236 = vadd.f32 %v1234, %v1235
    %v1237 = vrot.slane %v1236, 1
    %v1238 = vadd.f32 %v1236, %v1237
    %v1239 = vadd.f32 %v1221, %v1238
    %v1240 = vadd.f32 %v966, %v970
    %v1241 = vrot.slane %v1240, 4
    %v1242 = vadd.f32 %v1240, %v1241
    %v1243 = vrot.slane %v1242, 2
    %v1244 = vadd.f32 %v1242, %v1243
    %v1245 = vrot.slane %v1244, 1
    %v1246 = vadd.f32 %v1244, %v1245
    %v1247 = vadd.f32 %v1229, %v1246
    %v1248 = vmul.f32 %v966, %v966
    %v1249 = vmul.f32 %v970, %v970
    %v1250 = vadd.f32 %v1248, %v1249
    %v1251 = vrot.slane %v1250, 4
    %v1252 = vadd.f32 %v1250, %v1251
    %v1253 = vrot.slane %v1252, 2
    %v1254 = vadd.f32 %v1252, %v1253
    %v1255 = vrot.slane %v1254, 1
    %v1256 = vadd.f32 %v1254, %v1255
    %v1257 = vadd.f32 %v1239, %v1256
    %v1258 = vadd.f32 %v968, %v972
    %v1259 = vrot.slane %v1258, 4
    %v1260 = vadd.f32 %v1258, %v1259
    %v1261 = vrot.slane %v1260, 2
    %v1262 = vadd.f32 %v1260, %v1261
    %v1263 = vrot.slane %v1262, 1
    %v1264 = vadd.f32 %v1262, %v1263
    %v1265 = vadd.f32 %v1247, %v1264
    %v1266 = vmul.f32 %v968, %v968
    %v1267 = vmul.f32 %v972, %v972
    %v1268 = vadd.f32 %v1266, %v1267
    %v1269 = vrot.slane %v1268, 4
    %v1270 = vadd.f32 %v1268, %v1269
    %v1271 = vrot.slane %v1270, 2
    %v1272 = vadd.f32 %v1270, %v1271
    %v1273 = vrot.slane %v1272, 1
    %v1274 = vadd.f32 %v1272, %v1273
    %v1275 = vadd.f32 %v1257, %v1274
    %v1276 = vadd.f32 %v1009, %v1013
    %v1277 = vrot.slane %v1276, 4
    %v1278 = vadd.f32 %v1276, %v1277
    %v1279 = vrot.slane %v1278, 2
    %v1280 = vadd.f32 %v1278, %v1279
    %v1281 = vrot.slane %v1280, 1
    %v1282 = vadd.f32 %v1280, %v1281
    %v1283 = vadd.f32 %v1265, %v1282
    %v1284 = vmul.f32 %v1009, %v1009
    %v1285 = vmul.f32 %v1013, %v1013
    %v1286 = vadd.f32 %v1284, %v1285
    %v1287 = vrot.slane %v1286, 4
    %v1288 = vadd.f32 %v1286, %v1287
    %v1289 = vrot.slane %v1288, 2
    %v1290 = vadd.f32 %v1288, %v1289
    %v1291 = vrot.slane %v1290, 1
    %v1292 = vadd.f32 %v1290, %v1291
    %v1293 = vadd.f32 %v1275, %v1292
    %v1294 = vadd.f32 %v1011, %v1015
    %v1295 = vrot.slane %v1294, 4
    %v1296 = vadd.f32 %v1294, %v1295
    %v1297 = vrot.slane %v1296, 2
    %v1298 = vadd.f32 %v1296, %v1297
    %v1299 = vrot.slane %v1298, 1
    %v1300 = vadd.f32 %v1298, %v1299
    %v1301 = vadd.f32 %v1283, %v1300
    %v1302 = vmul.f32 %v1011, %v1011
    %v1303 = vmul.f32 %v1015, %v1015
    %v1304 = vadd.f32 %v1302, %v1303
    %v1305 = vrot.slane %v1304, 4
    %v1306 = vadd.f32 %v1304, %v1305
    %v1307 = vrot.slane %v1306, 2
    %v1308 = vadd.f32 %v1306, %v1307
    %v1309 = vrot.slane %v1308, 1
    %v1310 = vadd.f32 %v1308, %v1309
    %v1311 = vadd.f32 %v1293, %v1310
    %v1312 = vadd.f32 %v1052, %v1056
    %v1313 = vrot.slane %v1312, 4
    %v1314 = vadd.f32 %v1312, %v1313
    %v1315 = vrot.slane %v1314, 2
    %v1316 = vadd.f32 %v1314, %v1315
    %v1317 = vrot.slane %v1316, 1
    %v1318 = vadd.f32 %v1316, %v1317
    %v1319 = vadd.f32 %v1301, %v1318
    %v1320 = vmul.f32 %v1052, %v1052
    %v1321 = vmul.f32 %v1056, %v1056
    %v1322 = vadd.f32 %v1320, %v1321
    %v1323 = vrot.slane %v1322, 4
    %v1324 = vadd.f32 %v1322, %v1323
    %v1325 = vrot.slane %v1324, 2
    %v1326 = vadd.f32 %v1324, %v1325
    %v1327 = vrot.slane %v1326, 1
    %v1328 = vadd.f32 %v1326, %v1327
    %v1329 = vadd.f32 %v1311, %v1328
    %v1330 = vadd.f32 %v1054, %v1058
    %v1331 = vrot.slane %v1330, 4
    %v1332 = vadd.f32 %v1330, %v1331
    %v1333 = vrot.slane %v1332, 2
    %v1334 = vadd.f32 %v1332, %v1333
    %v1335 = vrot.slane %v1334, 1
    %v1336 = vadd.f32 %v1334, %v1335
    %v1337 = vadd.f32 %v1319, %v1336
    %v1338 = vmul.f32 %v1054, %v1054
    %v1339 = vmul.f32 %v1058, %v1058
    %v1340 = vadd.f32 %v1338, %v1339
    %v1341 = vrot.slane %v1340, 4
    %v1342 = vadd.f32 %v1340, %v1341
    %v1343 = vrot.slane %v1342, 2
    %v1344 = vadd.f32 %v1342, %v1343
    %v1345 = vrot.slane %v1344, 1
    %v1346 = vadd.f32 %v1344, %v1345
    %v1347 = vadd.f32 %v1329, %v1346
    %v1348 = vrcp.pop 32.0
    %v1349 = vmul.f32 %v1337, %v1348
    %v1350 = vmul.f32 %v1347, %v1348
    %v1351 = vmul.f32 %v1349, %v1349
    %v1352 = vsub.f32 %v1350, %v1351
    %v1353 = vadd.f32 %v1352, 1e-05
    %v1354 = vrsqrt.pop %v1353
    %v1355 = vld [vmem:[%s2] sm:$0x1]
    %v1356 = vmul.f32 %v1355, %v1354
    %v1357 = vld [vmem:[%s3] sm:$0x1]
    %v1358 = vmul.f32 %v1349, %v1356
    %v1359 = vsub.f32 %v1357, %v1358
    %v1361 = vlaneseq
    %v1362 = vshrl.u32 %v1361, 7
    %v1363 = vsub.s32 0, %v1362
    %v1364 = vrot.slane %v1356, %v1363
    %v1366 = vmul.f32 %v751, %v1364
    %v1367 = vmul.f32 %v755, %v1364
    %v1369 = vlaneseq
    %v1370 = vshrl.u32 %v1369, 7
    %v1371 = vsub.s32 0, %v1370
    %v1372 = vrot.slane %v1359, %v1371
    %v1374 = vadd.f32 %v1366, %v1372
    %v1375 = vadd.f32 %v1367, %v1372
    %v1376 = vmax.f32 %v1374, 0.0
    %v1377 = vmax.f32 %v1375, 0.0
    %v1378 = vpack.c.bf16 %v1377, %v1376
    %v1380 = vunpack.c.l.b16 %v1378
    %v1381 = vunpack.c.h.b16 %v1378
    %v1382 = vpack.c.b16 %v1380, %v1380
    %v1383 = vpack.c.b16 %v1381, %v1381
    %1386 = vst [vmem:[%s4] sm:$0xf] %v1382
    %1387 = vst [vmem:[%s4 + $0x40] sm:$0xf] %v1383
    %v1388 = vmul.f32 %v753, %v1364
    %v1389 = vmul.f32 %v757, %v1364
    %v1390 = vadd.f32 %v1388, %v1372
    %v1391 = vadd.f32 %v1389, %v1372
    %v1392 = vmax.f32 %v1390, 0.0
    %v1393 = vmax.f32 %v1391, 0.0
    %v1394 = vpack.c.bf16 %v1393, %v1392
    %v1396 = vunpack.c.l.b16 %v1394
    %v1397 = vunpack.c.h.b16 %v1394
    %v1398 = vpack.c.b16 %v1396, %v1396
    %v1399 = vpack.c.b16 %v1397, %v1397
    %1402 = vst [vmem:[%s4 + $0x4] sm:$0xf] %v1398
    %1403 = vst [vmem:[%s4 + $0x44] sm:$0xf] %v1399
    %v1404 = vmul.f32 %v794, %v1364
    %v1405 = vmul.f32 %v798, %v1364
    %v1406 = vadd.f32 %v1404, %v1372
    %v1407 = vadd.f32 %v1405, %v1372
    %v1408 = vmax.f32 %v1406, 0.0
    %v1409 = vmax.f32 %v1407, 0.0
    %v1410 = vpack.c.bf16 %v1409, %v1408
    %v1412 = vunpack.c.l.b16 %v1410
    %v1413 = vunpack.c.h.b16 %v1410
    %v1414 = vpack.c.b16 %v1412, %v1412
    %v1415 = vpack.c.b16 %v1413, %v1413
    %1418 = vst [vmem:[%s4 + $0x8] sm:$0xf] %v1414
    %1419 = vst [vmem:[%s4 + $0x48] sm:$0xf] %v1415
    %v1420 = vmul.f32 %v796, %v1364
    %v1421 = vmul.f32 %v800, %v1364
    %v1422 = vadd.f32 %v1420, %v1372
    %v1423 = vadd.f32 %v1421, %v1372
    %v1424 = vmax.f32 %v1422, 0.0
    %v1425 = vmax.f32 %v1423, 0.0
    %v1426 = vpack.c.bf16 %v1425, %v1424
    %v1428 = vunpack.c.l.b16 %v1426
    %v1429 = vunpack.c.h.b16 %v1426
    %v1430 = vpack.c.b16 %v1428, %v1428
    %v1431 = vpack.c.b16 %v1429, %v1429
    %1434 = vst [vmem:[%s4 + $0xc] sm:$0xf] %v1430
    %1435 = vst [vmem:[%s4 + $0x4c] sm:$0xf] %v1431
    %v1436 = vmul.f32 %v837, %v1364
    %v1437 = vmul.f32 %v841, %v1364
    %v1438 = vadd.f32 %v1436, %v1372
    %v1439 = vadd.f32 %v1437, %v1372
    %v1440 = vmax.f32 %v1438, 0.0
    %v1441 = vmax.f32 %v1439, 0.0
    %v1442 = vpack.c.bf16 %v1441, %v1440
    %v1444 = vunpack.c.l.b16 %v1442
    %v1445 = vunpack.c.h.b16 %v1442
    %v1446 = vpack.c.b16 %v1444, %v1444
    %v1447 = vpack.c.b16 %v1445, %v1445
    %1450 = vst [vmem:[%s4 + $0x10] sm:$0xf] %v1446
    %1451 = vst [vmem:[%s4 + $0x50] sm:$0xf] %v1447
    %v1452 = vmul.f32 %v839, %v1364
    %v1453 = vmul.f32 %v843, %v1364
    %v1454 = vadd.f32 %v1452, %v1372
    %v1455 = vadd.f32 %v1453, %v1372
    %v1456 = vmax.f32 %v1454, 0.0
    %v1457 = vmax.f32 %v1455, 0.0
    %v1458 = vpack.c.bf16 %v1457, %v1456
    %v1460 = vunpack.c.l.b16 %v1458
    %v1461 = vunpack.c.h.b16 %v1458
    %v1462 = vpack.c.b16 %v1460, %v1460
    %v1463 = vpack.c.b16 %v1461, %v1461
    %1466 = vst [vmem:[%s4 + $0x14] sm:$0xf] %v1462
    %1467 = vst [vmem:[%s4 + $0x54] sm:$0xf] %v1463
    %v1468 = vmul.f32 %v880, %v1364
    %v1469 = vmul.f32 %v884, %v1364
    %v1470 = vadd.f32 %v1468, %v1372
    %v1471 = vadd.f32 %v1469, %v1372
    %v1472 = vmax.f32 %v1470, 0.0
    %v1473 = vmax.f32 %v1471, 0.0
    %v1474 = vpack.c.bf16 %v1473, %v1472
    %v1476 = vunpack.c.l.b16 %v1474
    %v1477 = vunpack.c.h.b16 %v1474
    %v1478 = vpack.c.b16 %v1476, %v1476
    %v1479 = vpack.c.b16 %v1477, %v1477
    %1482 = vst [vmem:[%s4 + $0x18] sm:$0xf] %v1478
    %1483 = vst [vmem:[%s4 + $0x58] sm:$0xf] %v1479
    %v1484 = vmul.f32 %v882, %v1364
    %v1485 = vmul.f32 %v886, %v1364
    %v1486 = vadd.f32 %v1484, %v1372
    %v1487 = vadd.f32 %v1485, %v1372
    %v1488 = vmax.f32 %v1486, 0.0
    %v1489 = vmax.f32 %v1487, 0.0
    %v1490 = vpack.c.bf16 %v1489, %v1488
    %v1492 = vunpack.c.l.b16 %v1490
    %v1493 = vunpack.c.h.b16 %v1490
    %v1494 = vpack.c.b16 %v1492, %v1492
    %v1495 = vpack.c.b16 %v1493, %v1493
    %1498 = vst [vmem:[%s4 + $0x1c] sm:$0xf] %v1494
    %1499 = vst [vmem:[%s4 + $0x5c] sm:$0xf] %v1495
    %v1500 = vmul.f32 %v923, %v1364
    %v1501 = vmul.f32 %v927, %v1364
    %v1502 = vadd.f32 %v1500, %v1372
    %v1503 = vadd.f32 %v1501, %v1372
    %v1504 = vmax.f32 %v1502, 0.0
    %v1505 = vmax.f32 %v1503, 0.0
    %v1506 = vpack.c.bf16 %v1505, %v1504
    %v1508 = vunpack.c.l.b16 %v1506
    %v1509 = vunpack.c.h.b16 %v1506
    %v1510 = vpack.c.b16 %v1508, %v1508
    %v1511 = vpack.c.b16 %v1509, %v1509
    %1514 = vst [vmem:[%s4 + $0x20] sm:$0xf] %v1510
    %1515 = vst [vmem:[%s4 + $0x60] sm:$0xf] %v1511
    %v1516 = vmul.f32 %v925, %v1364
    %v1517 = vmul.f32 %v929, %v1364
    %v1518 = vadd.f32 %v1516, %v1372
    %v1519 = vadd.f32 %v1517, %v1372
    %v1520 = vmax.f32 %v1518, 0.0
    %v1521 = vmax.f32 %v1519, 0.0
    %v1522 = vpack.c.bf16 %v1521, %v1520
    %v1524 = vunpack.c.l.b16 %v1522
    %v1525 = vunpack.c.h.b16 %v1522
    %v1526 = vpack.c.b16 %v1524, %v1524
    %v1527 = vpack.c.b16 %v1525, %v1525
    %1530 = vst [vmem:[%s4 + $0x24] sm:$0xf] %v1526
    %1531 = vst [vmem:[%s4 + $0x64] sm:$0xf] %v1527
    %v1532 = vmul.f32 %v966, %v1364
    %v1533 = vmul.f32 %v970, %v1364
    %v1534 = vadd.f32 %v1532, %v1372
    %v1535 = vadd.f32 %v1533, %v1372
    %v1536 = vmax.f32 %v1534, 0.0
    %v1537 = vmax.f32 %v1535, 0.0
    %v1538 = vpack.c.bf16 %v1537, %v1536
    %v1540 = vunpack.c.l.b16 %v1538
    %v1541 = vunpack.c.h.b16 %v1538
    %v1542 = vpack.c.b16 %v1540, %v1540
    %v1543 = vpack.c.b16 %v1541, %v1541
    %1546 = vst [vmem:[%s4 + $0x28] sm:$0xf] %v1542
    %1547 = vst [vmem:[%s4 + $0x68] sm:$0xf] %v1543
    %v1548 = vmul.f32 %v968, %v1364
    %v1549 = vmul.f32 %v972, %v1364
    %v1550 = vadd.f32 %v1548, %v1372
    %v1551 = vadd.f32 %v1549, %v1372
    %v1552 = vmax.f32 %v1550, 0.0
    %v1553 = vmax.f32 %v1551, 0.0
    %v1554 = vpack.c.bf16 %v1553, %v1552
    %v1556 = vunpack.c.l.b16 %v1554
    %v1557 = vunpack.c.h.b16 %v1554
    %v1558 = vpack.c.b16 %v1556, %v1556
    %v1559 = vpack.c.b16 %v1557, %v1557
    %1562 = vst [vmem:[%s4 + $0x2c] sm:$0xf] %v1558
    %1563 = vst [vmem:[%s4 + $0x6c] sm:$0xf] %v1559
    %v1564 = vmul.f32 %v1009, %v1364
    %v1565 = vmul.f32 %v1013, %v1364
    %v1566 = vadd.f32 %v1564, %v1372
    %v1567 = vadd.f32 %v1565, %v1372
    %v1568 = vmax.f32 %v1566, 0.0
    %v1569 = vmax.f32 %v1567, 0.0
    %v1570 = vpack.c.bf16 %v1569, %v1568
    %v1572 = vunpack.c.l.b16 %v1570
    %v1573 = vunpack.c.h.b16 %v1570
    %v1574 = vpack.c.b16 %v1572, %v1572
    %v1575 = vpack.c.b16 %v1573, %v1573
    %1578 = vst [vmem:[%s4 + $0x30] sm:$0xf] %v1574
    %1579 = vst [vmem:[%s4 + $0x70] sm:$0xf] %v1575
    %v1580 = vmul.f32 %v1011, %v1364
    %v1581 = vmul.f32 %v1015, %v1364
    %v1582 = vadd.f32 %v1580, %v1372
    %v1583 = vadd.f32 %v1581, %v1372
    %v1584 = vmax.f32 %v1582, 0.0
    %v1585 = vmax.f32 %v1583, 0.0
    %v1586 = vpack.c.bf16 %v1585, %v1584
    %v1588 = vunpack.c.l.b16 %v1586
    %v1589 = vunpack.c.h.b16 %v1586
    %v1590 = vpack.c.b16 %v1588, %v1588
    %v1591 = vpack.c.b16 %v1589, %v1589
    %1594 = vst [vmem:[%s4 + $0x34] sm:$0xf] %v1590
    %1595 = vst [vmem:[%s4 + $0x74] sm:$0xf] %v1591
    %v1596 = vmul.f32 %v1052, %v1364
    %v1597 = vmul.f32 %v1056, %v1364
    %v1598 = vadd.f32 %v1596, %v1372
    %v1599 = vadd.f32 %v1597, %v1372
    %v1600 = vmax.f32 %v1598, 0.0
    %v1601 = vmax.f32 %v1599, 0.0
    %v1602 = vpack.c.bf16 %v1601, %v1600
    %v1604 = vunpack.c.l.b16 %v1602
    %v1605 = vunpack.c.h.b16 %v1602
    %v1606 = vpack.c.b16 %v1604, %v1604
    %v1607 = vpack.c.b16 %v1605, %v1605
    %1610 = vst [vmem:[%s4 + $0x38] sm:$0xf] %v1606
    %1611 = vst [vmem:[%s4 + $0x78] sm:$0xf] %v1607
    %v1612 = vmul.f32 %v1054, %v1364
    %v1613 = vmul.f32 %v1058, %v1364
    %v1614 = vadd.f32 %v1612, %v1372
    %v1615 = vadd.f32 %v1613, %v1372
    %v1616 = vmax.f32 %v1614, 0.0
    %v1617 = vmax.f32 %v1615, 0.0
    %v1618 = vpack.c.bf16 %v1617, %v1616
    %v1620 = vunpack.c.l.b16 %v1618
    %v1621 = vunpack.c.h.b16 %v1618
    %v1622 = vpack.c.b16 %v1620, %v1620
    %v1623 = vpack.c.b16 %v1621, %v1621
    %1626 = vst [vmem:[%s4 + $0x3c] sm:$0xf] %v1622
    %1627 = vst [vmem:[%s4 + $0x7c] sm:$0xf] %v1623
    // Predicated region
    $region22: #{generator_forward.4} parent=1 // pred_check
      _
    $region23: #{generator_forward.4} parent=1 // pred_check_branch
      %1629 = sbr.rel (0) target = $region25
    $region24: #{generator_forward.4} parent=1 // pred_region
      _
    $region25: #{generator_forward.4} parent=1 // pred_fallthru
      _
    // Predicated region
    $region26: #{generator_forward.4} parent=1 // pred_check
      _
    $region27: #{generator_forward.4} parent=1 // pred_check_branch
      %1631 = sbr.rel (0) target = $region29
    $region28: #{generator_forward.4} parent=1 // pred_region
      _
    $region29: #{generator_forward.4} parent=1 // pred_fallthru
      _
    %1632 = vsyncpa [#allocation3], 1

// kernel: generator_forward.5
$region0: #{generator_forward.5}
  #allocation0 [shape = 'u32[]', space=smem, size = 0x4, offset = 0x4, fixed_abs, tag = 'smem constant byte address 0x4 - core index']
  #allocation1 [shape = 'u32[144,128]{1,0:T(1,128)}', space=vmem, size = 0x12000, scoped, tag = 'internal scratch']
  %s0 = inlined_call_operand.vmem [shape: bf16[112,1008], index: 0, kind: input, shape index: {}]
  %s1 = inlined_call_operand.vmem [shape: bf16[1008,128], index: 1, kind: input, shape index: {}]
  %s2 = inlined_call_operand.vmem [shape: f32[1,128], index: 2, kind: input, shape index: {}]
  %s3 = inlined_call_operand.vmem [shape: f32[1,128], index: 3, kind: input, shape index: {}]
  %s4 = inlined_call_operand.vmem [shape: bf16[112,128], index: 4, kind: output, shape index: {}]
  %s5 = sld [smem:[#allocation0]]
  $region26: #{generator_forward.5} parent=0
    _
  %s7 = ssub.s32 1, %s5
  %s8 = scalar_select 0, %s7, %s5
  // Predicated region
  $region2: #{generator_forward.5} parent=0 // pred_check
    _
  $region3: #{generator_forward.5} parent=0 // pred_check_branch
    %10 = sbr.rel (0) target = $region5
  $region4: #{generator_forward.5} parent=0 // pred_region
    _
  $region5: #{generator_forward.5} parent=0 // pred_fallthru
    _
  // Predicated region
  $region6: #{generator_forward.5} parent=0 // pred_check
    _
  $region7: #{generator_forward.5} parent=0 // pred_check_branch
    %12 = sbr.rel (0) target = $region9
  $region8: #{generator_forward.5} parent=0 // pred_region
    _
  $region9: #{generator_forward.5} parent=0 // pred_fallthru
    _
  // Predicated region
  $region10: #{generator_forward.5} parent=0 // pred_check
    _
  $region11: #{generator_forward.5} parent=0 // pred_check_branch
    %14 = sbr.rel (0) target = $region13
  $region12: #{generator_forward.5} parent=0 // pred_region
    _
  $region13: #{generator_forward.5} parent=0 // pred_fallthru
    _
  // Predicated region
  $region14: #{generator_forward.5} parent=0 // pred_check
    _
  $region15: #{generator_forward.5} parent=0 // pred_check_branch
    %16 = sbr.rel (0) target = $region17
  $region16: #{generator_forward.5} parent=0 // pred_region
    _
  $region17: #{generator_forward.5} parent=0 // pred_fallthru
    _
  %v18 = vld [vmem:[%s0] sm:$0xff]
  %v19 = vld [vmem:[%s0 + $0x8] sm:$0xff]
  %v20 = vld [vmem:[%s0 + $0x10] sm:$0xff]
  %v21 = vld [vmem:[%s0 + $0x18] sm:$0xff]
  %v22 = vld [vmem:[%s0 + $0x20] sm:$0xff]
  %v23 = vld [vmem:[%s0 + $0x28] sm:$0xff]
  %v24 = vld [vmem:[%s0 + $0x30] sm:$0xff]
  %v25 = vld [vmem:[%s0 + $0x38] sm:$0xff]
  %v26 = vld [vmem:[%s0 + $0x40] sm:$0xff]
  %v27 = vld [vmem:[%s0 + $0x48] sm:$0xff]
  %v28 = vld [vmem:[%s0 + $0x50] sm:$0xff]
  %v29 = vld [vmem:[%s0 + $0x58] sm:$0xff]
  %v30 = vld [vmem:[%s0 + $0x60] sm:$0xff]
  %v31 = vld [vmem:[%s0 + $0x68] sm:$0xff]
  %v32 = vld [vmem:[%s0 + $0x70] sm:$0xff]
  %v33 = vld [vmem:[%s0 + $0x78] sm:$0xff]
  %v34 = vld [vmem:[%s0 + $0x80] sm:$0xff]
  %v35 = vld [vmem:[%s0 + $0x88] sm:$0xff]
  %v36 = vld [vmem:[%s0 + $0x90] sm:$0xff]
  %v37 = vld [vmem:[%s0 + $0x98] sm:$0xff]
  %v38 = vld [vmem:[%s0 + $0xa0] sm:$0xff]
  %v39 = vld [vmem:[%s0 + $0xa8] sm:$0xff]
  %v40 = vld [vmem:[%s0 + $0xb0] sm:$0xff]
  %v41 = vld [vmem:[%s0 + $0xb8] sm:$0xff]
  %v42 = vld [vmem:[%s0 + $0xc0] sm:$0xff]
  %v43 = vld [vmem:[%s0 + $0xc8] sm:$0xff]
  %v44 = vld [vmem:[%s0 + $0xd0] sm:$0xff]
  %v45 = vld [vmem:[%s0 + $0xd8] sm:$0xff]
  %v46 = vld [vmem:[%s0 + $0xe0] sm:$0xff]
  %v47 = vld [vmem:[%s0 + $0xe8] sm:$0xff]
  %v48 = vld [vmem:[%s0 + $0xf0] sm:$0xff]
  %v49 = vld [vmem:[%s0 + $0xf8] sm:$0xff]
  %v50 = vld [vmem:[%s0 + $0x100] sm:$0xff]
  %v51 = vld [vmem:[%s0 + $0x108] sm:$0xff]
  %v52 = vld [vmem:[%s0 + $0x110] sm:$0xff]
  %v53 = vld [vmem:[%s0 + $0x118] sm:$0xff]
  %v54 = vld [vmem:[%s0 + $0x120] sm:$0xff]
  %v55 = vld [vmem:[%s0 + $0x128] sm:$0xff]
  %v56 = vld [vmem:[%s0 + $0x130] sm:$0xff]
  %v57 = vld [vmem:[%s0 + $0x138] sm:$0xff]
  %v58 = vld [vmem:[%s0 + $0x140] sm:$0xff]
  %v59 = vld [vmem:[%s0 + $0x148] sm:$0xff]
  %v60 = vld [vmem:[%s0 + $0x150] sm:$0xff]
  %v61 = vld [vmem:[%s0 + $0x158] sm:$0xff]
  %v62 = vld [vmem:[%s0 + $0x160] sm:$0xff]
  %v63 = vld [vmem:[%s0 + $0x168] sm:$0xff]
  %v64 = vld [vmem:[%s0 + $0x170] sm:$0xff]
  %v65 = vld [vmem:[%s0 + $0x178] sm:$0xff]
  %v66 = vld [vmem:[%s0 + $0x180] sm:$0xff]
  %v67 = vld [vmem:[%s0 + $0x188] sm:$0xff]
  %v68 = vld [vmem:[%s0 + $0x190] sm:$0xff]
  %v69 = vld [vmem:[%s0 + $0x198] sm:$0xff]
  %v70 = vld [vmem:[%s0 + $0x1a0] sm:$0xff]
  %v71 = vld [vmem:[%s0 + $0x1a8] sm:$0xff]
  %v72 = vld [vmem:[%s0 + $0x1b0] sm:$0xff]
  %v73 = vld [vmem:[%s0 + $0x1b8] sm:$0xff]
  %v74 = vld [vmem:[%s1] sm:$0xf]
  %v75 = vld [vmem:[%s1 + $0x4] sm:$0xf]
  %v76 = vld [vmem:[%s1 + $0x8] sm:$0xf]
  %v77 = vld [vmem:[%s1 + $0xc] sm:$0xf]
  %v78 = vld [vmem:[%s1 + $0x10] sm:$0xf]
  %v79 = vld [vmem:[%s1 + $0x14] sm:$0xf]
  %v80 = vld [vmem:[%s1 + $0x18] sm:$0xf]
  %v81 = vld [vmem:[%s1 + $0x1c] sm:$0xf]
  %v82 = vld [vmem:[%s1 + $0x20] sm:$0xf]
  %v83 = vld [vmem:[%s1 + $0x24] sm:$0xf]
  %v84 = vld [vmem:[%s1 + $0x28] sm:$0xf]
  %v85 = vld [vmem:[%s1 + $0x2c] sm:$0xf]
  %v86 = vld [vmem:[%s1 + $0x30] sm:$0xf]
  %v87 = vld [vmem:[%s1 + $0x34] sm:$0xf]
  %v88 = vld [vmem:[%s1 + $0x38] sm:$0xf]
  %v89 = vld [vmem:[%s1 + $0x3c] sm:$0xf]
  %v90 = vld [vmem:[%s1 + $0x40] sm:$0xf]
  %v91 = vld [vmem:[%s1 + $0x44] sm:$0xf]
  %v92 = vld [vmem:[%s1 + $0x48] sm:$0xf]
  %v93 = vld [vmem:[%s1 + $0x4c] sm:$0xf]
  %v94 = vld [vmem:[%s1 + $0x50] sm:$0xf]
  %v95 = vld [vmem:[%s1 + $0x54] sm:$0xf]
  %v96 = vld [vmem:[%s1 + $0x58] sm:$0xf]
  %v97 = vld [vmem:[%s1 + $0x5c] sm:$0xf]
  %v98 = vld [vmem:[%s1 + $0x60] sm:$0xf]
  %v99 = vld [vmem:[%s1 + $0x64] sm:$0xf]
  %v100 = vld [vmem:[%s1 + $0x68] sm:$0xf]
  %v101 = vld [vmem:[%s1 + $0x6c] sm:$0xf]
  %v102 = vld [vmem:[%s1 + $0x70] sm:$0xf]
  %v103 = vld [vmem:[%s1 + $0x74] sm:$0xf]
  %v104 = vld [vmem:[%s1 + $0x78] sm:$0xf]
  %v105 = vld [vmem:[%s1 + $0x7c] sm:$0xf]
  %v106 = vld [vmem:[%s1 + $0x80] sm:$0xf]
  %v107 = vld [vmem:[%s1 + $0x84] sm:$0xf]
  %v108 = vld [vmem:[%s1 + $0x88] sm:$0xf]
  %v109 = vld [vmem:[%s1 + $0x8c] sm:$0xf]
  %v110 = vld [vmem:[%s1 + $0x90] sm:$0xf]
  %v111 = vld [vmem:[%s1 + $0x94] sm:$0xf]
  %v112 = vld [vmem:[%s1 + $0x98] sm:$0xf]
  %v113 = vld [vmem:[%s1 + $0x9c] sm:$0xf]
  %v114 = vld [vmem:[%s1 + $0xa0] sm:$0xf]
  %v115 = vld [vmem:[%s1 + $0xa4] sm:$0xf]
  %v116 = vld [vmem:[%s1 + $0xa8] sm:$0xf]
  %v117 = vld [vmem:[%s1 + $0xac] sm:$0xf]
  %v118 = vld [vmem:[%s1 + $0xb0] sm:$0xf]
  %v119 = vld [vmem:[%s1 + $0xb4] sm:$0xf]
  %v120 = vld [vmem:[%s1 + $0xb8] sm:$0xf]
  %v121 = vld [vmem:[%s1 + $0xbc] sm:$0xf]
  %v122 = vld [vmem:[%s1 + $0xc0] sm:$0xf]
  %v123 = vld [vmem:[%s1 + $0xc4] sm:$0xf]
  %v124 = vld [vmem:[%s1 + $0xc8] sm:$0xf]
  %v125 = vld [vmem:[%s1 + $0xcc] sm:$0xf]
  %v126 = vld [vmem:[%s1 + $0xd0] sm:$0xf]
  %v127 = vld [vmem:[%s1 + $0xd4] sm:$0xf]
  %v128 = vld [vmem:[%s1 + $0xd8] sm:$0xf]
  %v129 = vld [vmem:[%s1 + $0xdc] sm:$0xf]
  %v130 = vld [vmem:[%s1 + $0xe0] sm:$0xf]
  %v131 = vld [vmem:[%s1 + $0xe4] sm:$0xf]
  %v132 = vld [vmem:[%s1 + $0xe8] sm:$0xf]
  %v133 = vld [vmem:[%s1 + $0xec] sm:$0xf]
  %v134 = vld [vmem:[%s1 + $0xf0] sm:$0xf]
  %v135 = vld [vmem:[%s1 + $0xf4] sm:$0xf]
  %v136 = vld [vmem:[%s1 + $0xf8] sm:$0xf]
  %v137 = vld [vmem:[%s1 + $0xfc] sm:$0xf]
  %v138 = vld [vmem:[%s1 + $0x100] sm:$0xf]
  %v139 = vld [vmem:[%s1 + $0x104] sm:$0xf]
  %v140 = vld [vmem:[%s1 + $0x108] sm:$0xf]
  %v141 = vld [vmem:[%s1 + $0x10c] sm:$0xf]
  %v142 = vld [vmem:[%s1 + $0x110] sm:$0xf]
  %v143 = vld [vmem:[%s1 + $0x114] sm:$0xf]
  %v144 = vld [vmem:[%s1 + $0x118] sm:$0xf]
  %v145 = vld [vmem:[%s1 + $0x11c] sm:$0xf]
  %v146 = vld [vmem:[%s1 + $0x120] sm:$0xf]
  %v147 = vld [vmem:[%s1 + $0x124] sm:$0xf]
  %v148 = vld [vmem:[%s1 + $0x128] sm:$0xf]
  %v149 = vld [vmem:[%s1 + $0x12c] sm:$0xf]
  %v150 = vld [vmem:[%s1 + $0x130] sm:$0xf]
  %v151 = vld [vmem:[%s1 + $0x134] sm:$0xf]
  %v152 = vld [vmem:[%s1 + $0x138] sm:$0xf]
  %v153 = vld [vmem:[%s1 + $0x13c] sm:$0xf]
  %v154 = vld [vmem:[%s1 + $0x140] sm:$0xf]
  %v155 = vld [vmem:[%s1 + $0x144] sm:$0xf]
  %v156 = vld [vmem:[%s1 + $0x148] sm:$0xf]
  %v157 = vld [vmem:[%s1 + $0x14c] sm:$0xf]
  %v158 = vld [vmem:[%s1 + $0x150] sm:$0xf]
  %v159 = vld [vmem:[%s1 + $0x154] sm:$0xf]
  %v160 = vld [vmem:[%s1 + $0x158] sm:$0xf]
  %v161 = vld [vmem:[%s1 + $0x15c] sm:$0xf]
  %v162 = vld [vmem:[%s1 + $0x160] sm:$0xf]
  %v163 = vld [vmem:[%s1 + $0x164] sm:$0xf]
  %v164 = vld [vmem:[%s1 + $0x168] sm:$0xf]
  %v165 = vld [vmem:[%s1 + $0x16c] sm:$0xf]
  %v166 = vld [vmem:[%s1 + $0x170] sm:$0xf]
  %v167 = vld [vmem:[%s1 + $0x174] sm:$0xf]
  %v168 = vld [vmem:[%s1 + $0x178] sm:$0xf]
  %v169 = vld [vmem:[%s1 + $0x17c] sm:$0xf]
  %v170 = vld [vmem:[%s1 + $0x180] sm:$0xf]
  %v171 = vld [vmem:[%s1 + $0x184] sm:$0xf]
  %v172 = vld [vmem:[%s1 + $0x188] sm:$0xf]
  %v173 = vld [vmem:[%s1 + $0x18c] sm:$0xf]
  %v174 = vld [vmem:[%s1 + $0x190] sm:$0xf]
  %v175 = vld [vmem:[%s1 + $0x194] sm:$0xf]
  %v176 = vld [vmem:[%s1 + $0x198] sm:$0xf]
  %v177 = vld [vmem:[%s1 + $0x19c] sm:$0xf]
  %v178 = vld [vmem:[%s1 + $0x1a0] sm:$0xf]
  %v179 = vld [vmem:[%s1 + $0x1a4] sm:$0xf]
  %v180 = vld [vmem:[%s1 + $0x1a8] sm:$0xf]
  %v181 = vld [vmem:[%s1 + $0x1ac] sm:$0xf]
  %v182 = vld [vmem:[%s1 + $0x1b0] sm:$0xf]
  %v183 = vld [vmem:[%s1 + $0x1b4] sm:$0xf]
  %v184 = vld [vmem:[%s1 + $0x1b8] sm:$0xf]
  %v185 = vld [vmem:[%s1 + $0x1bc] sm:$0xf]
  %v186 = vld [vmem:[%s1 + $0x1c0] sm:$0xf]
  %v187 = vld [vmem:[%s1 + $0x1c4] sm:$0xf]
  %v188 = vld [vmem:[%s1 + $0x1c8] sm:$0xf]
  %v189 = vld [vmem:[%s1 + $0x1cc] sm:$0xf]
  %v190 = vld [vmem:[%s1 + $0x1d0] sm:$0xf]
  %v191 = vld [vmem:[%s1 + $0x1d4] sm:$0xf]
  %v192 = vld [vmem:[%s1 + $0x1d8] sm:$0xf]
  %v193 = vld [vmem:[%s1 + $0x1dc] sm:$0xf]
  %v194 = vld [vmem:[%s1 + $0x1e0] sm:$0xf]
  %v195 = vld [vmem:[%s1 + $0x1e4] sm:$0xf]
  %v196 = vld [vmem:[%s1 + $0x1e8] sm:$0xf]
  %v197 = vld [vmem:[%s1 + $0x1ec] sm:$0xf]
  %v198 = vld [vmem:[%s1 + $0x1f0] sm:$0xf]
  %v199 = vld [vmem:[%s1 + $0x1f4] sm:$0xf]
  %v256 = vunpack.c.l.b16 %v18
  %v257 = vunpack.c.h.b16 %v18
  %v258 = vunpack.c.l.b16 %v19
  %v259 = vunpack.c.h.b16 %v19
  %v260 = vunpack.c.l.b16 %v20
  %v261 = vunpack.c.h.b16 %v20
  %v262 = vunpack.c.l.b16 %v21
  %v263 = vunpack.c.h.b16 %v21
  %v264 = vunpack.c.l.b16 %v22
  %v265 = vunpack.c.h.b16 %v22
  %v266 = vunpack.c.l.b16 %v23
  %v267 = vunpack.c.h.b16 %v23
  %v268 = vunpack.c.l.b16 %v24
  %v269 = vunpack.c.h.b16 %v24
  %v270 = vunpack.c.l.b16 %v25
  %v271 = vunpack.c.h.b16 %v25
  %v272 = vunpack.c.l.b16 %v26
  %v273 = vunpack.c.h.b16 %v26
  %v274 = vunpack.c.l.b16 %v27
  %v275 = vunpack.c.h.b16 %v27
  %v276 = vunpack.c.l.b16 %v28
  %v277 = vunpack.c.h.b16 %v28
  %v278 = vunpack.c.l.b16 %v29
  %v279 = vunpack.c.h.b16 %v29
  %v280 = vunpack.c.l.b16 %v30
  %v281 = vunpack.c.h.b16 %v30
  %v282 = vunpack.c.l.b16 %v31
  %v283 = vunpack.c.h.b16 %v31
  %v284 = vunpack.c.l.b16 %v32
  %v285 = vunpack.c.h.b16 %v32
  %v286 = vunpack.c.l.b16 %v33
  %v287 = vunpack.c.h.b16 %v33
  %v288 = vunpack.c.l.b16 %v34
  %v289 = vunpack.c.h.b16 %v34
  %v290 = vunpack.c.l.b16 %v35
  %v291 = vunpack.c.h.b16 %v35
  %v292 = vunpack.c.l.b16 %v36
  %v293 = vunpack.c.h.b16 %v36
  %v294 = vunpack.c.l.b16 %v37
  %v295 = vunpack.c.h.b16 %v37
  %v296 = vunpack.c.l.b16 %v38
  %v297 = vunpack.c.h.b16 %v38
  %v298 = vunpack.c.l.b16 %v39
  %v299 = vunpack.c.h.b16 %v39
  %v300 = vunpack.c.l.b16 %v40
  %v301 = vunpack.c.h.b16 %v40
  %v302 = vunpack.c.l.b16 %v41
  %v303 = vunpack.c.h.b16 %v41
  %v304 = vunpack.c.l.b16 %v42
  %v305 = vunpack.c.h.b16 %v42
  %v306 = vunpack.c.l.b16 %v43
  %v307 = vunpack.c.h.b16 %v43
  %v308 = vunpack.c.l.b16 %v44
  %v309 = vunpack.c.h.b16 %v44
  %v310 = vunpack.c.l.b16 %v45
  %v311 = vunpack.c.h.b16 %v45
  %v312 = vunpack.c.l.b16 %v46
  %v313 = vunpack.c.h.b16 %v46
  %v314 = vunpack.c.l.b16 %v47
  %v315 = vunpack.c.h.b16 %v47
  %v316 = vunpack.c.l.b16 %v48
  %v317 = vunpack.c.h.b16 %v48
  %v318 = vunpack.c.l.b16 %v49
  %v319 = vunpack.c.h.b16 %v49
  %v320 = vunpack.c.l.b16 %v50
  %v321 = vunpack.c.h.b16 %v50
  %v322 = vunpack.c.l.b16 %v51
  %v323 = vunpack.c.h.b16 %v51
  %v324 = vunpack.c.l.b16 %v52
  %v325 = vunpack.c.h.b16 %v52
  %v326 = vunpack.c.l.b16 %v53
  %v327 = vunpack.c.h.b16 %v53
  %v328 = vunpack.c.l.b16 %v54
  %v329 = vunpack.c.h.b16 %v54
  %v330 = vunpack.c.l.b16 %v55
  %v331 = vunpack.c.h.b16 %v55
  %v332 = vunpack.c.l.b16 %v56
  %v333 = vunpack.c.h.b16 %v56
  %v334 = vunpack.c.l.b16 %v57
  %v335 = vunpack.c.h.b16 %v57
  %v336 = vunpack.c.l.b16 %v58
  %v337 = vunpack.c.h.b16 %v58
  %v338 = vunpack.c.l.b16 %v59
  %v339 = vunpack.c.h.b16 %v59
  %v340 = vunpack.c.l.b16 %v60
  %v341 = vunpack.c.h.b16 %v60
  %v342 = vunpack.c.l.b16 %v61
  %v343 = vunpack.c.h.b16 %v61
  %v344 = vunpack.c.l.b16 %v62
  %v345 = vunpack.c.h.b16 %v62
  %v346 = vunpack.c.l.b16 %v63
  %v347 = vunpack.c.h.b16 %v63
  %v348 = vunpack.c.l.b16 %v64
  %v349 = vunpack.c.h.b16 %v64
  %v350 = vunpack.c.l.b16 %v65
  %v351 = vunpack.c.h.b16 %v65
  %v352 = vunpack.c.l.b16 %v66
  %v353 = vunpack.c.h.b16 %v66
  %v354 = vunpack.c.l.b16 %v67
  %v355 = vunpack.c.h.b16 %v67
  %v356 = vunpack.c.l.b16 %v68
  %v357 = vunpack.c.h.b16 %v68
  %v358 = vunpack.c.l.b16 %v69
  %v359 = vunpack.c.h.b16 %v69
  %v360 = vunpack.c.l.b16 %v70
  %v361 = vunpack.c.h.b16 %v70
  %v362 = vunpack.c.l.b16 %v71
  %v363 = vunpack.c.h.b16 %v71
  %v364 = vunpack.c.l.b16 %v72
  %v365 = vunpack.c.h.b16 %v72
  %v366 = vunpack.c.l.b16 %v73
  %v367 = vunpack.c.h.b16 %v73
  %v368 = vpack.c.b16 %v264, %v256
  %v369 = vpack.c.b16 %v265, %v257
  %v370 = vpack.c.b16 %v266, %v258
  %v371 = vpack.c.b16 %v267, %v259
  %v372 = vpack.c.b16 %v268, %v260
  %v373 = vpack.c.b16 %v269, %v261
  %v374 = vpack.c.b16 %v270, %v262
  %v375 = vpack.c.b16 %v271, %v263
  %v376 = vpack.c.b16 %v280, %v272
  %v377 = vpack.c.b16 %v281, %v273
  %v378 = vpack.c.b16 %v282, %v274
  %v379 = vpack.c.b16 %v283, %v275
  %v380 = vpack.c.b16 %v284, %v276
  %v381 = vpack.c.b16 %v285, %v277
  %v382 = vpack.c.b16 %v286, %v278
  %v383 = vpack.c.b16 %v287, %v279
  %v384 = vpack.c.b16 %v296, %v288
  %v385 = vpack.c.b16 %v297, %v289
  %v386 = vpack.c.b16 %v298, %v290
  %v387 = vpack.c.b16 %v299, %v291
  %v388 = vpack.c.b16 %v300, %v292
  %v389 = vpack.c.b16 %v301, %v293
  %v390 = vpack.c.b16 %v302, %v294
  %v391 = vpack.c.b16 %v303, %v295
  %v392 = vpack.c.b16 %v312, %v304
  %v393 = vpack.c.b16 %v313, %v305
  %v394 = vpack.c.b16 %v314, %v306
  %v395 = vpack.c.b16 %v315, %v307
  %v396 = vpack.c.b16 %v316, %v308
  %v397 = vpack.c.b16 %v317, %v309
  %v398 = vpack.c.b16 %v318, %v310
  %v399 = vpack.c.b16 %v319, %v311
  %v400 = vpack.c.b16 %v328, %v320
  %v401 = vpack.c.b16 %v329, %v321
  %v402 = vpack.c.b16 %v330, %v322
  %v403 = vpack.c.b16 %v331, %v323
  %v404 = vpack.c.b16 %v332, %v324
  %v405 = vpack.c.b16 %v333, %v325
  %v406 = vpack.c.b16 %v334, %v326
  %v407 = vpack.c.b16 %v335, %v327
  %v408 = vpack.c.b16 %v344, %v336
  %v409 = vpack.c.b16 %v345, %v337
  %v410 = vpack.c.b16 %v346, %v338
  %v411 = vpack.c.b16 %v347, %v339
  %v412 = vpack.c.b16 %v348, %v340
  %v413 = vpack.c.b16 %v349, %v341
  %v414 = vpack.c.b16 %v350, %v342
  %v415 = vpack.c.b16 %v351, %v343
  %v416 = vpack.c.b16 %v360, %v352
  %v417 = vpack.c.b16 %v361, %v353
  %v418 = vpack.c.b16 %v362, %v354
  %v419 = vpack.c.b16 %v363, %v355
  %v420 = vpack.c.b16 %v364, %v356
  %v421 = vpack.c.b16 %v365, %v357
  %v422 = vpack.c.b16 %v366, %v358
  %v423 = vpack.c.b16 %v367, %v359
  %v599 = vunpack.c.l.b16 %v74
  %v600 = vunpack.c.l.b16 %v75
  %v601 = vunpack.c.l.b16 %v76
  %v602 = vunpack.c.l.b16 %v77
  %v603 = vunpack.c.l.b16 %v78
  %v604 = vunpack.c.l.b16 %v79
  %v605 = vunpack.c.l.b16 %v80
  %v606 = vunpack.c.l.b16 %v81
  %v607 = vunpack.c.l.b16 %v82
  %v608 = vunpack.c.l.b16 %v83
  %v609 = vunpack.c.l.b16 %v84
  %v610 = vunpack.c.l.b16 %v85
  %v611 = vunpack.c.l.b16 %v86
  %v612 = vunpack.c.l.b16 %v87
  %v613 = vunpack.c.l.b16 %v88
  %v614 = vunpack.c.l.b16 %v89
  %v615 = vunpack.c.l.b16 %v90
  %v616 = vunpack.c.l.b16 %v91
  %v617 = vunpack.c.l.b16 %v92
  %v618 = vunpack.c.l.b16 %v93
  %v619 = vunpack.c.l.b16 %v94
  %v620 = vunpack.c.l.b16 %v95
  %v621 = vunpack.c.l.b16 %v96
  %v622 = vunpack.c.l.b16 %v97
  %v623 = vunpack.c.l.b16 %v98
  %v624 = vunpack.c.l.b16 %v99
  %v625 = vunpack.c.l.b16 %v100
  %v626 = vunpack.c.l.b16 %v101
  %v627 = vunpack.c.l.b16 %v102
  %v628 = vunpack.c.l.b16 %v103
  %v629 = vunpack.c.l.b16 %v104
  %v630 = vunpack.c.l.b16 %v105
  %v631 = vunpack.c.l.b16 %v106
  %v632 = vunpack.c.l.b16 %v107
  %v633 = vunpack.c.l.b16 %v108
  %v634 = vunpack.c.l.b16 %v109
  %v635 = vunpack.c.l.b16 %v110
  %v636 = vunpack.c.l.b16 %v111
  %v637 = vunpack.c.l.b16 %v112
  %v638 = vunpack.c.l.b16 %v113
  %v639 = vunpack.c.l.b16 %v114
  %v640 = vunpack.c.l.b16 %v115
  %v641 = vunpack.c.l.b16 %v116
  %v642 = vunpack.c.l.b16 %v117
  %v643 = vunpack.c.l.b16 %v118
  %v644 = vunpack.c.l.b16 %v119
  %v645 = vunpack.c.l.b16 %v120
  %v646 = vunpack.c.l.b16 %v121
  %v647 = vunpack.c.l.b16 %v122
  %v648 = vunpack.c.l.b16 %v123
  %v649 = vunpack.c.l.b16 %v124
  %v650 = vunpack.c.l.b16 %v125
  %v651 = vunpack.c.l.b16 %v126
  %v652 = vunpack.c.l.b16 %v127
  %v653 = vunpack.c.l.b16 %v128
  %v654 = vunpack.c.l.b16 %v129
  %v655 = vunpack.c.l.b16 %v130
  %v656 = vunpack.c.l.b16 %v131
  %v657 = vunpack.c.l.b16 %v132
  %v658 = vunpack.c.l.b16 %v133
  %v659 = vunpack.c.l.b16 %v134
  %v660 = vunpack.c.l.b16 %v135
  %v661 = vunpack.c.l.b16 %v136
  %v662 = vunpack.c.l.b16 %v137
  %v663 = vunpack.c.l.b16 %v138
  %v664 = vunpack.c.l.b16 %v139
  %v665 = vunpack.c.l.b16 %v140
  %v666 = vunpack.c.l.b16 %v141
  %v667 = vunpack.c.l.b16 %v142
  %v668 = vunpack.c.l.b16 %v143
  %v669 = vunpack.c.l.b16 %v144
  %v670 = vunpack.c.l.b16 %v145
  %v671 = vunpack.c.l.b16 %v146
  %v672 = vunpack.c.l.b16 %v147
  %v673 = vunpack.c.l.b16 %v148
  %v674 = vunpack.c.l.b16 %v149
  %v675 = vunpack.c.l.b16 %v150
  %v676 = vunpack.c.l.b16 %v151
  %v677 = vunpack.c.l.b16 %v152
  %v678 = vunpack.c.l.b16 %v153
  %v679 = vunpack.c.l.b16 %v154
  %v680 = vunpack.c.l.b16 %v155
  %v681 = vunpack.c.l.b16 %v156
  %v682 = vunpack.c.l.b16 %v157
  %v683 = vunpack.c.l.b16 %v158
  %v684 = vunpack.c.l.b16 %v159
  %v685 = vunpack.c.l.b16 %v160
  %v686 = vunpack.c.l.b16 %v161
  %v687 = vunpack.c.l.b16 %v162
  %v688 = vunpack.c.l.b16 %v163
  %v689 = vunpack.c.l.b16 %v164
  %v690 = vunpack.c.l.b16 %v165
  %v691 = vunpack.c.l.b16 %v166
  %v692 = vunpack.c.l.b16 %v167
  %v693 = vunpack.c.l.b16 %v168
  %v694 = vunpack.c.l.b16 %v169
  %v695 = vunpack.c.l.b16 %v170
  %v696 = vunpack.c.l.b16 %v171
  %v697 = vunpack.c.l.b16 %v172
  %v698 = vunpack.c.l.b16 %v173
  %v699 = vunpack.c.l.b16 %v174
  %v700 = vunpack.c.l.b16 %v175
  %v701 = vunpack.c.l.b16 %v176
  %v702 = vunpack.c.l.b16 %v177
  %v703 = vunpack.c.l.b16 %v178
  %v704 = vunpack.c.l.b16 %v179
  %v705 = vunpack.c.l.b16 %v180
  %v706 = vunpack.c.l.b16 %v181
  %v707 = vunpack.c.l.b16 %v182
  %v708 = vunpack.c.l.b16 %v183
  %v709 = vunpack.c.l.b16 %v184
  %v710 = vunpack.c.l.b16 %v185
  %v711 = vunpack.c.l.b16 %v186
  %v712 = vunpack.c.l.b16 %v187
  %v713 = vunpack.c.l.b16 %v188
  %v714 = vunpack.c.l.b16 %v189
  %v715 = vunpack.c.l.b16 %v190
  %v716 = vunpack.c.l.b16 %v191
  %v717 = vunpack.c.l.b16 %v192
  %v718 = vunpack.c.l.b16 %v193
  %v719 = vunpack.c.l.b16 %v194
  %v720 = vunpack.c.l.b16 %v195
  %v721 = vunpack.c.l.b16 %v196
  %v722 = vunpack.c.l.b16 %v197
  %v723 = vunpack.c.l.b16 %v198
  %v724 = vunpack.c.l.b16 %v199
  %v725 = vpack.c.b16 %v600, %v599
  %v726 = vpack.c.b16 %v602, %v601
  %v727 = vpack.c.b16 %v604, %v603
  %v728 = vpack.c.b16 %v606, %v605
  %v729 = vpack.c.b16 %v608, %v607
  %v730 = vpack.c.b16 %v610, %v609
  %v731 = vpack.c.b16 %v612, %v611
  %v732 = vpack.c.b16 %v614, %v613
  %v733 = vpack.c.b16 %v616, %v615
  %v734 = vpack.c.b16 %v618, %v617
  %v735 = vpack.c.b16 %v620, %v619
  %v736 = vpack.c.b16 %v622, %v621
  %v737 = vpack.c.b16 %v624, %v623
  %v738 = vpack.c.b16 %v626, %v625
  %v739 = vpack.c.b16 %v628, %v627
  %v740 = vpack.c.b16 %v630, %v629
  %v741 = vpack.c.b16 %v632, %v631
  %v742 = vpack.c.b16 %v634, %v633
  %v743 = vpack.c.b16 %v636, %v635
  %v744 = vpack.c.b16 %v638, %v637
  %v745 = vpack.c.b16 %v640, %v639
  %v746 = vpack.c.b16 %v642, %v641
  %v747 = vpack.c.b16 %v644, %v643
  %v748 = vpack.c.b16 %v646, %v645
  %v749 = vpack.c.b16 %v648, %v647
  %v750 = vpack.c.b16 %v650, %v649
  %v751 = vpack.c.b16 %v652, %v651
  %v752 = vpack.c.b16 %v654, %v653
  %v753 = vpack.c.b16 %v656, %v655
  %v754 = vpack.c.b16 %v658, %v657
  %v755 = vpack.c.b16 %v660, %v659
  %v756 = vpack.c.b16 %v662, %v661
  %v757 = vpack.c.b16 %v664, %v663
  %v758 = vpack.c.b16 %v666, %v665
  %v759 = vpack.c.b16 %v668, %v667
  %v760 = vpack.c.b16 %v670, %v669
  %v761 = vpack.c.b16 %v672, %v671
  %v762 = vpack.c.b16 %v674, %v673
  %v763 = vpack.c.b16 %v676, %v675
  %v764 = vpack.c.b16 %v678, %v677
  %v765 = vpack.c.b16 %v680, %v679
  %v766 = vpack.c.b16 %v682, %v681
  %v767 = vpack.c.b16 %v684, %v683
  %v768 = vpack.c.b16 %v686, %v685
  %v769 = vpack.c.b16 %v688, %v687
  %v770 = vpack.c.b16 %v690, %v689
  %v771 = vpack.c.b16 %v692, %v691
  %v772 = vpack.c.b16 %v694, %v693
  %v773 = vpack.c.b16 %v696, %v695
  %v774 = vpack.c.b16 %v698, %v697
  %v775 = vpack.c.b16 %v700, %v699
  %v776 = vpack.c.b16 %v702, %v701
  %v777 = vpack.c.b16 %v704, %v703
  %v778 = vpack.c.b16 %v706, %v705
  %v779 = vpack.c.b16 %v708, %v707
  %v780 = vpack.c.b16 %v710, %v709
  %v781 = vpack.c.b16 %v712, %v711
  %v782 = vpack.c.b16 %v714, %v713
  %v783 = vpack.c.b16 %v716, %v715
  %v784 = vpack.c.b16 %v718, %v717
  %v785 = vpack.c.b16 %v720, %v719
  %v786 = vpack.c.b16 %v722, %v721
  %v787 = vpack.c.b16 %v724, %v723
  %vm851 = vcmask 916480
  %v853 = vsel %vm851, %v375, 0
  %v856 = vsel %vm851, %v383, 0
  %v859 = vsel %vm851, %v391, 0
  %v862 = vsel %vm851, %v399, 0
  %v865 = vsel %vm851, %v407, 0
  %v868 = vsel %vm851, %v415, 0
  %v871 = vsel %vm851, %v423, 0
  %873 = vmatprep.subr.bf16.mxu0 0
  %874 = vmatpush1.bf16.msra.mxu0 %v732
  %875 = vmatprep.subr.bf16.mxu0 0
  %876 = vmatpush1.bf16.msra.mxu0 %v731
  %877 = vmatprep.subr.bf16.mxu0 0
  %878 = vmatpush1.bf16.msra.mxu0 %v730
  %879 = vmatprep.subr.bf16.mxu0 0
  %880 = vmatpush1.bf16.msra.mxu0 %v729
  %881 = vmatprep.subr.bf16.mxu0 0
  %882 = vmatpush1.bf16.msra.mxu0 %v728
  %883 = vmatprep.subr.bf16.mxu0 0
  %884 = vmatpush1.bf16.msra.mxu0 %v727
  %885 = vmatprep.subr.bf16.mxu0 0
  %886 = vmatpush1.bf16.msra.mxu0 %v726
  %887 = vmatprep.subr.bf16.mxu0 0
  %888 = vmatpush1.bf16.msra.mxu0 %v725
  %889 = vmatprep.subr.bf16.mxu0 0
  %890 = vmatpush2.bf16.msra.mxu0 %v740
  %891 = vmatprep.subr.bf16.mxu0 0
  %892 = vmatpush2.bf16.msra.mxu0 %v739
  %893 = vmatprep.subr.bf16.mxu0 0
  %894 = vmatpush2.bf16.msra.mxu0 %v738
  %895 = vmatprep.subr.bf16.mxu0 0
  %896 = vmatpush2.bf16.msra.mxu0 %v737
  %897 = vmatprep.subr.bf16.mxu0 0
  %898 = vmatpush2.bf16.msra.mxu0 %v736
  %899 = vmatprep.subr.bf16.mxu0 0
  %900 = vmatpush2.bf16.msra.mxu0 %v735
  %901 = vmatprep.subr.bf16.mxu0 0
  %902 = vmatpush2.bf16.msra.mxu0 %v734
  %903 = vmatprep.subr.bf16.mxu0 0
  %904 = vmatpush2.bf16.msra.mxu0 %v733
  %905 = vmatprep.mubr.bf16.mxu0 %v369
  %906 = vmatmul.mubr.bf16.gmra.mxu0 %v368
  %v907 = vpop.f32.mrf.mxu0
  %v908 = vadd.f32 0.0, %v907
  %v909 = vpop.f32.mrf.mxu0
  %v910 = vpop.f32.mrf.mxu0
  %v911 = vadd.f32 0.0, %v910
  %v912 = vpop.f32.mrf.mxu0
  %913 = vmatprep.mubr.bf16.mxu0 %v377
  %914 = vmatmul.mubr.bf16.gmra.mxu0 %v376
  %v915 = vpop.f32.mrf.mxu0
  %v916 = vadd.f32 0.0, %v915
  %v917 = vpop.f32.mrf.mxu0
  %v918 = vpop.f32.mrf.mxu0
  %v919 = vadd.f32 0.0, %v918
  %v920 = vpop.f32.mrf.mxu0
  %921 = vmatprep.mubr.bf16.mxu0 %v385
  %922 = vmatmul.mubr.bf16.gmra.mxu0 %v384
  %v923 = vpop.f32.mrf.mxu0
  %v924 = vadd.f32 0.0, %v923
  %v925 = vpop.f32.mrf.mxu0
  %v926 = vpop.f32.mrf.mxu0
  %v927 = vadd.f32 0.0, %v926
  %v928 = vpop.f32.mrf.mxu0
  %929 = vmatprep.mubr.bf16.mxu0 %v393
  %930 = vmatmul.mubr.bf16.gmra.mxu0 %v392
  %v931 = vpop.f32.mrf.mxu0
  %v932 = vadd.f32 0.0, %v931
  %v933 = vpop.f32.mrf.mxu0
  %v934 = vpop.f32.mrf.mxu0
  %v935 = vadd.f32 0.0, %v934
  %v936 = vpop.f32.mrf.mxu0
  %937 = vmatprep.mubr.bf16.mxu0 %v401
  %938 = vmatmul.mubr.bf16.gmra.mxu0 %v400
  %v939 = vpop.f32.mrf.mxu0
  %v940 = vadd.f32 0.0, %v939
  %v941 = vpop.f32.mrf.mxu0
  %v942 = vpop.f32.mrf.mxu0
  %v943 = vadd.f32 0.0, %v942
  %v944 = vpop.f32.mrf.mxu0
  %945 = vmatprep.mubr.bf16.mxu0 %v409
  %946 = vmatmul.mubr.bf16.gmra.mxu0 %v408
  %v947 = vpop.f32.mrf.mxu0
  %v948 = vadd.f32 0.0, %v947
  %v949 = vpop.f32.mrf.mxu0
  %v950 = vpop.f32.mrf.mxu0
  %v951 = vadd.f32 0.0, %v950
  %v952 = vpop.f32.mrf.mxu0
  %953 = vmatprep.mubr.bf16.mxu0 %v417
  %954 = vmatmul.mubr.bf16.gmra.mxu0 %v416
  %v955 = vpop.f32.mrf.mxu0
  %v956 = vadd.f32 0.0, %v955
  %v957 = vpop.f32.mrf.mxu0
  %v958 = vpop.f32.mrf.mxu0
  %v959 = vadd.f32 0.0, %v958
  %v960 = vpop.f32.mrf.mxu0
  %961 = vdwg.mxu0
  %962 = vmatprep.subr.bf16.mxu0 0
  %963 = vmatpush1.bf16.msra.mxu0 %v748
  %964 = vmatprep.subr.bf16.mxu0 0
  %965 = vmatpush1.bf16.msra.mxu0 %v747
  %966 = vmatprep.subr.bf16.mxu0 0
  %967 = vmatpush1.bf16.msra.mxu0 %v746
  %968 = vmatprep.subr.bf16.mxu0 0
  %969 = vmatpush1.bf16.msra.mxu0 %v745
  %970 = vmatprep.subr.bf16.mxu0 0
  %971 = vmatpush1.bf16.msra.mxu0 %v744
  %972 = vmatprep.subr.bf16.mxu0 0
  %973 = vmatpush1.bf16.msra.mxu0 %v743
  %974 = vmatprep.subr.bf16.mxu0 0
  %975 = vmatpush1.bf16.msra.mxu0 %v742
  %976 = vmatprep.subr.bf16.mxu0 0
  %977 = vmatpush1.bf16.msra.mxu0 %v741
  %978 = vmatprep.subr.bf16.mxu0 0
  %979 = vmatpush2.bf16.msra.mxu0 %v756
  %980 = vmatprep.subr.bf16.mxu0 0
  %981 = vmatpush2.bf16.msra.mxu0 %v755
  %982 = vmatprep.subr.bf16.mxu0 0
  %983 = vmatpush2.bf16.msra.mxu0 %v754
  %984 = vmatprep.subr.bf16.mxu0 0
  %985 = vmatpush2.bf16.msra.mxu0 %v753
  %986 = vmatprep.subr.bf16.mxu0 0
  %987 = vmatpush2.bf16.msra.mxu0 %v752
  %988 = vmatprep.subr.bf16.mxu0 0
  %989 = vmatpush2.bf16.msra.mxu0 %v751
  %990 = vmatprep.subr.bf16.mxu0 0
  %991 = vmatpush2.bf16.msra.mxu0 %v750
  %992 = vmatprep.subr.bf16.mxu0 0
  %993 = vmatpush2.bf16.msra.mxu0 %v749
  %994 = vmatprep.mubr.bf16.mxu0 %v371
  %995 = vmatmul.mubr.bf16.gmra.mxu0 %v370
  %v996 = vpop.f32.mrf.mxu0
  %v997 = vadd.f32 %v908, %v996
  %v998 = vpop.f32.mrf.mxu0
  %v999 = vpop.f32.mrf.mxu0
  %v1000 = vadd.f32 %v911, %v999
  %v1001 = vpop.f32.mrf.mxu0
  %1002 = vmatprep.mubr.bf16.mxu0 %v379
  %1003 = vmatmul.mubr.bf16.gmra.mxu0 %v378
  %v1004 = vpop.f32.mrf.mxu0
  %v1005 = vadd.f32 %v916, %v1004
  %v1006 = vpop.f32.mrf.mxu0
  %v1007 = vpop.f32.mrf.mxu0
  %v1008 = vadd.f32 %v919, %v1007
  %v1009 = vpop.f32.mrf.mxu0
  %1010 = vmatprep.mubr.bf16.mxu0 %v387
  %1011 = vmatmul.mubr.bf16.gmra.mxu0 %v386
  %v1012 = vpop.f32.mrf.mxu0
  %v1013 = vadd.f32 %v924, %v1012
  %v1014 = vpop.f32.mrf.mxu0
  %v1015 = vpop.f32.mrf.mxu0
  %v1016 = vadd.f32 %v927, %v1015
  %v1017 = vpop.f32.mrf.mxu0
  %1018 = vmatprep.mubr.bf16.mxu0 %v395
  %1019 = vmatmul.mubr.bf16.gmra.mxu0 %v394
  %v1020 = vpop.f32.mrf.mxu0
  %v1021 = vadd.f32 %v932, %v1020
  %v1022 = vpop.f32.mrf.mxu0
  %v1023 = vpop.f32.mrf.mxu0
  %v1024 = vadd.f32 %v935, %v1023
  %v1025 = vpop.f32.mrf.mxu0
  %1026 = vmatprep.mubr.bf16.mxu0 %v403
  %1027 = vmatmul.mubr.bf16.gmra.mxu0 %v402
  %v1028 = vpop.f32.mrf.mxu0
  %v1029 = vadd.f32 %v940, %v1028
  %v1030 = vpop.f32.mrf.mxu0
  %v1031 = vpop.f32.mrf.mxu0
  %v1032 = vadd.f32 %v943, %v1031
  %v1033 = vpop.f32.mrf.mxu0
  %1034 = vmatprep.mubr.bf16.mxu0 %v411
  %1035 = vmatmul.mubr.bf16.gmra.mxu0 %v410
  %v1036 = vpop.f32.mrf.mxu0
  %v1037 = vadd.f32 %v948, %v1036
  %v1038 = vpop.f32.mrf.mxu0
  %v1039 = vpop.f32.mrf.mxu0
  %v1040 = vadd.f32 %v951, %v1039
  %v1041 = vpop.f32.mrf.mxu0
  %1042 = vmatprep.mubr.bf16.mxu0 %v419
  %1043 = vmatmul.mubr.bf16.gmra.mxu0 %v418
  %v1044 = vpop.f32.mrf.mxu0
  %v1045 = vadd.f32 %v956, %v1044
  %v1046 = vpop.f32.mrf.mxu0
  %v1047 = vpop.f32.mrf.mxu0
  %v1048 = vadd.f32 %v959, %v1047
  %v1049 = vpop.f32.mrf.mxu0
  %1050 = vdwg.mxu0
  %1051 = vmatprep.subr.bf16.mxu0 0
  %1052 = vmatpush1.bf16.msra.mxu0 %v764
  %1053 = vmatprep.subr.bf16.mxu0 0
  %1054 = vmatpush1.bf16.msra.mxu0 %v763
  %1055 = vmatprep.subr.bf16.mxu0 0
  %1056 = vmatpush1.bf16.msra.mxu0 %v762
  %1057 = vmatprep.subr.bf16.mxu0 0
  %1058 = vmatpush1.bf16.msra.mxu0 %v761
  %1059 = vmatprep.subr.bf16.mxu0 0
  %1060 = vmatpush1.bf16.msra.mxu0 %v760
  %1061 = vmatprep.subr.bf16.mxu0 0
  %1062 = vmatpush1.bf16.msra.mxu0 %v759
  %1063 = vmatprep.subr.bf16.mxu0 0
  %1064 = vmatpush1.bf16.msra.mxu0 %v758
  %1065 = vmatprep.subr.bf16.mxu0 0
  %1066 = vmatpush1.bf16.msra.mxu0 %v757
  %1067 = vmatprep.subr.bf16.mxu0 0
  %1068 = vmatpush2.bf16.msra.mxu0 %v772
  %1069 = vmatprep.subr.bf16.mxu0 0
  %1070 = vmatpush2.bf16.msra.mxu0 %v771
  %1071 = vmatprep.subr.bf16.mxu0 0
  %1072 = vmatpush2.bf16.msra.mxu0 %v770
  %1073 = vmatprep.subr.bf16.mxu0 0
  %1074 = vmatpush2.bf16.msra.mxu0 %v769
  %1075 = vmatprep.subr.bf16.mxu0 0
  %1076 = vmatpush2.bf16.msra.mxu0 %v768
  %1077 = vmatprep.subr.bf16.mxu0 0
  %1078 = vmatpush2.bf16.msra.mxu0 %v767
  %1079 = vmatprep.subr.bf16.mxu0 0
  %1080 = vmatpush2.bf16.msra.mxu0 %v766
  %1081 = vmatprep.subr.bf16.mxu0 0
  %1082 = vmatpush2.bf16.msra.mxu0 %v765
  %1083 = vmatprep.mubr.bf16.mxu0 %v373
  %1084 = vmatmul.mubr.bf16.gmra.mxu0 %v372
  %v1085 = vpop.f32.mrf.mxu0
  %v1086 = vadd.f32 %v997, %v1085
  %v1087 = vpop.f32.mrf.mxu0
  %v1088 = vpop.f32.mrf.mxu0
  %v1089 = vadd.f32 %v1000, %v1088
  %v1090 = vpop.f32.mrf.mxu0
  %1091 = vmatprep.mubr.bf16.mxu0 %v381
  %1092 = vmatmul.mubr.bf16.gmra.mxu0 %v380
  %v1093 = vpop.f32.mrf.mxu0
  %v1094 = vadd.f32 %v1005, %v1093
  %v1095 = vpop.f32.mrf.mxu0
  %v1096 = vpop.f32.mrf.mxu0
  %v1097 = vadd.f32 %v1008, %v1096
  %v1098 = vpop.f32.mrf.mxu0
  %1099 = vmatprep.mubr.bf16.mxu0 %v389
  %1100 = vmatmul.mubr.bf16.gmra.mxu0 %v388
  %v1101 = vpop.f32.mrf.mxu0
  %v1102 = vadd.f32 %v1013, %v1101
  %v1103 = vpop.f32.mrf.mxu0
  %v1104 = vpop.f32.mrf.mxu0
  %v1105 = vadd.f32 %v1016, %v1104
  %v1106 = vpop.f32.mrf.mxu0
  %1107 = vmatprep.mubr.bf16.mxu0 %v397
  %1108 = vmatmul.mubr.bf16.gmra.mxu0 %v396
  %v1109 = vpop.f32.mrf.mxu0
  %v1110 = vadd.f32 %v1021, %v1109
  %v1111 = vpop.f32.mrf.mxu0
  %v1112 = vpop.f32.mrf.mxu0
  %v1113 = vadd.f32 %v1024, %v1112
  %v1114 = vpop.f32.mrf.mxu0
  %1115 = vmatprep.mubr.bf16.mxu0 %v405
  %1116 = vmatmul.mubr.bf16.gmra.mxu0 %v404
  %v1117 = vpop.f32.mrf.mxu0
  %v1118 = vadd.f32 %v1029, %v1117
  %v1119 = vpop.f32.mrf.mxu0
  %v1120 = vpop.f32.mrf.mxu0
  %v1121 = vadd.f32 %v1032, %v1120
  %v1122 = vpop.f32.mrf.mxu0
  %1123 = vmatprep.mubr.bf16.mxu0 %v413
  %1124 = vmatmul.mubr.bf16.gmra.mxu0 %v412
  %v1125 = vpop.f32.mrf.mxu0
  %v1126 = vadd.f32 %v1037, %v1125
  %v1127 = vpop.f32.mrf.mxu0
  %v1128 = vpop.f32.mrf.mxu0
  %v1129 = vadd.f32 %v1040, %v1128
  %v1130 = vpop.f32.mrf.mxu0
  %1131 = vmatprep.mubr.bf16.mxu0 %v421
  %1132 = vmatmul.mubr.bf16.gmra.mxu0 %v420
  %v1133 = vpop.f32.mrf.mxu0
  %v1134 = vadd.f32 %v1045, %v1133
  %v1135 = vpop.f32.mrf.mxu0
  %v1136 = vpop.f32.mrf.mxu0
  %v1137 = vadd.f32 %v1048, %v1136
  %v1138 = vpop.f32.mrf.mxu0
  %1139 = vdwg.mxu0
  %1140 = vmatprep.subr.bf16.mxu0 0
  %1141 = vmatpush1.bf16.msra.mxu0 %v780
  %1142 = vmatprep.subr.bf16.mxu0 0
  %1143 = vmatpush1.bf16.msra.mxu0 %v779
  %1144 = vmatprep.subr.bf16.mxu0 0
  %1145 = vmatpush1.bf16.msra.mxu0 %v778
  %1146 = vmatprep.subr.bf16.mxu0 0
  %1147 = vmatpush1.bf16.msra.mxu0 %v777
  %1148 = vmatprep.subr.bf16.mxu0 0
  %1149 = vmatpush1.bf16.msra.mxu0 %v776
  %1150 = vmatprep.subr.bf16.mxu0 0
  %1151 = vmatpush1.bf16.msra.mxu0 %v775
  %1152 = vmatprep.subr.bf16.mxu0 0
  %1153 = vmatpush1.bf16.msra.mxu0 %v774
  %1154 = vmatprep.subr.bf16.mxu0 0
  %1155 = vmatpush1.bf16.msra.mxu0 %v773
  %1156 = vmatprep.subr.bf16.mxu0 0
  %1157 = vmatpush2.bf16.msra.mxu0 0
  %1158 = vmatprep.subr.bf16.mxu0 0
  %1159 = vmatpush2.bf16.msra.mxu0 %v787
  %1160 = vmatprep.subr.bf16.mxu0 0
  %1161 = vmatpush2.bf16.msra.mxu0 %v786
  %1162 = vmatprep.subr.bf16.mxu0 0
  %1163 = vmatpush2.bf16.msra.mxu0 %v785
  %1164 = vmatprep.subr.bf16.mxu0 0
  %1165 = vmatpush2.bf16.msra.mxu0 %v784
  %1166 = vmatprep.subr.bf16.mxu0 0
  %1167 = vmatpush2.bf16.msra.mxu0 %v783
  %1168 = vmatprep.subr.bf16.mxu0 0
  %1169 = vmatpush2.bf16.msra.mxu0 %v782
  %1170 = vmatprep.subr.bf16.mxu0 0
  %1171 = vmatpush2.bf16.msra.mxu0 %v781
  %1172 = vmatprep.mubr.bf16.mxu0 %v853
  %1173 = vmatmul.mubr.bf16.gmra.mxu0 %v374
  %v1174 = vpop.f32.mrf.mxu0
  %v1175 = vadd.f32 %v1086, %v1174
  %v1176 = vpop.f32.mrf.mxu0
  %v1177 = vpop.f32.mrf.mxu0
  %v1178 = vadd.f32 %v1089, %v1177
  %v1179 = vpop.f32.mrf.mxu0
  %1180 = vmatprep.mubr.bf16.mxu0 %v856
  %1181 = vmatmul.mubr.bf16.gmra.mxu0 %v382
  %v1182 = vpop.f32.mrf.mxu0
  %v1183 = vadd.f32 %v1094, %v1182
  %v1184 = vpop.f32.mrf.mxu0
  %v1185 = vpop.f32.mrf.mxu0
  %v1186 = vadd.f32 %v1097, %v1185
  %v1187 = vpop.f32.mrf.mxu0
  %1188 = vmatprep.mubr.bf16.mxu0 %v859
  %1189 = vmatmul.mubr.bf16.gmra.mxu0 %v390
  %v1190 = vpop.f32.mrf.mxu0
  %v1191 = vadd.f32 %v1102, %v1190
  %v1192 = vpop.f32.mrf.mxu0
  %v1193 = vpop.f32.mrf.mxu0
  %v1194 = vadd.f32 %v1105, %v1193
  %v1195 = vpop.f32.mrf.mxu0
  %1196 = vmatprep.mubr.bf16.mxu0 %v862
  %1197 = vmatmul.mubr.bf16.gmra.mxu0 %v398
  %v1198 = vpop.f32.mrf.mxu0
  %v1199 = vadd.f32 %v1110, %v1198
  %v1200 = vpop.f32.mrf.mxu0
  %v1201 = vpop.f32.mrf.mxu0
  %v1202 = vadd.f32 %v1113, %v1201
  %v1203 = vpop.f32.mrf.mxu0
  %1204 = vmatprep.mubr.bf16.mxu0 %v865
  %1205 = vmatmul.mubr.bf16.gmra.mxu0 %v406
  %v1206 = vpop.f32.mrf.mxu0
  %v1207 = vadd.f32 %v1118, %v1206
  %v1208 = vpop.f32.mrf.mxu0
  %v1209 = vpop.f32.mrf.mxu0
  %v1210 = vadd.f32 %v1121, %v1209
  %v1211 = vpop.f32.mrf.mxu0
  %1212 = vmatprep.mubr.bf16.mxu0 %v868
  %1213 = vmatmul.mubr.bf16.gmra.mxu0 %v414
  %v1214 = vpop.f32.mrf.mxu0
  %v1215 = vadd.f32 %v1126, %v1214
  %v1216 = vpop.f32.mrf.mxu0
  %v1217 = vpop.f32.mrf.mxu0
  %v1218 = vadd.f32 %v1129, %v1217
  %v1219 = vpop.f32.mrf.mxu0
  %1220 = vmatprep.mubr.bf16.mxu0 %v871
  %1221 = vmatmul.mubr.bf16.gmra.mxu0 %v422
  %v1222 = vpop.f32.mrf.mxu0
  %v1223 = vadd.f32 %v1134, %v1222
  %v1224 = vpop.f32.mrf.mxu0
  %v1225 = vpop.f32.mrf.mxu0
  %v1226 = vadd.f32 %v1137, %v1225
  %v1227 = vpop.f32.mrf.mxu0
  %1228 = vdwg.mxu0
  %v1229 = vadd.f32 %v1175, %v1178
  %v1230 = vadd.f32 %v1229, %v1183
  %v1231 = vadd.f32 %v1230, %v1186
  %v1232 = vadd.f32 %v1231, %v1191
  %v1233 = vadd.f32 %v1232, %v1194
  %v1234 = vadd.f32 %v1233, %v1199
  %v1235 = vadd.f32 %v1234, %v1202
  %v1236 = vadd.f32 %v1235, %v1207
  %v1237 = vadd.f32 %v1236, %v1210
  %v1238 = vadd.f32 %v1237, %v1215
  %v1239 = vadd.f32 %v1238, %v1218
  %v1240 = vadd.f32 %v1239, %v1223
  %v1241 = vadd.f32 %v1240, %v1226
  %v1242 = vrot.slane %v1241, 4
  %v1243 = vadd.f32 %v1241, %v1242
  %v1244 = vrot.slane %v1243, 2
  %v1245 = vadd.f32 %v1243, %v1244
  %v1246 = vrot.slane %v1245, 1
  %v1247 = vadd.f32 %v1245, %v1246
  %v1248 = vadd.f32 %v1247, 0.0
  %v1249 = vmul.f32 %v1175, %v1175
  %v1250 = vmul.f32 %v1178, %v1178
  %v1251 = vmul.f32 %v1183, %v1183
  %v1252 = vmul.f32 %v1186, %v1186
  %v1253 = vmul.f32 %v1191, %v1191
  %v1254 = vmul.f32 %v1194, %v1194
  %v1255 = vmul.f32 %v1199, %v1199
  %v1256 = vmul.f32 %v1202, %v1202
  %v1257 = vmul.f32 %v1207, %v1207
  %v1258 = vmul.f32 %v1210, %v1210
  %v1259 = vmul.f32 %v1215, %v1215
  %v1260 = vmul.f32 %v1218, %v1218
  %v1261 = vmul.f32 %v1223, %v1223
  %v1262 = vmul.f32 %v1226, %v1226
  %v1263 = vadd.f32 %v1249, %v1250
  %v1264 = vadd.f32 %v1263, %v1251
  %v1265 = vadd.f32 %v1264, %v1252
  %v1266 = vadd.f32 %v1265, %v1253
  %v1267 = vadd.f32 %v1266, %v1254
  %v1268 = vadd.f32 %v1267, %v1255
  %v1269 = vadd.f32 %v1268, %v1256
  %v1270 = vadd.f32 %v1269, %v1257
  %v1271 = vadd.f32 %v1270, %v1258
  %v1272 = vadd.f32 %v1271, %v1259
  %v1273 = vadd.f32 %v1272, %v1260
  %v1274 = vadd.f32 %v1273, %v1261
  %v1275 = vadd.f32 %v1274, %v1262
  %v1276 = vrot.slane %v1275, 4
  %v1277 = vadd.f32 %v1275, %v1276
  %v1278 = vrot.slane %v1277, 2
  %v1279 = vadd.f32 %v1277, %v1278
  %v1280 = vrot.slane %v1279, 1
  %v1281 = vadd.f32 %v1279, %v1280
  %v1282 = vadd.f32 %v1281, 0.0
  %v1283 = vrcp.pop 98.0
  %v1284 = vmul.f32 %v1248, %v1283
  %v1285 = vmul.f32 %v1282, %v1283
  %v1286 = vmul.f32 %v1284, %v1284
  %v1287 = vsub.f32 %v1285, %v1286
  %v1288 = vadd.f32 %v1287, 1e-05
  %v1289 = vrsqrt.pop %v1288
  %v1290 = vld [vmem:[%s2] sm:$0x1]
  %v1291 = vmul.f32 %v1290, %v1289
  %v1292 = vld [vmem:[%s3] sm:$0x1]
  %v1293 = vmul.f32 %v1284, %v1291
  %v1294 = vsub.f32 %v1292, %v1293
  %v1296 = vlaneseq
  %v1297 = vshrl.u32 %v1296, 7
  %v1298 = vsub.s32 0, %v1297
  %v1299 = vrot.slane %v1291, %v1298
  %v1301 = vmul.f32 %v1175, %v1299
  %v1302 = vmul.f32 %v1178, %v1299
  %v1303 = vmul.f32 %v1183, %v1299
  %v1304 = vmul.f32 %v1186, %v1299
  %v1305 = vmul.f32 %v1191, %v1299
  %v1306 = vmul.f32 %v1194, %v1299
  %v1307 = vmul.f32 %v1199, %v1299
  %v1308 = vmul.f32 %v1202, %v1299
  %v1309 = vmul.f32 %v1207, %v1299
  %v1310 = vmul.f32 %v1210, %v1299
  %v1311 = vmul.f32 %v1215, %v1299
  %v1312 = vmul.f32 %v1218, %v1299
  %v1313 = vmul.f32 %v1223, %v1299
  %v1314 = vmul.f32 %v1226, %v1299
  %v1316 = vlaneseq
  %v1317 = vshrl.u32 %v1316, 7
  %v1318 = vsub.s32 0, %v1317
  %v1319 = vrot.slane %v1294, %v1318
  %v1321 = vadd.f32 %v1301, %v1319
  %v1322 = vadd.f32 %v1302, %v1319
  %v1323 = vadd.f32 %v1303, %v1319
  %v1324 = vadd.f32 %v1304, %v1319
  %v1325 = vadd.f32 %v1305, %v1319
  %v1326 = vadd.f32 %v1306, %v1319
  %v1327 = vadd.f32 %v1307, %v1319
  %v1328 = vadd.f32 %v1308, %v1319
  %v1329 = vadd.f32 %v1309, %v1319
  %v1330 = vadd.f32 %v1310, %v1319
  %v1331 = vadd.f32 %v1311, %v1319
  %v1332 = vadd.f32 %v1312, %v1319
  %v1333 = vadd.f32 %v1313, %v1319
  %v1334 = vadd.f32 %v1314, %v1319
  %v1335 = vmax.f32 %v1321, 0.0
  %v1336 = vmax.f32 %v1322, 0.0
  %v1337 = vmax.f32 %v1323, 0.0
  %v1338 = vmax.f32 %v1324, 0.0
  %v1339 = vmax.f32 %v1325, 0.0
  %v1340 = vmax.f32 %v1326, 0.0
  %v1341 = vmax.f32 %v1327, 0.0
  %v1342 = vmax.f32 %v1328, 0.0
  %v1343 = vmax.f32 %v1329, 0.0
  %v1344 = vmax.f32 %v1330, 0.0
  %v1345 = vmax.f32 %v1331, 0.0
  %v1346 = vmax.f32 %v1332, 0.0
  %v1347 = vmax.f32 %v1333, 0.0
  %v1348 = vmax.f32 %v1334, 0.0
  %v1349 = vpack.c.bf16 %v1336, %v1335
  %v1350 = vpack.c.bf16 %v1338, %v1337
  %v1351 = vpack.c.bf16 %v1340, %v1339
  %v1352 = vpack.c.bf16 %v1342, %v1341
  %v1353 = vpack.c.bf16 %v1344, %v1343
  %v1354 = vpack.c.bf16 %v1346, %v1345
  %v1355 = vpack.c.bf16 %v1348, %v1347
  %v1363 = vunpack.c.l.b16 %v1349
  %v1364 = vunpack.c.h.b16 %v1349
  %v1365 = vunpack.c.l.b16 %v1350
  %v1366 = vunpack.c.h.b16 %v1350
  %v1367 = vunpack.c.l.b16 %v1351
  %v1368 = vunpack.c.h.b16 %v1351
  %v1369 = vunpack.c.l.b16 %v1352
  %v1370 = vunpack.c.h.b16 %v1352
  %v1371 = vunpack.c.l.b16 %v1353
  %v1372 = vunpack.c.h.b16 %v1353
  %v1373 = vunpack.c.l.b16 %v1354
  %v1374 = vunpack.c.h.b16 %v1354
  %v1375 = vunpack.c.l.b16 %v1355
  %v1376 = vunpack.c.h.b16 %v1355
  %v1377 = vpack.c.b16 %v1363, %v1363
  %v1378 = vpack.c.b16 %v1364, %v1364
  %v1379 = vpack.c.b16 %v1365, %v1365
  %v1380 = vpack.c.b16 %v1366, %v1366
  %v1381 = vpack.c.b16 %v1367, %v1367
  %v1382 = vpack.c.b16 %v1368, %v1368
  %v1383 = vpack.c.b16 %v1369, %v1369
  %v1384 = vpack.c.b16 %v1370, %v1370
  %v1385 = vpack.c.b16 %v1371, %v1371
  %v1386 = vpack.c.b16 %v1372, %v1372
  %v1387 = vpack.c.b16 %v1373, %v1373
  %v1388 = vpack.c.b16 %v1374, %v1374
  %v1389 = vpack.c.b16 %v1375, %v1375
  %v1390 = vpack.c.b16 %v1376, %v1376
  %1405 = vst [vmem:[%s4] sm:$0xf] %v1377
  %1406 = vst [vmem:[%s4 + $0x4] sm:$0xf] %v1378
  %1407 = vst [vmem:[%s4 + $0x8] sm:$0xf] %v1379
  %1408 = vst [vmem:[%s4 + $0xc] sm:$0xf] %v1380
  %1409 = vst [vmem:[%s4 + $0x10] sm:$0xf] %v1381
  %1410 = vst [vmem:[%s4 + $0x14] sm:$0xf] %v1382
  %1411 = vst [vmem:[%s4 + $0x18] sm:$0xf] %v1383
  %1412 = vst [vmem:[%s4 + $0x1c] sm:$0xf] %v1384
  %1413 = vst [vmem:[%s4 + $0x20] sm:$0xf] %v1385
  %1414 = vst [vmem:[%s4 + $0x24] sm:$0xf] %v1386
  %1415 = vst [vmem:[%s4 + $0x28] sm:$0xf] %v1387
  %1416 = vst [vmem:[%s4 + $0x2c] sm:$0xf] %v1388
  %1417 = vst [vmem:[%s4 + $0x30] sm:$0xf] %v1389
  %1418 = vst [vmem:[%s4 + $0x34] sm:$0xf] %v1390
  // Predicated region
  $region18: #{generator_forward.5} parent=0 // pred_check
    _
  $region19: #{generator_forward.5} parent=0 // pred_check_branch
    %1420 = sbr.rel (0) target = $region21
  $region20: #{generator_forward.5} parent=0 // pred_region
    _
  $region21: #{generator_forward.5} parent=0 // pred_fallthru
    _
  // Predicated region
  $region22: #{generator_forward.5} parent=0 // pred_check
    _
  $region23: #{generator_forward.5} parent=0 // pred_check_branch
    %1422 = sbr.rel (0) target = $region25
  $region24: #{generator_forward.5} parent=0 // pred_region
    _
  $region25: #{generator_forward.5} parent=0 // pred_fallthru
    _

// kernel: generator_forward.6
$region0: #{generator_forward.6}
  #allocation0 [shape = 'u32[]', space=smem, size = 0x4, offset = 0x4, fixed_abs, tag = 'smem constant byte address 0x4 - core index']
  #allocation1 [shape = 'u32[144,128]{1,0:T(1,128)}', space=vmem, size = 0x12000, scoped, tag = 'internal scratch']
  %s0 = inlined_call_operand.vmem [shape: bf16[4,112,224], index: 0, kind: input, shape index: {}]
  %s1 = inlined_call_operand.vmem [shape: bf16[4,224,128], index: 1, kind: input, shape index: {}]
  %s2 = inlined_call_operand.vmem [shape: f32[1,128], index: 2, kind: input, shape index: {}]
  %s3 = inlined_call_operand.vmem [shape: f32[1,128], index: 3, kind: input, shape index: {}]
  %s4 = inlined_call_operand.vmem [shape: bf16[4,112,128], index: 4, kind: output, shape index: {}]
  %s5 = sld [smem:[#allocation0]]
  $region26: #{generator_forward.6} parent=0
    _
  %s7 = ssub.s32 1, %s5
  %s8 = scalar_select 0, %s7, %s5
  // Predicated region
  $region2: #{generator_forward.6} parent=0 // pred_check
    _
  $region3: #{generator_forward.6} parent=0 // pred_check_branch
    %10 = sbr.rel (0) target = $region5
  $region4: #{generator_forward.6} parent=0 // pred_region
    _
  $region5: #{generator_forward.6} parent=0 // pred_fallthru
    _
  // Predicated region
  $region6: #{generator_forward.6} parent=0 // pred_check
    _
  $region7: #{generator_forward.6} parent=0 // pred_check_branch
    %12 = sbr.rel (0) target = $region9
  $region8: #{generator_forward.6} parent=0 // pred_region
    _
  $region9: #{generator_forward.6} parent=0 // pred_fallthru
    _
  // Predicated region
  $region10: #{generator_forward.6} parent=0 // pred_check
    _
  $region11: #{generator_forward.6} parent=0 // pred_check_branch
    %14 = sbr.rel (0) target = $region13
  $region12: #{generator_forward.6} parent=0 // pred_region
    _
  $region13: #{generator_forward.6} parent=0 // pred_fallthru
    _
  // Predicated region
  $region14: #{generator_forward.6} parent=0 // pred_check
    _
  $region15: #{generator_forward.6} parent=0 // pred_check_branch
    %16 = sbr.rel (0) target = $region17
  $region16: #{generator_forward.6} parent=0 // pred_region
    _
  $region17: #{generator_forward.6} parent=0 // pred_fallthru
    _
  %v18 = vld [vmem:[%s0] sm:$0xff]
  %v19 = vld [vmem:[%s0 + $0x8] sm:$0xff]
  %v20 = vld [vmem:[%s0 + $0x10] sm:$0xff]
  %v21 = vld [vmem:[%s0 + $0x18] sm:$0xff]
  %v22 = vld [vmem:[%s0 + $0x20] sm:$0xff]
  %v23 = vld [vmem:[%s0 + $0x28] sm:$0xff]
  %v24 = vld [vmem:[%s0 + $0x30] sm:$0xff]
  %v25 = vld [vmem:[%s0 + $0x38] sm:$0xff]
  %v26 = vld [vmem:[%s0 + $0x40] sm:$0xff]
  %v27 = vld [vmem:[%s0 + $0x48] sm:$0xff]
  %v28 = vld [vmem:[%s0 + $0x50] sm:$0xff]
  %v29 = vld [vmem:[%s0 + $0x58] sm:$0xff]
  %v30 = vld [vmem:[%s0 + $0x60] sm:$0xff]
  %v31 = vld [vmem:[%s0 + $0x68] sm:$0xff]
  %v32 = vld [vmem:[%s1] sm:$0xf]
  %v33 = vld [vmem:[%s1 + $0x4] sm:$0xf]
  %v34 = vld [vmem:[%s1 + $0x8] sm:$0xf]
  %v35 = vld [vmem:[%s1 + $0xc] sm:$0xf]
  %v36 = vld [vmem:[%s1 + $0x10] sm:$0xf]
  %v37 = vld [vmem:[%s1 + $0x14] sm:$0xf]
  %v38 = vld [vmem:[%s1 + $0x18] sm:$0xf]
  %v39 = vld [vmem:[%s1 + $0x1c] sm:$0xf]
  %v40 = vld [vmem:[%s1 + $0x20] sm:$0xf]
  %v41 = vld [vmem:[%s1 + $0x24] sm:$0xf]
  %v42 = vld [vmem:[%s1 + $0x28] sm:$0xf]
  %v43 = vld [vmem:[%s1 + $0x2c] sm:$0xf]
  %v44 = vld [vmem:[%s1 + $0x30] sm:$0xf]
  %v45 = vld [vmem:[%s1 + $0x34] sm:$0xf]
  %v46 = vld [vmem:[%s1 + $0x38] sm:$0xf]
  %v47 = vld [vmem:[%s1 + $0x3c] sm:$0xf]
  %v48 = vld [vmem:[%s1 + $0x40] sm:$0xf]
  %v49 = vld [vmem:[%s1 + $0x44] sm:$0xf]
  %v50 = vld [vmem:[%s1 + $0x48] sm:$0xf]
  %v51 = vld [vmem:[%s1 + $0x4c] sm:$0xf]
  %v52 = vld [vmem:[%s1 + $0x50] sm:$0xf]
  %v53 = vld [vmem:[%s1 + $0x54] sm:$0xf]
  %v54 = vld [vmem:[%s1 + $0x58] sm:$0xf]
  %v55 = vld [vmem:[%s1 + $0x5c] sm:$0xf]
  %v56 = vld [vmem:[%s1 + $0x60] sm:$0xf]
  %v57 = vld [vmem:[%s1 + $0x64] sm:$0xf]
  %v58 = vld [vmem:[%s1 + $0x68] sm:$0xf]
  %v59 = vld [vmem:[%s1 + $0x6c] sm:$0xf]
  %v74 = vunpack.c.l.b16 %v18
  %v75 = vunpack.c.h.b16 %v18
  %v76 = vunpack.c.l.b16 %v19
  %v77 = vunpack.c.h.b16 %v19
  %v78 = vunpack.c.l.b16 %v20
  %v79 = vunpack.c.h.b16 %v20
  %v80 = vunpack.c.l.b16 %v21
  %v81 = vunpack.c.h.b16 %v21
  %v82 = vunpack.c.l.b16 %v22
  %v83 = vunpack.c.h.b16 %v22
  %v84 = vunpack.c.l.b16 %v23
  %v85 = vunpack.c.h.b16 %v23
  %v86 = vunpack.c.l.b16 %v24
  %v87 = vunpack.c.h.b16 %v24
  %v88 = vunpack.c.l.b16 %v25
  %v89 = vunpack.c.h.b16 %v25
  %v90 = vunpack.c.l.b16 %v26
  %v91 = vunpack.c.h.b16 %v26
  %v92 = vunpack.c.l.b16 %v27
  %v93 = vunpack.c.h.b16 %v27
  %v94 = vunpack.c.l.b16 %v28
  %v95 = vunpack.c.h.b16 %v28
  %v96 = vunpack.c.l.b16 %v29
  %v97 = vunpack.c.h.b16 %v29
  %v98 = vunpack.c.l.b16 %v30
  %v99 = vunpack.c.h.b16 %v30
  %v100 = vunpack.c.l.b16 %v31
  %v101 = vunpack.c.h.b16 %v31
  %v102 = vpack.c.b16 %v76, %v74
  %v103 = vpack.c.b16 %v77, %v75
  %v104 = vpack.c.b16 %v80, %v78
  %v105 = vpack.c.b16 %v81, %v79
  %v106 = vpack.c.b16 %v84, %v82
  %v107 = vpack.c.b16 %v85, %v83
  %v108 = vpack.c.b16 %v88, %v86
  %v109 = vpack.c.b16 %v89, %v87
  %v110 = vpack.c.b16 %v92, %v90
  %v111 = vpack.c.b16 %v93, %v91
  %v112 = vpack.c.b16 %v96, %v94
  %v113 = vpack.c.b16 %v97, %v95
  %v114 = vpack.c.b16 %v100, %v98
  %v115 = vpack.c.b16 %v101, %v99
  %v151 = vunpack.c.l.b16 %v32
  %v152 = vunpack.c.l.b16 %v33
  %v153 = vunpack.c.l.b16 %v34
  %v154 = vunpack.c.l.b16 %v35
  %v155 = vunpack.c.l.b16 %v36
  %v156 = vunpack.c.l.b16 %v37
  %v157 = vunpack.c.l.b16 %v38
  %v158 = vunpack.c.l.b16 %v39
  %v159 = vunpack.c.l.b16 %v40
  %v160 = vunpack.c.l.b16 %v41
  %v161 = vunpack.c.l.b16 %v42
  %v162 = vunpack.c.l.b16 %v43
  %v163 = vunpack.c.l.b16 %v44
  %v164 = vunpack.c.l.b16 %v45
  %v165 = vunpack.c.l.b16 %v46
  %v166 = vunpack.c.l.b16 %v47
  %v167 = vunpack.c.l.b16 %v48
  %v168 = vunpack.c.l.b16 %v49
  %v169 = vunpack.c.l.b16 %v50
  %v170 = vunpack.c.l.b16 %v51
  %v171 = vunpack.c.l.b16 %v52
  %v172 = vunpack.c.l.b16 %v53
  %v173 = vunpack.c.l.b16 %v54
  %v174 = vunpack.c.l.b16 %v55
  %v175 = vunpack.c.l.b16 %v56
  %v176 = vunpack.c.l.b16 %v57
  %v177 = vunpack.c.l.b16 %v58
  %v178 = vunpack.c.l.b16 %v59
  %v179 = vpack.c.b16 %v152, %v151
  %v180 = vpack.c.b16 %v154, %v153
  %v181 = vpack.c.b16 %v156, %v155
  %v182 = vpack.c.b16 %v158, %v157
  %v183 = vpack.c.b16 %v160, %v159
  %v184 = vpack.c.b16 %v162, %v161
  %v185 = vpack.c.b16 %v164, %v163
  %v186 = vpack.c.b16 %v166, %v165
  %v187 = vpack.c.b16 %v168, %v167
  %v188 = vpack.c.b16 %v170, %v169
  %v189 = vpack.c.b16 %v172, %v171
  %v190 = vpack.c.b16 %v174, %v173
  %v191 = vpack.c.b16 %v176, %v175
  %v192 = vpack.c.b16 %v178, %v177
  %vm207 = vcmask 785408
  %v209 = vsel %vm207, %v103, 0
  %v212 = vsel %vm207, %v105, 0
  %v215 = vsel %vm207, %v107, 0
  %v218 = vsel %vm207, %v109, 0
  %v221 = vsel %vm207, %v111, 0
  %v224 = vsel %vm207, %v113, 0
  %v227 = vsel %vm207, %v115, 0
  %229 = vmatprep.subr.bf16.mxu0 0
  %230 = vmatpush1.bf16.msra.mxu0 %v186
  %231 = vmatprep.subr.bf16.mxu0 0
  %232 = vmatpush1.bf16.msra.mxu0 %v185
  %233 = vmatprep.subr.bf16.mxu0 0
  %234 = vmatpush1.bf16.msra.mxu0 %v184
  %235 = vmatprep.subr.bf16.mxu0 0
  %236 = vmatpush1.bf16.msra.mxu0 %v183
  %237 = vmatprep.subr.bf16.mxu0 0
  %238 = vmatpush1.bf16.msra.mxu0 %v182
  %239 = vmatprep.subr.bf16.mxu0 0
  %240 = vmatpush1.bf16.msra.mxu0 %v181
  %241 = vmatprep.subr.bf16.mxu0 0
  %242 = vmatpush1.bf16.msra.mxu0 %v180
  %243 = vmatprep.subr.bf16.mxu0 0
  %244 = vmatpush1.bf16.msra.mxu0 %v179
  %245 = vmatprep.subr.bf16.mxu0 0
  %246 = vmatpush2.bf16.msra.mxu0 0
  %247 = vmatprep.subr.bf16.mxu0 0
  %248 = vmatpush2.bf16.msra.mxu0 0
  %249 = vmatprep.subr.bf16.mxu0 0
  %250 = vmatpush2.bf16.msra.mxu0 %v192
  %251 = vmatprep.subr.bf16.mxu0 0
  %252 = vmatpush2.bf16.msra.mxu0 %v191
  %253 = vmatprep.subr.bf16.mxu0 0
  %254 = vmatpush2.bf16.msra.mxu0 %v190
  %255 = vmatprep.subr.bf16.mxu0 0
  %256 = vmatpush2.bf16.msra.mxu0 %v189
  %257 = vmatprep.subr.bf16.mxu0 0
  %258 = vmatpush2.bf16.msra.mxu0 %v188
  %259 = vmatprep.subr.bf16.mxu0 0
  %260 = vmatpush2.bf16.msra.mxu0 %v187
  %261 = vmatprep.mubr.bf16.mxu0 %v209
  %262 = vmatmul.mubr.bf16.gmra.mxu0 %v102
  %v263 = vpop.f32.mrf.mxu0
  %v264 = vadd.f32 0.0, %v263
  %v265 = vpop.f32.mrf.mxu0
  %v266 = vpop.f32.mrf.mxu0
  %v267 = vadd.f32 0.0, %v266
  %v268 = vpop.f32.mrf.mxu0
  %269 = vmatprep.mubr.bf16.mxu0 %v212
  %270 = vmatmul.mubr.bf16.gmra.mxu0 %v104
  %v271 = vpop.f32.mrf.mxu0
  %v272 = vadd.f32 0.0, %v271
  %v273 = vpop.f32.mrf.mxu0
  %v274 = vpop.f32.mrf.mxu0
  %v275 = vadd.f32 0.0, %v274
  %v276 = vpop.f32.mrf.mxu0
  %277 = vmatprep.mubr.bf16.mxu0 %v215
  %278 = vmatmul.mubr.bf16.gmra.mxu0 %v106
  %v279 = vpop.f32.mrf.mxu0
  %v280 = vadd.f32 0.0, %v279
  %v281 = vpop.f32.mrf.mxu0
  %v282 = vpop.f32.mrf.mxu0
  %v283 = vadd.f32 0.0, %v282
  %v284 = vpop.f32.mrf.mxu0
  %285 = vmatprep.mubr.bf16.mxu0 %v218
  %286 = vmatmul.mubr.bf16.gmra.mxu0 %v108
  %v287 = vpop.f32.mrf.mxu0
  %v288 = vadd.f32 0.0, %v287
  %v289 = vpop.f32.mrf.mxu0
  %v290 = vpop.f32.mrf.mxu0
  %v291 = vadd.f32 0.0, %v290
  %v292 = vpop.f32.mrf.mxu0
  %293 = vmatprep.mubr.bf16.mxu0 %v221
  %294 = vmatmul.mubr.bf16.gmra.mxu0 %v110
  %v295 = vpop.f32.mrf.mxu0
  %v296 = vadd.f32 0.0, %v295
  %v297 = vpop.f32.mrf.mxu0
  %v298 = vpop.f32.mrf.mxu0
  %v299 = vadd.f32 0.0, %v298
  %v300 = vpop.f32.mrf.mxu0
  %301 = vmatprep.mubr.bf16.mxu0 %v224
  %302 = vmatmul.mubr.bf16.gmra.mxu0 %v112
  %v303 = vpop.f32.mrf.mxu0
  %v304 = vadd.f32 0.0, %v303
  %v305 = vpop.f32.mrf.mxu0
  %v306 = vpop.f32.mrf.mxu0
  %v307 = vadd.f32 0.0, %v306
  %v308 = vpop.f32.mrf.mxu0
  %309 = vmatprep.mubr.bf16.mxu0 %v227
  %310 = vmatmul.mubr.bf16.gmra.mxu0 %v114
  %v311 = vpop.f32.mrf.mxu0
  %v312 = vadd.f32 0.0, %v311
  %v313 = vpop.f32.mrf.mxu0
  %v314 = vpop.f32.mrf.mxu0
  %v315 = vadd.f32 0.0, %v314
  %v316 = vpop.f32.mrf.mxu0
  %317 = vdwg.mxu0
  %v318 = vadd.f32 %v264, %v267
  %v319 = vadd.f32 %v318, %v272
  %v320 = vadd.f32 %v319, %v275
  %v321 = vadd.f32 %v320, %v280
  %v322 = vadd.f32 %v321, %v283
  %v323 = vadd.f32 %v322, %v288
  %v324 = vadd.f32 %v323, %v291
  %v325 = vadd.f32 %v324, %v296
  %v326 = vadd.f32 %v325, %v299
  %v327 = vadd.f32 %v326, %v304
  %v328 = vadd.f32 %v327, %v307
  %v329 = vadd.f32 %v328, %v312
  %v330 = vadd.f32 %v329, %v315
  %v331 = vrot.slane %v330, 4
  %v332 = vadd.f32 %v330, %v331
  %v333 = vrot.slane %v332, 2
  %v334 = vadd.f32 %v332, %v333
  %v335 = vrot.slane %v334, 1
  %v336 = vadd.f32 %v334, %v335
  %v337 = vadd.f32 %v336, 0.0
  %v338 = vmul.f32 %v264, %v264
  %v339 = vmul.f32 %v267, %v267
  %v340 = vmul.f32 %v272, %v272
  %v341 = vmul.f32 %v275, %v275
  %v342 = vmul.f32 %v280, %v280
  %v343 = vmul.f32 %v283, %v283
  %v344 = vmul.f32 %v288, %v288
  %v345 = vmul.f32 %v291, %v291
  %v346 = vmul.f32 %v296, %v296
  %v347 = vmul.f32 %v299, %v299
  %v348 = vmul.f32 %v304, %v304
  %v349 = vmul.f32 %v307, %v307
  %v350 = vmul.f32 %v312, %v312
  %v351 = vmul.f32 %v315, %v315
  %v352 = vadd.f32 %v338, %v339
  %v353 = vadd.f32 %v352, %v340
  %v354 = vadd.f32 %v353, %v341
  %v355 = vadd.f32 %v354, %v342
  %v356 = vadd.f32 %v355, %v343
  %v357 = vadd.f32 %v356, %v344
  %v358 = vadd.f32 %v357, %v345
  %v359 = vadd.f32 %v358, %v346
  %v360 = vadd.f32 %v359, %v347
  %v361 = vadd.f32 %v360, %v348
  %v362 = vadd.f32 %v361, %v349
  %v363 = vadd.f32 %v362, %v350
  %v364 = vadd.f32 %v363, %v351
  %v365 = vrot.slane %v364, 4
  %v366 = vadd.f32 %v364, %v365
  %v367 = vrot.slane %v366, 2
  %v368 = vadd.f32 %v366, %v367
  %v369 = vrot.slane %v368, 1
  %v370 = vadd.f32 %v368, %v369
  %v371 = vadd.f32 %v370, 0.0
  %s372 = scalar_lea.vmem %s0, 112
  %v373 = vld [vmem:[%s372] sm:$0xff]
  %v374 = vld [vmem:[%s372 + $0x8] sm:$0xff]
  %v375 = vld [vmem:[%s372 + $0x10] sm:$0xff]
  %v376 = vld [vmem:[%s372 + $0x18] sm:$0xff]
  %v377 = vld [vmem:[%s372 + $0x20] sm:$0xff]
  %v378 = vld [vmem:[%s372 + $0x28] sm:$0xff]
  %v379 = vld [vmem:[%s372 + $0x30] sm:$0xff]
  %v380 = vld [vmem:[%s372 + $0x38] sm:$0xff]
  %v381 = vld [vmem:[%s372 + $0x40] sm:$0xff]
  %v382 = vld [vmem:[%s372 + $0x48] sm:$0xff]
  %v383 = vld [vmem:[%s372 + $0x50] sm:$0xff]
  %v384 = vld [vmem:[%s372 + $0x58] sm:$0xff]
  %v385 = vld [vmem:[%s372 + $0x60] sm:$0xff]
  %v386 = vld [vmem:[%s372 + $0x68] sm:$0xff]
  %s387 = scalar_lea.vmem %s1, 112
  %v388 = vld [vmem:[%s387] sm:$0xf]
  %v389 = vld [vmem:[%s387 + $0x4] sm:$0xf]
  %v390 = vld [vmem:[%s387 + $0x8] sm:$0xf]
  %v391 = vld [vmem:[%s387 + $0xc] sm:$0xf]
  %v392 = vld [vmem:[%s387 + $0x10] sm:$0xf]
  %v393 = vld [vmem:[%s387 + $0x14] sm:$0xf]
  %v394 = vld [vmem:[%s387 + $0x18] sm:$0xf]
  %v395 = vld [vmem:[%s387 + $0x1c] sm:$0xf]
  %v396 = vld [vmem:[%s387 + $0x20] sm:$0xf]
  %v397 = vld [vmem:[%s387 + $0x24] sm:$0xf]
  %v398 = vld [vmem:[%s387 + $0x28] sm:$0xf]
  %v399 = vld [vmem:[%s387 + $0x2c] sm:$0xf]
  %v400 = vld [vmem:[%s387 + $0x30] sm:$0xf]
  %v401 = vld [vmem:[%s387 + $0x34] sm:$0xf]
  %v402 = vld [vmem:[%s387 + $0x38] sm:$0xf]
  %v403 = vld [vmem:[%s387 + $0x3c] sm:$0xf]
  %v404 = vld [vmem:[%s387 + $0x40] sm:$0xf]
  %v405 = vld [vmem:[%s387 + $0x44] sm:$0xf]
  %v406 = vld [vmem:[%s387 + $0x48] sm:$0xf]
  %v407 = vld [vmem:[%s387 + $0x4c] sm:$0xf]
  %v408 = vld [vmem:[%s387 + $0x50] sm:$0xf]
  %v409 = vld [vmem:[%s387 + $0x54] sm:$0xf]
  %v410 = vld [vmem:[%s387 + $0x58] sm:$0xf]
  %v411 = vld [vmem:[%s387 + $0x5c] sm:$0xf]
  %v412 = vld [vmem:[%s387 + $0x60] sm:$0xf]
  %v413 = vld [vmem:[%s387 + $0x64] sm:$0xf]
  %v414 = vld [vmem:[%s387 + $0x68] sm:$0xf]
  %v415 = vld [vmem:[%s387 + $0x6c] sm:$0xf]
  %v430 = vunpack.c.l.b16 %v373
  %v431 = vunpack.c.h.b16 %v373
  %v432 = vunpack.c.l.b16 %v374
  %v433 = vunpack.c.h.b16 %v374
  %v434 = vunpack.c.l.b16 %v375
  %v435 = vunpack.c.h.b16 %v375
  %v436 = vunpack.c.l.b16 %v376
  %v437 = vunpack.c.h.b16 %v376
  %v438 = vunpack.c.l.b16 %v377
  %v439 = vunpack.c.h.b16 %v377
  %v440 = vunpack.c.l.b16 %v378
  %v441 = vunpack.c.h.b16 %v378
  %v442 = vunpack.c.l.b16 %v379
  %v443 = vunpack.c.h.b16 %v379
  %v444 = vunpack.c.l.b16 %v380
  %v445 = vunpack.c.h.b16 %v380
  %v446 = vunpack.c.l.b16 %v381
  %v447 = vunpack.c.h.b16 %v381
  %v448 = vunpack.c.l.b16 %v382
  %v449 = vunpack.c.h.b16 %v382
  %v450 = vunpack.c.l.b16 %v383
  %v451 = vunpack.c.h.b16 %v383
  %v452 = vunpack.c.l.b16 %v384
  %v453 = vunpack.c.h.b16 %v384
  %v454 = vunpack.c.l.b16 %v385
  %v455 = vunpack.c.h.b16 %v385
  %v456 = vunpack.c.l.b16 %v386
  %v457 = vunpack.c.h.b16 %v386
  %v458 = vpack.c.b16 %v432, %v430
  %v459 = vpack.c.b16 %v433, %v431
  %v460 = vpack.c.b16 %v436, %v434
  %v461 = vpack.c.b16 %v437, %v435
  %v462 = vpack.c.b16 %v440, %v438
  %v463 = vpack.c.b16 %v441, %v439
  %v464 = vpack.c.b16 %v444, %v442
  %v465 = vpack.c.b16 %v445, %v443
  %v466 = vpack.c.b16 %v448, %v446
  %v467 = vpack.c.b16 %v449, %v447
  %v468 = vpack.c.b16 %v452, %v450
  %v469 = vpack.c.b16 %v453, %v451
  %v470 = vpack.c.b16 %v456, %v454
  %v471 = vpack.c.b16 %v457, %v455
  %v507 = vunpack.c.l.b16 %v388
  %v508 = vunpack.c.l.b16 %v389
  %v509 = vunpack.c.l.b16 %v390
  %v510 = vunpack.c.l.b16 %v391
  %v511 = vunpack.c.l.b16 %v392
  %v512 = vunpack.c.l.b16 %v393
  %v513 = vunpack.c.l.b16 %v394
  %v514 = vunpack.c.l.b16 %v395
  %v515 = vunpack.c.l.b16 %v396
  %v516 = vunpack.c.l.b16 %v397
  %v517 = vunpack.c.l.b16 %v398
  %v518 = vunpack.c.l.b16 %v399
  %v519 = vunpack.c.l.b16 %v400
  %v520 = vunpack.c.l.b16 %v401
  %v521 = vunpack.c.l.b16 %v402
  %v522 = vunpack.c.l.b16 %v403
  %v523 = vunpack.c.l.b16 %v404
  %v524 = vunpack.c.l.b16 %v405
  %v525 = vunpack.c.l.b16 %v406
  %v526 = vunpack.c.l.b16 %v407
  %v527 = vunpack.c.l.b16 %v408
  %v528 = vunpack.c.l.b16 %v409
  %v529 = vunpack.c.l.b16 %v410
  %v530 = vunpack.c.l.b16 %v411
  %v531 = vunpack.c.l.b16 %v412
  %v532 = vunpack.c.l.b16 %v413
  %v533 = vunpack.c.l.b16 %v414
  %v534 = vunpack.c.l.b16 %v415
  %v535 = vpack.c.b16 %v508, %v507
  %v536 = vpack.c.b16 %v510, %v509
  %v537 = vpack.c.b16 %v512, %v511
  %v538 = vpack.c.b16 %v514, %v513
  %v539 = vpack.c.b16 %v516, %v515
  %v540 = vpack.c.b16 %v518, %v517
  %v541 = vpack.c.b16 %v520, %v519
  %v542 = vpack.c.b16 %v522, %v521
  %v543 = vpack.c.b16 %v524, %v523
  %v544 = vpack.c.b16 %v526, %v525
  %v545 = vpack.c.b16 %v528, %v527
  %v546 = vpack.c.b16 %v530, %v529
  %v547 = vpack.c.b16 %v532, %v531
  %v548 = vpack.c.b16 %v534, %v533
  %v564 = vsel %vm207, %v459, 0
  %v567 = vsel %vm207, %v461, 0
  %v570 = vsel %vm207, %v463, 0
  %v573 = vsel %vm207, %v465, 0
  %v576 = vsel %vm207, %v467, 0
  %v579 = vsel %vm207, %v469, 0
  %v582 = vsel %vm207, %v471, 0
  %584 = vmatprep.subr.bf16.mxu0 0
  %585 = vmatpush1.bf16.msra.mxu0 %v542
  %586 = vmatprep.subr.bf16.mxu0 0
  %587 = vmatpush1.bf16.msra.mxu0 %v541
  %588 = vmatprep.subr.bf16.mxu0 0
  %589 = vmatpush1.bf16.msra.mxu0 %v540
  %590 = vmatprep.subr.bf16.mxu0 0
  %591 = vmatpush1.bf16.msra.mxu0 %v539
  %592 = vmatprep.subr.bf16.mxu0 0
  %593 = vmatpush1.bf16.msra.mxu0 %v538
  %594 = vmatprep.subr.bf16.mxu0 0
  %595 = vmatpush1.bf16.msra.mxu0 %v537
  %596 = vmatprep.subr.bf16.mxu0 0
  %597 = vmatpush1.bf16.msra.mxu0 %v536
  %598 = vmatprep.subr.bf16.mxu0 0
  %599 = vmatpush1.bf16.msra.mxu0 %v535
  %600 = vmatprep.subr.bf16.mxu0 0
  %601 = vmatpush2.bf16.msra.mxu0 0
  %602 = vmatprep.subr.bf16.mxu0 0
  %603 = vmatpush2.bf16.msra.mxu0 0
  %604 = vmatprep.subr.bf16.mxu0 0
  %605 = vmatpush2.bf16.msra.mxu0 %v548
  %606 = vmatprep.subr.bf16.mxu0 0
  %607 = vmatpush2.bf16.msra.mxu0 %v547
  %608 = vmatprep.subr.bf16.mxu0 0
  %609 = vmatpush2.bf16.msra.mxu0 %v546
  %610 = vmatprep.subr.bf16.mxu0 0
  %611 = vmatpush2.bf16.msra.mxu0 %v545
  %612 = vmatprep.subr.bf16.mxu0 0
  %613 = vmatpush2.bf16.msra.mxu0 %v544
  %614 = vmatprep.subr.bf16.mxu0 0
  %615 = vmatpush2.bf16.msra.mxu0 %v543
  %616 = vmatprep.mubr.bf16.mxu0 %v564
  %617 = vmatmul.mubr.bf16.gmra.mxu0 %v458
  %v618 = vpop.f32.mrf.mxu0
  %v619 = vadd.f32 0.0, %v618
  %v620 = vpop.f32.mrf.mxu0
  %v621 = vpop.f32.mrf.mxu0
  %v622 = vadd.f32 0.0, %v621
  %v623 = vpop.f32.mrf.mxu0
  %624 = vmatprep.mubr.bf16.mxu0 %v567
  %625 = vmatmul.mubr.bf16.gmra.mxu0 %v460
  %v626 = vpop.f32.mrf.mxu0
  %v627 = vadd.f32 0.0, %v626
  %v628 = vpop.f32.mrf.mxu0
  %v629 = vpop.f32.mrf.mxu0
  %v630 = vadd.f32 0.0, %v629
  %v631 = vpop.f32.mrf.mxu0
  %632 = vmatprep.mubr.bf16.mxu0 %v570
  %633 = vmatmul.mubr.bf16.gmra.mxu0 %v462
  %v634 = vpop.f32.mrf.mxu0
  %v635 = vadd.f32 0.0, %v634
  %v636 = vpop.f32.mrf.mxu0
  %v637 = vpop.f32.mrf.mxu0
  %v638 = vadd.f32 0.0, %v637
  %v639 = vpop.f32.mrf.mxu0
  %640 = vmatprep.mubr.bf16.mxu0 %v573
  %641 = vmatmul.mubr.bf16.gmra.mxu0 %v464
  %v642 = vpop.f32.mrf.mxu0
  %v643 = vadd.f32 0.0, %v642
  %v644 = vpop.f32.mrf.mxu0
  %v645 = vpop.f32.mrf.mxu0
  %v646 = vadd.f32 0.0, %v645
  %v647 = vpop.f32.mrf.mxu0
  %648 = vmatprep.mubr.bf16.mxu0 %v576
  %649 = vmatmul.mubr.bf16.gmra.mxu0 %v466
  %v650 = vpop.f32.mrf.mxu0
  %v651 = vadd.f32 0.0, %v650
  %v652 = vpop.f32.mrf.mxu0
  %v653 = vpop.f32.mrf.mxu0
  %v654 = vadd.f32 0.0, %v653
  %v655 = vpop.f32.mrf.mxu0
  %656 = vmatprep.mubr.bf16.mxu0 %v579
  %657 = vmatmul.mubr.bf16.gmra.mxu0 %v468
  %v658 = vpop.f32.mrf.mxu0
  %v659 = vadd.f32 0.0, %v658
  %v660 = vpop.f32.mrf.mxu0
  %v661 = vpop.f32.mrf.mxu0
  %v662 = vadd.f32 0.0, %v661
  %v663 = vpop.f32.mrf.mxu0
  %664 = vmatprep.mubr.bf16.mxu0 %v582
  %665 = vmatmul.mubr.bf16.gmra.mxu0 %v470
  %v666 = vpop.f32.mrf.mxu0
  %v667 = vadd.f32 0.0, %v666
  %v668 = vpop.f32.mrf.mxu0
  %v669 = vpop.f32.mrf.mxu0
  %v670 = vadd.f32 0.0, %v669
  %v671 = vpop.f32.mrf.mxu0
  %672 = vdwg.mxu0
  %v673 = vadd.f32 %v619, %v622
  %v674 = vadd.f32 %v673, %v627
  %v675 = vadd.f32 %v674, %v630
  %v676 = vadd.f32 %v675, %v635
  %v677 = vadd.f32 %v676, %v638
  %v678 = vadd.f32 %v677, %v643
  %v679 = vadd.f32 %v678, %v646
  %v680 = vadd.f32 %v679, %v651
  %v681 = vadd.f32 %v680, %v654
  %v682 = vadd.f32 %v681, %v659
  %v683 = vadd.f32 %v682, %v662
  %v684 = vadd.f32 %v683, %v667
  %v685 = vadd.f32 %v684, %v670
  %v686 = vrot.slane %v685, 4
  %v687 = vadd.f32 %v685, %v686
  %v688 = vrot.slane %v687, 2
  %v689 = vadd.f32 %v687, %v688
  %v690 = vrot.slane %v689, 1
  %v691 = vadd.f32 %v689, %v690
  %v692 = vadd.f32 %v337, %v691
  %v693 = vmul.f32 %v619, %v619
  %v694 = vmul.f32 %v622, %v622
  %v695 = vmul.f32 %v627, %v627
  %v696 = vmul.f32 %v630, %v630
  %v697 = vmul.f32 %v635, %v635
  %v698 = vmul.f32 %v638, %v638
  %v699 = vmul.f32 %v643, %v643
  %v700 = vmul.f32 %v646, %v646
  %v701 = vmul.f32 %v651, %v651
  %v702 = vmul.f32 %v654, %v654
  %v703 = vmul.f32 %v659, %v659
  %v704 = vmul.f32 %v662, %v662
  %v705 = vmul.f32 %v667, %v667
  %v706 = vmul.f32 %v670, %v670
  %v707 = vadd.f32 %v693, %v694
  %v708 = vadd.f32 %v707, %v695
  %v709 = vadd.f32 %v708, %v696
  %v710 = vadd.f32 %v709, %v697
  %v711 = vadd.f32 %v710, %v698
  %v712 = vadd.f32 %v711, %v699
  %v713 = vadd.f32 %v712, %v700
  %v714 = vadd.f32 %v713, %v701
  %v715 = vadd.f32 %v714, %v702
  %v716 = vadd.f32 %v715, %v703
  %v717 = vadd.f32 %v716, %v704
  %v718 = vadd.f32 %v717, %v705
  %v719 = vadd.f32 %v718, %v706
  %v720 = vrot.slane %v719, 4
  %v721 = vadd.f32 %v719, %v720
  %v722 = vrot.slane %v721, 2
  %v723 = vadd.f32 %v721, %v722
  %v724 = vrot.slane %v723, 1
  %v725 = vadd.f32 %v723, %v724
  %v726 = vadd.f32 %v371, %v725
  %s727 = scalar_lea.vmem %s0, 224
  %v728 = vld [vmem:[%s727] sm:$0xff]
  %v729 = vld [vmem:[%s727 + $0x8] sm:$0xff]
  %v730 = vld [vmem:[%s727 + $0x10] sm:$0xff]
  %v731 = vld [vmem:[%s727 + $0x18] sm:$0xff]
  %v732 = vld [vmem:[%s727 + $0x20] sm:$0xff]
  %v733 = vld [vmem:[%s727 + $0x28] sm:$0xff]
  %v734 = vld [vmem:[%s727 + $0x30] sm:$0xff]
  %v735 = vld [vmem:[%s727 + $0x38] sm:$0xff]
  %v736 = vld [vmem:[%s727 + $0x40] sm:$0xff]
  %v737 = vld [vmem:[%s727 + $0x48] sm:$0xff]
  %v738 = vld [vmem:[%s727 + $0x50] sm:$0xff]
  %v739 = vld [vmem:[%s727 + $0x58] sm:$0xff]
  %v740 = vld [vmem:[%s727 + $0x60] sm:$0xff]
  %v741 = vld [vmem:[%s727 + $0x68] sm:$0xff]
  %s742 = scalar_lea.vmem %s1, 224
  %v743 = vld [vmem:[%s742] sm:$0xf]
  %v744 = vld [vmem:[%s742 + $0x4] sm:$0xf]
  %v745 = vld [vmem:[%s742 + $0x8] sm:$0xf]
  %v746 = vld [vmem:[%s742 + $0xc] sm:$0xf]
  %v747 = vld [vmem:[%s742 + $0x10] sm:$0xf]
  %v748 = vld [vmem:[%s742 + $0x14] sm:$0xf]
  %v749 = vld [vmem:[%s742 + $0x18] sm:$0xf]
  %v750 = vld [vmem:[%s742 + $0x1c] sm:$0xf]
  %v751 = vld [vmem:[%s742 + $0x20] sm:$0xf]
  %v752 = vld [vmem:[%s742 + $0x24] sm:$0xf]
  %v753 = vld [vmem:[%s742 + $0x28] sm:$0xf]
  %v754 = vld [vmem:[%s742 + $0x2c] sm:$0xf]
  %v755 = vld [vmem:[%s742 + $0x30] sm:$0xf]
  %v756 = vld [vmem:[%s742 + $0x34] sm:$0xf]
  %v757 = vld [vmem:[%s742 + $0x38] sm:$0xf]
  %v758 = vld [vmem:[%s742 + $0x3c] sm:$0xf]
  %v759 = vld [vmem:[%s742 + $0x40] sm:$0xf]
  %v760 = vld [vmem:[%s742 + $0x44] sm:$0xf]
  %v761 = vld [vmem:[%s742 + $0x48] sm:$0xf]
  %v762 = vld [vmem:[%s742 + $0x4c] sm:$0xf]
  %v763 = vld [vmem:[%s742 + $0x50] sm:$0xf]
  %v764 = vld [vmem:[%s742 + $0x54] sm:$0xf]
  %v765 = vld [vmem:[%s742 + $0x58] sm:$0xf]
  %v766 = vld [vmem:[%s742 + $0x5c] sm:$0xf]
  %v767 = vld [vmem:[%s742 + $0x60] sm:$0xf]
  %v768 = vld [vmem:[%s742 + $0x64] sm:$0xf]
  %v769 = vld [vmem:[%s742 + $0x68] sm:$0xf]
  %v770 = vld [vmem:[%s742 + $0x6c] sm:$0xf]
  %v785 = vunpack.c.l.b16 %v728
  %v786 = vunpack.c.h.b16 %v728
  %v787 = vunpack.c.l.b16 %v729
  %v788 = vunpack.c.h.b16 %v729
  %v789 = vunpack.c.l.b16 %v730
  %v790 = vunpack.c.h.b16 %v730
  %v791 = vunpack.c.l.b16 %v731
  %v792 = vunpack.c.h.b16 %v731
  %v793 = vunpack.c.l.b16 %v732
  %v794 = vunpack.c.h.b16 %v732
  %v795 = vunpack.c.l.b16 %v733
  %v796 = vunpack.c.h.b16 %v733
  %v797 = vunpack.c.l.b16 %v734
  %v798 = vunpack.c.h.b16 %v734
  %v799 = vunpack.c.l.b16 %v735
  %v800 = vunpack.c.h.b16 %v735
  %v801 = vunpack.c.l.b16 %v736
  %v802 = vunpack.c.h.b16 %v736
  %v803 = vunpack.c.l.b16 %v737
  %v804 = vunpack.c.h.b16 %v737
  %v805 = vunpack.c.l.b16 %v738
  %v806 = vunpack.c.h.b16 %v738
  %v807 = vunpack.c.l.b16 %v739
  %v808 = vunpack.c.h.b16 %v739
  %v809 = vunpack.c.l.b16 %v740
  %v810 = vunpack.c.h.b16 %v740
  %v811 = vunpack.c.l.b16 %v741
  %v812 = vunpack.c.h.b16 %v741
  %v813 = vpack.c.b16 %v787, %v785
  %v814 = vpack.c.b16 %v788, %v786
  %v815 = vpack.c.b16 %v791, %v789
  %v816 = vpack.c.b16 %v792, %v790
  %v817 = vpack.c.b16 %v795, %v793
  %v818 = vpack.c.b16 %v796, %v794
  %v819 = vpack.c.b16 %v799, %v797
  %v820 = vpack.c.b16 %v800, %v798
  %v821 = vpack.c.b16 %v803, %v801
  %v822 = vpack.c.b16 %v804, %v802
  %v823 = vpack.c.b16 %v807, %v805
  %v824 = vpack.c.b16 %v808, %v806
  %v825 = vpack.c.b16 %v811, %v809
  %v826 = vpack.c.b16 %v812, %v810
  %v862 = vunpack.c.l.b16 %v743
  %v863 = vunpack.c.l.b16 %v744
  %v864 = vunpack.c.l.b16 %v745
  %v865 = vunpack.c.l.b16 %v746
  %v866 = vunpack.c.l.b16 %v747
  %v867 = vunpack.c.l.b16 %v748
  %v868 = vunpack.c.l.b16 %v749
  %v869 = vunpack.c.l.b16 %v750
  %v870 = vunpack.c.l.b16 %v751
  %v871 = vunpack.c.l.b16 %v752
  %v872 = vunpack.c.l.b16 %v753
  %v873 = vunpack.c.l.b16 %v754
  %v874 = vunpack.c.l.b16 %v755
  %v875 = vunpack.c.l.b16 %v756
  %v876 = vunpack.c.l.b16 %v757
  %v877 = vunpack.c.l.b16 %v758
  %v878 = vunpack.c.l.b16 %v759
  %v879 = vunpack.c.l.b16 %v760
  %v880 = vunpack.c.l.b16 %v761
  %v881 = vunpack.c.l.b16 %v762
  %v882 = vunpack.c.l.b16 %v763
  %v883 = vunpack.c.l.b16 %v764
  %v884 = vunpack.c.l.b16 %v765
  %v885 = vunpack.c.l.b16 %v766
  %v886 = vunpack.c.l.b16 %v767
  %v887 = vunpack.c.l.b16 %v768
  %v888 = vunpack.c.l.b16 %v769
  %v889 = vunpack.c.l.b16 %v770
  %v890 = vpack.c.b16 %v863, %v862
  %v891 = vpack.c.b16 %v865, %v864
  %v892 = vpack.c.b16 %v867, %v866
  %v893 = vpack.c.b16 %v869, %v868
  %v894 = vpack.c.b16 %v871, %v870
  %v895 = vpack.c.b16 %v873, %v872
  %v896 = vpack.c.b16 %v875, %v874
  %v897 = vpack.c.b16 %v877, %v876
  %v898 = vpack.c.b16 %v879, %v878
  %v899 = vpack.c.b16 %v881, %v880
  %v900 = vpack.c.b16 %v883, %v882
  %v901 = vpack.c.b16 %v885, %v884
  %v902 = vpack.c.b16 %v887, %v886
  %v903 = vpack.c.b16 %v889, %v888
  %v919 = vsel %vm207, %v814, 0
  %v922 = vsel %vm207, %v816, 0
  %v925 = vsel %vm207, %v818, 0
  %v928 = vsel %vm207, %v820, 0
  %v931 = vsel %vm207, %v822, 0
  %v934 = vsel %vm207, %v824, 0
  %v937 = vsel %vm207, %v826, 0
  %939 = vmatprep.subr.bf16.mxu0 0
  %940 = vmatpush1.bf16.msra.mxu0 %v897
  %941 = vmatprep.subr.bf16.mxu0 0
  %942 = vmatpush1.bf16.msra.mxu0 %v896
  %943 = vmatprep.subr.bf16.mxu0 0
  %944 = vmatpush1.bf16.msra.mxu0 %v895
  %945 = vmatprep.subr.bf16.mxu0 0
  %946 = vmatpush1.bf16.msra.mxu0 %v894
  %947 = vmatprep.subr.bf16.mxu0 0
  %948 = vmatpush1.bf16.msra.mxu0 %v893
  %949 = vmatprep.subr.bf16.mxu0 0
  %950 = vmatpush1.bf16.msra.mxu0 %v892
  %951 = vmatprep.subr.bf16.mxu0 0
  %952 = vmatpush1.bf16.msra.mxu0 %v891
  %953 = vmatprep.subr.bf16.mxu0 0
  %954 = vmatpush1.bf16.msra.mxu0 %v890
  %955 = vmatprep.subr.bf16.mxu0 0
  %956 = vmatpush2.bf16.msra.mxu0 0
  %957 = vmatprep.subr.bf16.mxu0 0
  %958 = vmatpush2.bf16.msra.mxu0 0
  %959 = vmatprep.subr.bf16.mxu0 0
  %960 = vmatpush2.bf16.msra.mxu0 %v903
  %961 = vmatprep.subr.bf16.mxu0 0
  %962 = vmatpush2.bf16.msra.mxu0 %v902
  %963 = vmatprep.subr.bf16.mxu0 0
  %964 = vmatpush2.bf16.msra.mxu0 %v901
  %965 = vmatprep.subr.bf16.mxu0 0
  %966 = vmatpush2.bf16.msra.mxu0 %v900
  %967 = vmatprep.subr.bf16.mxu0 0
  %968 = vmatpush2.bf16.msra.mxu0 %v899
  %969 = vmatprep.subr.bf16.mxu0 0
  %970 = vmatpush2.bf16.msra.mxu0 %v898
  %971 = vmatprep.mubr.bf16.mxu0 %v919
  %972 = vmatmul.mubr.bf16.gmra.mxu0 %v813
  %v973 = vpop.f32.mrf.mxu0
  %v974 = vadd.f32 0.0, %v973
  %v975 = vpop.f32.mrf.mxu0
  %v976 = vpop.f32.mrf.mxu0
  %v977 = vadd.f32 0.0, %v976
  %v978 = vpop.f32.mrf.mxu0
  %979 = vmatprep.mubr.bf16.mxu0 %v922
  %980 = vmatmul.mubr.bf16.gmra.mxu0 %v815
  %v981 = vpop.f32.mrf.mxu0
  %v982 = vadd.f32 0.0, %v981
  %v983 = vpop.f32.mrf.mxu0
  %v984 = vpop.f32.mrf.mxu0
  %v985 = vadd.f32 0.0, %v984
  %v986 = vpop.f32.mrf.mxu0
  %987 = vmatprep.mubr.bf16.mxu0 %v925
  %988 = vmatmul.mubr.bf16.gmra.mxu0 %v817
  %v989 = vpop.f32.mrf.mxu0
  %v990 = vadd.f32 0.0, %v989
  %v991 = vpop.f32.mrf.mxu0
  %v992 = vpop.f32.mrf.mxu0
  %v993 = vadd.f32 0.0, %v992
  %v994 = vpop.f32.mrf.mxu0
  %995 = vmatprep.mubr.bf16.mxu0 %v928
  %996 = vmatmul.mubr.bf16.gmra.mxu0 %v819
  %v997 = vpop.f32.mrf.mxu0
  %v998 = vadd.f32 0.0, %v997
  %v999 = vpop.f32.mrf.mxu0
  %v1000 = vpop.f32.mrf.mxu0
  %v1001 = vadd.f32 0.0, %v1000
  %v1002 = vpop.f32.mrf.mxu0
  %1003 = vmatprep.mubr.bf16.mxu0 %v931
  %1004 = vmatmul.mubr.bf16.gmra.mxu0 %v821
  %v1005 = vpop.f32.mrf.mxu0
  %v1006 = vadd.f32 0.0, %v1005
  %v1007 = vpop.f32.mrf.mxu0
  %v1008 = vpop.f32.mrf.mxu0
  %v1009 = vadd.f32 0.0, %v1008
  %v1010 = vpop.f32.mrf.mxu0
  %1011 = vmatprep.mubr.bf16.mxu0 %v934
  %1012 = vmatmul.mubr.bf16.gmra.mxu0 %v823
  %v1013 = vpop.f32.mrf.mxu0
  %v1014 = vadd.f32 0.0, %v1013
  %v1015 = vpop.f32.mrf.mxu0
  %v1016 = vpop.f32.mrf.mxu0
  %v1017 = vadd.f32 0.0, %v1016
  %v1018 = vpop.f32.mrf.mxu0
  %1019 = vmatprep.mubr.bf16.mxu0 %v937
  %1020 = vmatmul.mubr.bf16.gmra.mxu0 %v825
  %v1021 = vpop.f32.mrf.mxu0
  %v1022 = vadd.f32 0.0, %v1021
  %v1023 = vpop.f32.mrf.mxu0
  %v1024 = vpop.f32.mrf.mxu0
  %v1025 = vadd.f32 0.0, %v1024
  %v1026 = vpop.f32.mrf.mxu0
  %1027 = vdwg.mxu0
  %v1028 = vadd.f32 %v974, %v977
  %v1029 = vadd.f32 %v1028, %v982
  %v1030 = vadd.f32 %v1029, %v985
  %v1031 = vadd.f32 %v1030, %v990
  %v1032 = vadd.f32 %v1031, %v993
  %v1033 = vadd.f32 %v1032, %v998
  %v1034 = vadd.f32 %v1033, %v1001
  %v1035 = vadd.f32 %v1034, %v1006
  %v1036 = vadd.f32 %v1035, %v1009
  %v1037 = vadd.f32 %v1036, %v1014
  %v1038 = vadd.f32 %v1037, %v1017
  %v1039 = vadd.f32 %v1038, %v1022
  %v1040 = vadd.f32 %v1039, %v1025
  %v1041 = vrot.slane %v1040, 4
  %v1042 = vadd.f32 %v1040, %v1041
  %v1043 = vrot.slane %v1042, 2
  %v1044 = vadd.f32 %v1042, %v1043
  %v1045 = vrot.slane %v1044, 1
  %v1046 = vadd.f32 %v1044, %v1045
  %v1047 = vadd.f32 %v692, %v1046
  %v1048 = vmul.f32 %v974, %v974
  %v1049 = vmul.f32 %v977, %v977
  %v1050 = vmul.f32 %v982, %v982
  %v1051 = vmul.f32 %v985, %v985
  %v1052 = vmul.f32 %v990, %v990
  %v1053 = vmul.f32 %v993, %v993
  %v1054 = vmul.f32 %v998, %v998
  %v1055 = vmul.f32 %v1001, %v1001
  %v1056 = vmul.f32 %v1006, %v1006
  %v1057 = vmul.f32 %v1009, %v1009
  %v1058 = vmul.f32 %v1014, %v1014
  %v1059 = vmul.f32 %v1017, %v1017
  %v1060 = vmul.f32 %v1022, %v1022
  %v1061 = vmul.f32 %v1025, %v1025
  %v1062 = vadd.f32 %v1048, %v1049
  %v1063 = vadd.f32 %v1062, %v1050
  %v1064 = vadd.f32 %v1063, %v1051
  %v1065 = vadd.f32 %v1064, %v1052
  %v1066 = vadd.f32 %v1065, %v1053
  %v1067 = vadd.f32 %v1066, %v1054
  %v1068 = vadd.f32 %v1067, %v1055
  %v1069 = vadd.f32 %v1068, %v1056
  %v1070 = vadd.f32 %v1069, %v1057
  %v1071 = vadd.f32 %v1070, %v1058
  %v1072 = vadd.f32 %v1071, %v1059
  %v1073 = vadd.f32 %v1072, %v1060
  %v1074 = vadd.f32 %v1073, %v1061
  %v1075 = vrot.slane %v1074, 4
  %v1076 = vadd.f32 %v1074, %v1075
  %v1077 = vrot.slane %v1076, 2
  %v1078 = vadd.f32 %v1076, %v1077
  %v1079 = vrot.slane %v1078, 1
  %v1080 = vadd.f32 %v1078, %v1079
  %v1081 = vadd.f32 %v726, %v1080
  %s1082 = scalar_lea.vmem %s0, 336
  %v1083 = vld [vmem:[%s1082] sm:$0xff]
  %v1084 = vld [vmem:[%s1082 + $0x8] sm:$0xff]
  %v1085 = vld [vmem:[%s1082 + $0x10] sm:$0xff]
  %v1086 = vld [vmem:[%s1082 + $0x18] sm:$0xff]
  %v1087 = vld [vmem:[%s1082 + $0x20] sm:$0xff]
  %v1088 = vld [vmem:[%s1082 + $0x28] sm:$0xff]
  %v1089 = vld [vmem:[%s1082 + $0x30] sm:$0xff]
  %v1090 = vld [vmem:[%s1082 + $0x38] sm:$0xff]
  %v1091 = vld [vmem:[%s1082 + $0x40] sm:$0xff]
  %v1092 = vld [vmem:[%s1082 + $0x48] sm:$0xff]
  %v1093 = vld [vmem:[%s1082 + $0x50] sm:$0xff]
  %v1094 = vld [vmem:[%s1082 + $0x58] sm:$0xff]
  %v1095 = vld [vmem:[%s1082 + $0x60] sm:$0xff]
  %v1096 = vld [vmem:[%s1082 + $0x68] sm:$0xff]
  %s1097 = scalar_lea.vmem %s1, 336
  %v1098 = vld [vmem:[%s1097] sm:$0xf]
  %v1099 = vld [vmem:[%s1097 + $0x4] sm:$0xf]
  %v1100 = vld [vmem:[%s1097 + $0x8] sm:$0xf]
  %v1101 = vld [vmem:[%s1097 + $0xc] sm:$0xf]
  %v1102 = vld [vmem:[%s1097 + $0x10] sm:$0xf]
  %v1103 = vld [vmem:[%s1097 + $0x14] sm:$0xf]
  %v1104 = vld [vmem:[%s1097 + $0x18] sm:$0xf]
  %v1105 = vld [vmem:[%s1097 + $0x1c] sm:$0xf]
  %v1106 = vld [vmem:[%s1097 + $0x20] sm:$0xf]
  %v1107 = vld [vmem:[%s1097 + $0x24] sm:$0xf]
  %v1108 = vld [vmem:[%s1097 + $0x28] sm:$0xf]
  %v1109 = vld [vmem:[%s1097 + $0x2c] sm:$0xf]
  %v1110 = vld [vmem:[%s1097 + $0x30] sm:$0xf]
  %v1111 = vld [vmem:[%s1097 + $0x34] sm:$0xf]
  %v1112 = vld [vmem:[%s1097 + $0x38] sm:$0xf]
  %v1113 = vld [vmem:[%s1097 + $0x3c] sm:$0xf]
  %v1114 = vld [vmem:[%s1097 + $0x40] sm:$0xf]
  %v1115 = vld [vmem:[%s1097 + $0x44] sm:$0xf]
  %v1116 = vld [vmem:[%s1097 + $0x48] sm:$0xf]
  %v1117 = vld [vmem:[%s1097 + $0x4c] sm:$0xf]
  %v1118 = vld [vmem:[%s1097 + $0x50] sm:$0xf]
  %v1119 = vld [vmem:[%s1097 + $0x54] sm:$0xf]
  %v1120 = vld [vmem:[%s1097 + $0x58] sm:$0xf]
  %v1121 = vld [vmem:[%s1097 + $0x5c] sm:$0xf]
  %v1122 = vld [vmem:[%s1097 + $0x60] sm:$0xf]
  %v1123 = vld [vmem:[%s1097 + $0x64] sm:$0xf]
  %v1124 = vld [vmem:[%s1097 + $0x68] sm:$0xf]
  %v1125 = vld [vmem:[%s1097 + $0x6c] sm:$0xf]
  %v1140 = vunpack.c.l.b16 %v1083
  %v1141 = vunpack.c.h.b16 %v1083
  %v1142 = vunpack.c.l.b16 %v1084
  %v1143 = vunpack.c.h.b16 %v1084
  %v1144 = vunpack.c.l.b16 %v1085
  %v1145 = vunpack.c.h.b16 %v1085
  %v1146 = vunpack.c.l.b16 %v1086
  %v1147 = vunpack.c.h.b16 %v1086
  %v1148 = vunpack.c.l.b16 %v1087
  %v1149 = vunpack.c.h.b16 %v1087
  %v1150 = vunpack.c.l.b16 %v1088
  %v1151 = vunpack.c.h.b16 %v1088
  %v1152 = vunpack.c.l.b16 %v1089
  %v1153 = vunpack.c.h.b16 %v1089
  %v1154 = vunpack.c.l.b16 %v1090
  %v1155 = vunpack.c.h.b16 %v1090
  %v1156 = vunpack.c.l.b16 %v1091
  %v1157 = vunpack.c.h.b16 %v1091
  %v1158 = vunpack.c.l.b16 %v1092
  %v1159 = vunpack.c.h.b16 %v1092
  %v1160 = vunpack.c.l.b16 %v1093
  %v1161 = vunpack.c.h.b16 %v1093
  %v1162 = vunpack.c.l.b16 %v1094
  %v1163 = vunpack.c.h.b16 %v1094
  %v1164 = vunpack.c.l.b16 %v1095
  %v1165 = vunpack.c.h.b16 %v1095
  %v1166 = vunpack.c.l.b16 %v1096
  %v1167 = vunpack.c.h.b16 %v1096
  %v1168 = vpack.c.b16 %v1142, %v1140
  %v1169 = vpack.c.b16 %v1143, %v1141
  %v1170 = vpack.c.b16 %v1146, %v1144
  %v1171 = vpack.c.b16 %v1147, %v1145
  %v1172 = vpack.c.b16 %v1150, %v1148
  %v1173 = vpack.c.b16 %v1151, %v1149
  %v1174 = vpack.c.b16 %v1154, %v1152
  %v1175 = vpack.c.b16 %v1155, %v1153
  %v1176 = vpack.c.b16 %v1158, %v1156
  %v1177 = vpack.c.b16 %v1159, %v1157
  %v1178 = vpack.c.b16 %v1162, %v1160
  %v1179 = vpack.c.b16 %v1163, %v1161
  %v1180 = vpack.c.b16 %v1166, %v1164
  %v1181 = vpack.c.b16 %v1167, %v1165
  %v1217 = vunpack.c.l.b16 %v1098
  %v1218 = vunpack.c.l.b16 %v1099
  %v1219 = vunpack.c.l.b16 %v1100
  %v1220 = vunpack.c.l.b16 %v1101
  %v1221 = vunpack.c.l.b16 %v1102
  %v1222 = vunpack.c.l.b16 %v1103
  %v1223 = vunpack.c.l.b16 %v1104
  %v1224 = vunpack.c.l.b16 %v1105
  %v1225 = vunpack.c.l.b16 %v1106
  %v1226 = vunpack.c.l.b16 %v1107
  %v1227 = vunpack.c.l.b16 %v1108
  %v1228 = vunpack.c.l.b16 %v1109
  %v1229 = vunpack.c.l.b16 %v1110
  %v1230 = vunpack.c.l.b16 %v1111
  %v1231 = vunpack.c.l.b16 %v1112
  %v1232 = vunpack.c.l.b16 %v1113
  %v1233 = vunpack.c.l.b16 %v1114
  %v1234 = vunpack.c.l.b16 %v1115
  %v1235 = vunpack.c.l.b16 %v1116
  %v1236 = vunpack.c.l.b16 %v1117
  %v1237 = vunpack.c.l.b16 %v1118
  %v1238 = vunpack.c.l.b16 %v1119
  %v1239 = vunpack.c.l.b16 %v1120
  %v1240 = vunpack.c.l.b16 %v1121
  %v1241 = vunpack.c.l.b16 %v1122
  %v1242 = vunpack.c.l.b16 %v1123
  %v1243 = vunpack.c.l.b16 %v1124
  %v1244 = vunpack.c.l.b16 %v1125
  %v1245 = vpack.c.b16 %v1218, %v1217
  %v1246 = vpack.c.b16 %v1220, %v1219
  %v1247 = vpack.c.b16 %v1222, %v1221
  %v1248 = vpack.c.b16 %v1224, %v1223
  %v1249 = vpack.c.b16 %v1226, %v1225
  %v1250 = vpack.c.b16 %v1228, %v1227
  %v1251 = vpack.c.b16 %v1230, %v1229
  %v1252 = vpack.c.b16 %v1232, %v1231
  %v1253 = vpack.c.b16 %v1234, %v1233
  %v1254 = vpack.c.b16 %v1236, %v1235
  %v1255 = vpack.c.b16 %v1238, %v1237
  %v1256 = vpack.c.b16 %v1240, %v1239
  %v1257 = vpack.c.b16 %v1242, %v1241
  %v1258 = vpack.c.b16 %v1244, %v1243
  %v1274 = vsel %vm207, %v1169, 0
  %v1277 = vsel %vm207, %v1171, 0
  %v1280 = vsel %vm207, %v1173, 0
  %v1283 = vsel %vm207, %v1175, 0
  %v1286 = vsel %vm207, %v1177, 0
  %v1289 = vsel %vm207, %v1179, 0
  %v1292 = vsel %vm207, %v1181, 0
  %1294 = vmatprep.subr.bf16.mxu0 0
  %1295 = vmatpush1.bf16.msra.mxu0 %v1252
  %1296 = vmatprep.subr.bf16.mxu0 0
  %1297 = vmatpush1.bf16.msra.mxu0 %v1251
  %1298 = vmatprep.subr.bf16.mxu0 0
  %1299 = vmatpush1.bf16.msra.mxu0 %v1250
  %1300 = vmatprep.subr.bf16.mxu0 0
  %1301 = vmatpush1.bf16.msra.mxu0 %v1249
  %1302 = vmatprep.subr.bf16.mxu0 0
  %1303 = vmatpush1.bf16.msra.mxu0 %v1248
  %1304 = vmatprep.subr.bf16.mxu0 0
  %1305 = vmatpush1.bf16.msra.mxu0 %v1247
  %1306 = vmatprep.subr.bf16.mxu0 0
  %1307 = vmatpush1.bf16.msra.mxu0 %v1246
  %1308 = vmatprep.subr.bf16.mxu0 0
  %1309 = vmatpush1.bf16.msra.mxu0 %v1245
  %1310 = vmatprep.subr.bf16.mxu0 0
  %1311 = vmatpush2.bf16.msra.mxu0 0
  %1312 = vmatprep.subr.bf16.mxu0 0
  %1313 = vmatpush2.bf16.msra.mxu0 0
  %1314 = vmatprep.subr.bf16.mxu0 0
  %1315 = vmatpush2.bf16.msra.mxu0 %v1258
  %1316 = vmatprep.subr.bf16.mxu0 0
  %1317 = vmatpush2.bf16.msra.mxu0 %v1257
  %1318 = vmatprep.subr.bf16.mxu0 0
  %1319 = vmatpush2.bf16.msra.mxu0 %v1256
  %1320 = vmatprep.subr.bf16.mxu0 0
  %1321 = vmatpush2.bf16.msra.mxu0 %v1255
  %1322 = vmatprep.subr.bf16.mxu0 0
  %1323 = vmatpush2.bf16.msra.mxu0 %v1254
  %1324 = vmatprep.subr.bf16.mxu0 0
  %1325 = vmatpush2.bf16.msra.mxu0 %v1253
  %1326 = vmatprep.mubr.bf16.mxu0 %v1274
  %1327 = vmatmul.mubr.bf16.gmra.mxu0 %v1168
  %v1328 = vpop.f32.mrf.mxu0
  %v1329 = vadd.f32 0.0, %v1328
  %v1330 = vpop.f32.mrf.mxu0
  %v1331 = vpop.f32.mrf.mxu0
  %v1332 = vadd.f32 0.0, %v1331
  %v1333 = vpop.f32.mrf.mxu0
  %1334 = vmatprep.mubr.bf16.mxu0 %v1277
  %1335 = vmatmul.mubr.bf16.gmra.mxu0 %v1170
  %v1336 = vpop.f32.mrf.mxu0
  %v1337 = vadd.f32 0.0, %v1336
  %v1338 = vpop.f32.mrf.mxu0
  %v1339 = vpop.f32.mrf.mxu0
  %v1340 = vadd.f32 0.0, %v1339
  %v1341 = vpop.f32.mrf.mxu0
  %1342 = vmatprep.mubr.bf16.mxu0 %v1280
  %1343 = vmatmul.mubr.bf16.gmra.mxu0 %v1172
  %v1344 = vpop.f32.mrf.mxu0
  %v1345 = vadd.f32 0.0, %v1344
  %v1346 = vpop.f32.mrf.mxu0
  %v1347 = vpop.f32.mrf.mxu0
  %v1348 = vadd.f32 0.0, %v1347
  %v1349 = vpop.f32.mrf.mxu0
  %1350 = vmatprep.mubr.bf16.mxu0 %v1283
  %1351 = vmatmul.mubr.bf16.gmra.mxu0 %v1174
  %v1352 = vpop.f32.mrf.mxu0
  %v1353 = vadd.f32 0.0, %v1352
  %v1354 = vpop.f32.mrf.mxu0
  %v1355 = vpop.f32.mrf.mxu0
  %v1356 = vadd.f32 0.0, %v1355
  %v1357 = vpop.f32.mrf.mxu0
  %1358 = vmatprep.mubr.bf16.mxu0 %v1286
  %1359 = vmatmul.mubr.bf16.gmra.mxu0 %v1176
  %v1360 = vpop.f32.mrf.mxu0
  %v1361 = vadd.f32 0.0, %v1360
  %v1362 = vpop.f32.mrf.mxu0
  %v1363 = vpop.f32.mrf.mxu0
  %v1364 = vadd.f32 0.0, %v1363
  %v1365 = vpop.f32.mrf.mxu0
  %1366 = vmatprep.mubr.bf16.mxu0 %v1289
  %1367 = vmatmul.mubr.bf16.gmra.mxu0 %v1178
  %v1368 = vpop.f32.mrf.mxu0
  %v1369 = vadd.f32 0.0, %v1368
  %v1370 = vpop.f32.mrf.mxu0
  %v1371 = vpop.f32.mrf.mxu0
  %v1372 = vadd.f32 0.0, %v1371
  %v1373 = vpop.f32.mrf.mxu0
  %1374 = vmatprep.mubr.bf16.mxu0 %v1292
  %1375 = vmatmul.mubr.bf16.gmra.mxu0 %v1180
  %v1376 = vpop.f32.mrf.mxu0
  %v1377 = vadd.f32 0.0, %v1376
  %v1378 = vpop.f32.mrf.mxu0
  %v1379 = vpop.f32.mrf.mxu0
  %v1380 = vadd.f32 0.0, %v1379
  %v1381 = vpop.f32.mrf.mxu0
  %1382 = vdwg.mxu0
  %v1383 = vadd.f32 %v1329, %v1332
  %v1384 = vadd.f32 %v1383, %v1337
  %v1385 = vadd.f32 %v1384, %v1340
  %v1386 = vadd.f32 %v1385, %v1345
  %v1387 = vadd.f32 %v1386, %v1348
  %v1388 = vadd.f32 %v1387, %v1353
  %v1389 = vadd.f32 %v1388, %v1356
  %v1390 = vadd.f32 %v1389, %v1361
  %v1391 = vadd.f32 %v1390, %v1364
  %v1392 = vadd.f32 %v1391, %v1369
  %v1393 = vadd.f32 %v1392, %v1372
  %v1394 = vadd.f32 %v1393, %v1377
  %v1395 = vadd.f32 %v1394, %v1380
  %v1396 = vrot.slane %v1395, 4
  %v1397 = vadd.f32 %v1395, %v1396
  %v1398 = vrot.slane %v1397, 2
  %v1399 = vadd.f32 %v1397, %v1398
  %v1400 = vrot.slane %v1399, 1
  %v1401 = vadd.f32 %v1399, %v1400
  %v1402 = vadd.f32 %v1047, %v1401
  %v1403 = vmul.f32 %v1329, %v1329
  %v1404 = vmul.f32 %v1332, %v1332
  %v1405 = vmul.f32 %v1337, %v1337
  %v1406 = vmul.f32 %v1340, %v1340
  %v1407 = vmul.f32 %v1345, %v1345
  %v1408 = vmul.f32 %v1348, %v1348
  %v1409 = vmul.f32 %v1353, %v1353
  %v1410 = vmul.f32 %v1356, %v1356
  %v1411 = vmul.f32 %v1361, %v1361
  %v1412 = vmul.f32 %v1364, %v1364
  %v1413 = vmul.f32 %v1369, %v1369
  %v1414 = vmul.f32 %v1372, %v1372
  %v1415 = vmul.f32 %v1377, %v1377
  %v1416 = vmul.f32 %v1380, %v1380
  %v1417 = vadd.f32 %v1403, %v1404
  %v1418 = vadd.f32 %v1417, %v1405
  %v1419 = vadd.f32 %v1418, %v1406
  %v1420 = vadd.f32 %v1419, %v1407
  %v1421 = vadd.f32 %v1420, %v1408
  %v1422 = vadd.f32 %v1421, %v1409
  %v1423 = vadd.f32 %v1422, %v1410
  %v1424 = vadd.f32 %v1423, %v1411
  %v1425 = vadd.f32 %v1424, %v1412
  %v1426 = vadd.f32 %v1425, %v1413
  %v1427 = vadd.f32 %v1426, %v1414
  %v1428 = vadd.f32 %v1427, %v1415
  %v1429 = vadd.f32 %v1428, %v1416
  %v1430 = vrot.slane %v1429, 4
  %v1431 = vadd.f32 %v1429, %v1430
  %v1432 = vrot.slane %v1431, 2
  %v1433 = vadd.f32 %v1431, %v1432
  %v1434 = vrot.slane %v1433, 1
  %v1435 = vadd.f32 %v1433, %v1434
  %v1436 = vadd.f32 %v1081, %v1435
  %v1437 = vrcp.pop 392.0
  %v1438 = vmul.f32 %v1402, %v1437
  %v1439 = vmul.f32 %v1436, %v1437
  %v1440 = vmul.f32 %v1438, %v1438
  %v1441 = vsub.f32 %v1439, %v1440
  %v1442 = vadd.f32 %v1441, 1e-05
  %v1443 = vrsqrt.pop %v1442
  %v1444 = vld [vmem:[%s2] sm:$0x1]
  %v1445 = vmul.f32 %v1444, %v1443
  %v1446 = vld [vmem:[%s3] sm:$0x1]
  %v1447 = vmul.f32 %v1438, %v1445
  %v1448 = vsub.f32 %v1446, %v1447
  %v1450 = vlaneseq
  %v1451 = vshrl.u32 %v1450, 7
  %v1452 = vsub.s32 0, %v1451
  %v1453 = vrot.slane %v1445, %v1452
  %v1455 = vmul.f32 %v264, %v1453
  %v1456 = vmul.f32 %v267, %v1453
  %v1457 = vmul.f32 %v272, %v1453
  %v1458 = vmul.f32 %v275, %v1453
  %v1459 = vmul.f32 %v280, %v1453
  %v1460 = vmul.f32 %v283, %v1453
  %v1461 = vmul.f32 %v288, %v1453
  %v1462 = vmul.f32 %v291, %v1453
  %v1463 = vmul.f32 %v296, %v1453
  %v1464 = vmul.f32 %v299, %v1453
  %v1465 = vmul.f32 %v304, %v1453
  %v1466 = vmul.f32 %v307, %v1453
  %v1467 = vmul.f32 %v312, %v1453
  %v1468 = vmul.f32 %v315, %v1453
  %v1470 = vlaneseq
  %v1471 = vshrl.u32 %v1470, 7
  %v1472 = vsub.s32 0, %v1471
  %v1473 = vrot.slane %v1448, %v1472
  %v1475 = vadd.f32 %v1455, %v1473
  %v1476 = vadd.f32 %v1456, %v1473
  %v1477 = vadd.f32 %v1457, %v1473
  %v1478 = vadd.f32 %v1458, %v1473
  %v1479 = vadd.f32 %v1459, %v1473
  %v1480 = vadd.f32 %v1460, %v1473
  %v1481 = vadd.f32 %v1461, %v1473
  %v1482 = vadd.f32 %v1462, %v1473
  %v1483 = vadd.f32 %v1463, %v1473
  %v1484 = vadd.f32 %v1464, %v1473
  %v1485 = vadd.f32 %v1465, %v1473
  %v1486 = vadd.f32 %v1466, %v1473
  %v1487 = vadd.f32 %v1467, %v1473
  %v1488 = vadd.f32 %v1468, %v1473
  %v1489 = vmax.f32 %v1475, 0.0
  %v1490 = vmax.f32 %v1476, 0.0
  %v1491 = vmax.f32 %v1477, 0.0
  %v1492 = vmax.f32 %v1478, 0.0
  %v1493 = vmax.f32 %v1479, 0.0
  %v1494 = vmax.f32 %v1480, 0.0
  %v1495 = vmax.f32 %v1481, 0.0
  %v1496 = vmax.f32 %v1482, 0.0
  %v1497 = vmax.f32 %v1483, 0.0
  %v1498 = vmax.f32 %v1484, 0.0
  %v1499 = vmax.f32 %v1485, 0.0
  %v1500 = vmax.f32 %v1486, 0.0
  %v1501 = vmax.f32 %v1487, 0.0
  %v1502 = vmax.f32 %v1488, 0.0
  %v1503 = vpack.c.bf16 %v1490, %v1489
  %v1504 = vpack.c.bf16 %v1492, %v1491
  %v1505 = vpack.c.bf16 %v1494, %v1493
  %v1506 = vpack.c.bf16 %v1496, %v1495
  %v1507 = vpack.c.bf16 %v1498, %v1497
  %v1508 = vpack.c.bf16 %v1500, %v1499
  %v1509 = vpack.c.bf16 %v1502, %v1501
  %v1517 = vunpack.c.l.b16 %v1503
  %v1518 = vunpack.c.h.b16 %v1503
  %v1519 = vunpack.c.l.b16 %v1504
  %v1520 = vunpack.c.h.b16 %v1504
  %v1521 = vunpack.c.l.b16 %v1505
  %v1522 = vunpack.c.h.b16 %v1505
  %v1523 = vunpack.c.l.b16 %v1506
  %v1524 = vunpack.c.h.b16 %v1506
  %v1525 = vunpack.c.l.b16 %v1507
  %v1526 = vunpack.c.h.b16 %v1507
  %v1527 = vunpack.c.l.b16 %v1508
  %v1528 = vunpack.c.h.b16 %v1508
  %v1529 = vunpack.c.l.b16 %v1509
  %v1530 = vunpack.c.h.b16 %v1509
  %v1531 = vpack.c.b16 %v1517, %v1517
  %v1532 = vpack.c.b16 %v1518, %v1518
  %v1533 = vpack.c.b16 %v1519, %v1519
  %v1534 = vpack.c.b16 %v1520, %v1520
  %v1535 = vpack.c.b16 %v1521, %v1521
  %v1536 = vpack.c.b16 %v1522, %v1522
  %v1537 = vpack.c.b16 %v1523, %v1523
  %v1538 = vpack.c.b16 %v1524, %v1524
  %v1539 = vpack.c.b16 %v1525, %v1525
  %v1540 = vpack.c.b16 %v1526, %v1526
  %v1541 = vpack.c.b16 %v1527, %v1527
  %v1542 = vpack.c.b16 %v1528, %v1528
  %v1543 = vpack.c.b16 %v1529, %v1529
  %v1544 = vpack.c.b16 %v1530, %v1530
  %1559 = vst [vmem:[%s4] sm:$0xf] %v1531
  %1560 = vst [vmem:[%s4 + $0x4] sm:$0xf] %v1532
  %1561 = vst [vmem:[%s4 + $0x8] sm:$0xf] %v1533
  %1562 = vst [vmem:[%s4 + $0xc] sm:$0xf] %v1534
  %1563 = vst [vmem:[%s4 + $0x10] sm:$0xf] %v1535
  %1564 = vst [vmem:[%s4 + $0x14] sm:$0xf] %v1536
  %1565 = vst [vmem:[%s4 + $0x18] sm:$0xf] %v1537
  %1566 = vst [vmem:[%s4 + $0x1c] sm:$0xf] %v1538
  %1567 = vst [vmem:[%s4 + $0x20] sm:$0xf] %v1539
  %1568 = vst [vmem:[%s4 + $0x24] sm:$0xf] %v1540
  %1569 = vst [vmem:[%s4 + $0x28] sm:$0xf] %v1541
  %1570 = vst [vmem:[%s4 + $0x2c] sm:$0xf] %v1542
  %1571 = vst [vmem:[%s4 + $0x30] sm:$0xf] %v1543
  %1572 = vst [vmem:[%s4 + $0x34] sm:$0xf] %v1544
  %v1573 = vmul.f32 %v619, %v1453
  %v1574 = vmul.f32 %v622, %v1453
  %v1575 = vmul.f32 %v627, %v1453
  %v1576 = vmul.f32 %v630, %v1453
  %v1577 = vmul.f32 %v635, %v1453
  %v1578 = vmul.f32 %v638, %v1453
  %v1579 = vmul.f32 %v643, %v1453
  %v1580 = vmul.f32 %v646, %v1453
  %v1581 = vmul.f32 %v651, %v1453
  %v1582 = vmul.f32 %v654, %v1453
  %v1583 = vmul.f32 %v659, %v1453
  %v1584 = vmul.f32 %v662, %v1453
  %v1585 = vmul.f32 %v667, %v1453
  %v1586 = vmul.f32 %v670, %v1453
  %v1587 = vadd.f32 %v1573, %v1473
  %v1588 = vadd.f32 %v1574, %v1473
  %v1589 = vadd.f32 %v1575, %v1473
  %v1590 = vadd.f32 %v1576, %v1473
  %v1591 = vadd.f32 %v1577, %v1473
  %v1592 = vadd.f32 %v1578, %v1473
  %v1593 = vadd.f32 %v1579, %v1473
  %v1594 = vadd.f32 %v1580, %v1473
  %v1595 = vadd.f32 %v1581, %v1473
  %v1596 = vadd.f32 %v1582, %v1473
  %v1597 = vadd.f32 %v1583, %v1473
  %v1598 = vadd.f32 %v1584, %v1473
  %v1599 = vadd.f32 %v1585, %v1473
  %v1600 = vadd.f32 %v1586, %v1473
  %v1601 = vmax.f32 %v1587, 0.0
  %v1602 = vmax.f32 %v1588, 0.0
  %v1603 = vmax.f32 %v1589, 0.0
  %v1604 = vmax.f32 %v1590, 0.0
  %v1605 = vmax.f32 %v1591, 0.0
  %v1606 = vmax.f32 %v1592, 0.0
  %v1607 = vmax.f32 %v1593, 0.0
  %v1608 = vmax.f32 %v1594, 0.0
  %v1609 = vmax.f32 %v1595, 0.0
  %v1610 = vmax.f32 %v1596, 0.0
  %v1611 = vmax.f32 %v1597, 0.0
  %v1612 = vmax.f32 %v1598, 0.0
  %v1613 = vmax.f32 %v1599, 0.0
  %v1614 = vmax.f32 %v1600, 0.0
  %v1615 = vpack.c.bf16 %v1602, %v1601
  %v1616 = vpack.c.bf16 %v1604, %v1603
  %v1617 = vpack.c.bf16 %v1606, %v1605
  %v1618 = vpack.c.bf16 %v1608, %v1607
  %v1619 = vpack.c.bf16 %v1610, %v1609
  %v1620 = vpack.c.bf16 %v1612, %v1611
  %v1621 = vpack.c.bf16 %v1614, %v1613
  %v1629 = vunpack.c.l.b16 %v1615
  %v1630 = vunpack.c.h.b16 %v1615
  %v1631 = vunpack.c.l.b16 %v1616
  %v1632 = vunpack.c.h.b16 %v1616
  %v1633 = vunpack.c.l.b16 %v1617
  %v1634 = vunpack.c.h.b16 %v1617
  %v1635 = vunpack.c.l.b16 %v1618
  %v1636 = vunpack.c.h.b16 %v1618
  %v1637 = vunpack.c.l.b16 %v1619
  %v1638 = vunpack.c.h.b16 %v1619
  %v1639 = vunpack.c.l.b16 %v1620
  %v1640 = vunpack.c.h.b16 %v1620
  %v1641 = vunpack.c.l.b16 %v1621
  %v1642 = vunpack.c.h.b16 %v1621
  %v1643 = vpack.c.b16 %v1629, %v1629
  %v1644 = vpack.c.b16 %v1630, %v1630
  %v1645 = vpack.c.b16 %v1631, %v1631
  %v1646 = vpack.c.b16 %v1632, %v1632
  %v1647 = vpack.c.b16 %v1633, %v1633
  %v1648 = vpack.c.b16 %v1634, %v1634
  %v1649 = vpack.c.b16 %v1635, %v1635
  %v1650 = vpack.c.b16 %v1636, %v1636
  %v1651 = vpack.c.b16 %v1637, %v1637
  %v1652 = vpack.c.b16 %v1638, %v1638
  %v1653 = vpack.c.b16 %v1639, %v1639
  %v1654 = vpack.c.b16 %v1640, %v1640
  %v1655 = vpack.c.b16 %v1641, %v1641
  %v1656 = vpack.c.b16 %v1642, %v1642
  %s1671 = scalar_lea.vmem %s4, 56
  %1672 = vst [vmem:[%s1671] sm:$0xf] %v1643
  %1673 = vst [vmem:[%s1671 + $0x4] sm:$0xf] %v1644
  %1674 = vst [vmem:[%s1671 + $0x8] sm:$0xf] %v1645
  %1675 = vst [vmem:[%s1671 + $0xc] sm:$0xf] %v1646
  %1676 = vst [vmem:[%s1671 + $0x10] sm:$0xf] %v1647
  %1677 = vst [vmem:[%s1671 + $0x14] sm:$0xf] %v1648
  %1678 = vst [vmem:[%s1671 + $0x18] sm:$0xf] %v1649
  %1679 = vst [vmem:[%s1671 + $0x1c] sm:$0xf] %v1650
  %1680 = vst [vmem:[%s1671 + $0x20] sm:$0xf] %v1651
  %1681 = vst [vmem:[%s1671 + $0x24] sm:$0xf] %v1652
  %1682 = vst [vmem:[%s1671 + $0x28] sm:$0xf] %v1653
  %1683 = vst [vmem:[%s1671 + $0x2c] sm:$0xf] %v1654
  %1684 = vst [vmem:[%s1671 + $0x30] sm:$0xf] %v1655
  %1685 = vst [vmem:[%s1671 + $0x34] sm:$0xf] %v1656
  %v1686 = vmul.f32 %v974, %v1453
  %v1687 = vmul.f32 %v977, %v1453
  %v1688 = vmul.f32 %v982, %v1453
  %v1689 = vmul.f32 %v985, %v1453
  %v1690 = vmul.f32 %v990, %v1453
  %v1691 = vmul.f32 %v993, %v1453
  %v1692 = vmul.f32 %v998, %v1453
  %v1693 = vmul.f32 %v1001, %v1453
  %v1694 = vmul.f32 %v1006, %v1453
  %v1695 = vmul.f32 %v1009, %v1453
  %v1696 = vmul.f32 %v1014, %v1453
  %v1697 = vmul.f32 %v1017, %v1453
  %v1698 = vmul.f32 %v1022, %v1453
  %v1699 = vmul.f32 %v1025, %v1453
  %v1700 = vadd.f32 %v1686, %v1473
  %v1701 = vadd.f32 %v1687, %v1473
  %v1702 = vadd.f32 %v1688, %v1473
  %v1703 = vadd.f32 %v1689, %v1473
  %v1704 = vadd.f32 %v1690, %v1473
  %v1705 = vadd.f32 %v1691, %v1473
  %v1706 = vadd.f32 %v1692, %v1473
  %v1707 = vadd.f32 %v1693, %v1473
  %v1708 = vadd.f32 %v1694, %v1473
  %v1709 = vadd.f32 %v1695, %v1473
  %v1710 = vadd.f32 %v1696, %v1473
  %v1711 = vadd.f32 %v1697, %v1473
  %v1712 = vadd.f32 %v1698, %v1473
  %v1713 = vadd.f32 %v1699, %v1473
  %v1714 = vmax.f32 %v1700, 0.0
  %v1715 = vmax.f32 %v1701, 0.0
  %v1716 = vmax.f32 %v1702, 0.0
  %v1717 = vmax.f32 %v1703, 0.0
  %v1718 = vmax.f32 %v1704, 0.0
  %v1719 = vmax.f32 %v1705, 0.0
  %v1720 = vmax.f32 %v1706, 0.0
  %v1721 = vmax.f32 %v1707, 0.0
  %v1722 = vmax.f32 %v1708, 0.0
  %v1723 = vmax.f32 %v1709, 0.0
  %v1724 = vmax.f32 %v1710, 0.0
  %v1725 = vmax.f32 %v1711, 0.0
  %v1726 = vmax.f32 %v1712, 0.0
  %v1727 = vmax.f32 %v1713, 0.0
  %v1728 = vpack.c.bf16 %v1715, %v1714
  %v1729 = vpack.c.bf16 %v1717, %v1716
  %v1730 = vpack.c.bf16 %v1719, %v1718
  %v1731 = vpack.c.bf16 %v1721, %v1720
  %v1732 = vpack.c.bf16 %v1723, %v1722
  %v1733 = vpack.c.bf16 %v1725, %v1724
  %v1734 = vpack.c.bf16 %v1727, %v1726
  %v1742 = vunpack.c.l.b16 %v1728
  %v1743 = vunpack.c.h.b16 %v1728
  %v1744 = vunpack.c.l.b16 %v1729
  %v1745 = vunpack.c.h.b16 %v1729
  %v1746 = vunpack.c.l.b16 %v1730
  %v1747 = vunpack.c.h.b16 %v1730
  %v1748 = vunpack.c.l.b16 %v1731
  %v1749 = vunpack.c.h.b16 %v1731
  %v1750 = vunpack.c.l.b16 %v1732
  %v1751 = vunpack.c.h.b16 %v1732
  %v1752 = vunpack.c.l.b16 %v1733
  %v1753 = vunpack.c.h.b16 %v1733
  %v1754 = vunpack.c.l.b16 %v1734
  %v1755 = vunpack.c.h.b16 %v1734
  %v1756 = vpack.c.b16 %v1742, %v1742
  %v1757 = vpack.c.b16 %v1743, %v1743
  %v1758 = vpack.c.b16 %v1744, %v1744
  %v1759 = vpack.c.b16 %v1745, %v1745
  %v1760 = vpack.c.b16 %v1746, %v1746
  %v1761 = vpack.c.b16 %v1747, %v1747
  %v1762 = vpack.c.b16 %v1748, %v1748
  %v1763 = vpack.c.b16 %v1749, %v1749
  %v1764 = vpack.c.b16 %v1750, %v1750
  %v1765 = vpack.c.b16 %v1751, %v1751
  %v1766 = vpack.c.b16 %v1752, %v1752
  %v1767 = vpack.c.b16 %v1753, %v1753
  %v1768 = vpack.c.b16 %v1754, %v1754
  %v1769 = vpack.c.b16 %v1755, %v1755
  %s1784 = scalar_lea.vmem %s4, 112
  %1785 = vst [vmem:[%s1784] sm:$0xf] %v1756
  %1786 = vst [vmem:[%s1784 + $0x4] sm:$0xf] %v1757
  %1787 = vst [vmem:[%s1784 + $0x8] sm:$0xf] %v1758
  %1788 = vst [vmem:[%s1784 + $0xc] sm:$0xf] %v1759
  %1789 = vst [vmem:[%s1784 + $0x10] sm:$0xf] %v1760
  %1790 = vst [vmem:[%s1784 + $0x14] sm:$0xf] %v1761
  %1791 = vst [vmem:[%s1784 + $0x18] sm:$0xf] %v1762
  %1792 = vst [vmem:[%s1784 + $0x1c] sm:$0xf] %v1763
  %1793 = vst [vmem:[%s1784 + $0x20] sm:$0xf] %v1764
  %1794 = vst [vmem:[%s1784 + $0x24] sm:$0xf] %v1765
  %1795 = vst [vmem:[%s1784 + $0x28] sm:$0xf] %v1766
  %1796 = vst [vmem:[%s1784 + $0x2c] sm:$0xf] %v1767
  %1797 = vst [vmem:[%s1784 + $0x30] sm:$0xf] %v1768
  %1798 = vst [vmem:[%s1784 + $0x34] sm:$0xf] %v1769
  %v1799 = vmul.f32 %v1329, %v1453
  %v1800 = vmul.f32 %v1332, %v1453
  %v1801 = vmul.f32 %v1337, %v1453
  %v1802 = vmul.f32 %v1340, %v1453
  %v1803 = vmul.f32 %v1345, %v1453
  %v1804 = vmul.f32 %v1348, %v1453
  %v1805 = vmul.f32 %v1353, %v1453
  %v1806 = vmul.f32 %v1356, %v1453
  %v1807 = vmul.f32 %v1361, %v1453
  %v1808 = vmul.f32 %v1364, %v1453
  %v1809 = vmul.f32 %v1369, %v1453
  %v1810 = vmul.f32 %v1372, %v1453
  %v1811 = vmul.f32 %v1377, %v1453
  %v1812 = vmul.f32 %v1380, %v1453
  %v1813 = vadd.f32 %v1799, %v1473
  %v1814 = vadd.f32 %v1800, %v1473
  %v1815 = vadd.f32 %v1801, %v1473
  %v1816 = vadd.f32 %v1802, %v1473
  %v1817 = vadd.f32 %v1803, %v1473
  %v1818 = vadd.f32 %v1804, %v1473
  %v1819 = vadd.f32 %v1805, %v1473
  %v1820 = vadd.f32 %v1806, %v1473
  %v1821 = vadd.f32 %v1807, %v1473
  %v1822 = vadd.f32 %v1808, %v1473
  %v1823 = vadd.f32 %v1809, %v1473
  %v1824 = vadd.f32 %v1810, %v1473
  %v1825 = vadd.f32 %v1811, %v1473
  %v1826 = vadd.f32 %v1812, %v1473
  %v1827 = vmax.f32 %v1813, 0.0
  %v1828 = vmax.f32 %v1814, 0.0
  %v1829 = vmax.f32 %v1815, 0.0
  %v1830 = vmax.f32 %v1816, 0.0
  %v1831 = vmax.f32 %v1817, 0.0
  %v1832 = vmax.f32 %v1818, 0.0
  %v1833 = vmax.f32 %v1819, 0.0
  %v1834 = vmax.f32 %v1820, 0.0
  %v1835 = vmax.f32 %v1821, 0.0
  %v1836 = vmax.f32 %v1822, 0.0
  %v1837 = vmax.f32 %v1823, 0.0
  %v1838 = vmax.f32 %v1824, 0.0
  %v1839 = vmax.f32 %v1825, 0.0
  %v1840 = vmax.f32 %v1826, 0.0
  %v1841 = vpack.c.bf16 %v1828, %v1827
  %v1842 = vpack.c.bf16 %v1830, %v1829
  %v1843 = vpack.c.bf16 %v1832, %v1831
  %v1844 = vpack.c.bf16 %v1834, %v1833
  %v1845 = vpack.c.bf16 %v1836, %v1835
  %v1846 = vpack.c.bf16 %v1838, %v1837
  %v1847 = vpack.c.bf16 %v1840, %v1839
  %v1855 = vunpack.c.l.b16 %v1841
  %v1856 = vunpack.c.h.b16 %v1841
  %v1857 = vunpack.c.l.b16 %v1842
  %v1858 = vunpack.c.h.b16 %v1842
  %v1859 = vunpack.c.l.b16 %v1843
  %v1860 = vunpack.c.h.b16 %v1843
  %v1861 = vunpack.c.l.b16 %v1844
  %v1862 = vunpack.c.h.b16 %v1844
  %v1863 = vunpack.c.l.b16 %v1845
  %v1864 = vunpack.c.h.b16 %v1845
  %v1865 = vunpack.c.l.b16 %v1846
  %v1866 = vunpack.c.h.b16 %v1846
  %v1867 = vunpack.c.l.b16 %v1847
  %v1868 = vunpack.c.h.b16 %v1847
  %v1869 = vpack.c.b16 %v1855, %v1855
  %v1870 = vpack.c.b16 %v1856, %v1856
  %v1871 = vpack.c.b16 %v1857, %v1857
  %v1872 = vpack.c.b16 %v1858, %v1858
  %v1873 = vpack.c.b16 %v1859, %v1859
  %v1874 = vpack.c.b16 %v1860, %v1860
  %v1875 = vpack.c.b16 %v1861, %v1861
  %v1876 = vpack.c.b16 %v1862, %v1862
  %v1877 = vpack.c.b16 %v1863, %v1863
  %v1878 = vpack.c.b16 %v1864, %v1864
  %v1879 = vpack.c.b16 %v1865, %v1865
  %v1880 = vpack.c.b16 %v1866, %v1866
  %v1881 = vpack.c.b16 %v1867, %v1867
  %v1882 = vpack.c.b16 %v1868, %v1868
  %s1897 = scalar_lea.vmem %s4, 168
  %1898 = vst [vmem:[%s1897] sm:$0xf] %v1869
  %1899 = vst [vmem:[%s1897 + $0x4] sm:$0xf] %v1870
  %1900 = vst [vmem:[%s1897 + $0x8] sm:$0xf] %v1871
  %1901 = vst [vmem:[%s1897 + $0xc] sm:$0xf] %v1872
  %1902 = vst [vmem:[%s1897 + $0x10] sm:$0xf] %v1873
  %1903 = vst [vmem:[%s1897 + $0x14] sm:$0xf] %v1874
  %1904 = vst [vmem:[%s1897 + $0x18] sm:$0xf] %v1875
  %1905 = vst [vmem:[%s1897 + $0x1c] sm:$0xf] %v1876
  %1906 = vst [vmem:[%s1897 + $0x20] sm:$0xf] %v1877
  %1907 = vst [vmem:[%s1897 + $0x24] sm:$0xf] %v1878
  %1908 = vst [vmem:[%s1897 + $0x28] sm:$0xf] %v1879
  %1909 = vst [vmem:[%s1897 + $0x2c] sm:$0xf] %v1880
  %1910 = vst [vmem:[%s1897 + $0x30] sm:$0xf] %v1881
  %1911 = vst [vmem:[%s1897 + $0x34] sm:$0xf] %v1882
  // Predicated region
  $region18: #{generator_forward.6} parent=0 // pred_check
    _
  $region19: #{generator_forward.6} parent=0 // pred_check_branch
    %1913 = sbr.rel (0) target = $region21
  $region20: #{generator_forward.6} parent=0 // pred_region
    _
  $region21: #{generator_forward.6} parent=0 // pred_fallthru
    _
  // Predicated region
  $region22: #{generator_forward.6} parent=0 // pred_check
    _
  $region23: #{generator_forward.6} parent=0 // pred_check_branch
    %1915 = sbr.rel (0) target = $region25
  $region24: #{generator_forward.6} parent=0 // pred_region
    _
  $region25: #{generator_forward.6} parent=0 // pred_fallthru
    _

// kernel: generator_forward.7
$region0: #{generator_forward.7}
  #allocation0 [shape = 'u32[]', space=smem, size = 0x4, offset = 0x4, fixed_abs, tag = 'smem constant byte address 0x4 - core index']
  #allocation1 [shape = 'u32[144,128]{1,0:T(1,128)}', space=vmem, size = 0x12000, scoped, tag = 'internal scratch']
  %s0 = inlined_call_operand.vmem [shape: bf16[4,400,112], index: 0, kind: input, shape index: {}]
  %s1 = inlined_call_operand.vmem [shape: bf16[4,112,128], index: 1, kind: input, shape index: {}]
  %s2 = inlined_call_operand.vmem [shape: f32[4,400,128], index: 2, kind: output, shape index: {}]
  %s3 = sld [smem:[#allocation0]]
  $region41: #{generator_forward.7} parent=0
    _
  %s5 = ssub.s32 1, %s3
  %s6 = scalar_select 0, %s5, %s3
  loop: start=0, step=1, limit=6
  $region2: #{generator_forward.7} parent=0 // loop_pre_header
    _
  $region3: #{generator_forward.7} parent=0 // loop_header
    %s8 = sphi 0, %s12
    %p9 = scmp.ge.s32.totalorder %s8, 6
    %s15 = sphi 0, %s27
    %s16 = sphi 0, %s23
    %s17 = sphi 0, %s15
    %s18 = sphi 0, %s16
    %s19 = sphi 0, %s17
    %s20 = sphi 0, %s18
    %s32 = sphi 0, %s34
    %s35 = sphi 0, %s32
    %s36 = sphi 0, %s35
    %s52 = sphi 0, %s36
    %s58 = sphi 0, %s60
    %s61 = sphi 0, %s58
    %s62 = sphi 0, %s61
    %s78 = sphi 0, %s62
    %s86 = sphi 0, %s88
    %s89 = sphi 0, %s86
    %s90 = sphi 0, %s89
    %s106 = sphi 0, %s90
  $region4: #{generator_forward.7} parent=0 // loop_header_branch
    %11 = sbr.rel (%p9) target = $region8
  $region5: #{generator_forward.7} parent=0 // loop_body
    %s13 = ssub.s32 %s8, 1
    %s14 = ssub.s32 %s8, 2
    %s21 = sadd.s32 1, %s16
    %p22 = scmp.ge.s32.totalorder %s21, 1
    %s23 = scalar_select %p22, 0, %s21
    %s24 = sadd.s32 1, %s15
    %s25 = scalar_select %p22, %s24, %s15
    %p26 = scmp.ge.s32.totalorder %s25, 4
    %s27 = scalar_select %p26, 0, %s25
    %s28 = ssub.s32 %s15, %s27
    %s29 = ssub.s32 %s16, %s23
    %s30 = sor.u32 %s28, %s29
    %p31 = scmp.eq.s32.totalorder %s30, 0
    %s33 = sadd.s32 %s32, 1
    %s34 = scalar_select %p31, %s32, %s33
    %p37 = pneg %p31
    %p38 = scmp.eq.s32.totalorder %s8, 3
    %p39 = por %p37, %p38
    %p40 = scmp.ne.s32.totalorder %s32, %s35
    %p41 = scmp.eq.s32.totalorder %s8, 0
    %p42 = por %p40, %p41
    %p43 = scmp.ne.s32.totalorder %s32, %s35
    %p44 = scmp.eq.s32.totalorder %s13, 3
    %p45 = por %p43, %p44
    %p46 = scmp.ne.s32.totalorder %s35, %s36
    %p47 = scmp.eq.s32.totalorder %s13, 0
    %p48 = por %p46, %p47
    %p49 = scmp.ne.s32.totalorder %s35, %s36
    %p50 = scmp.eq.s32.totalorder %s14, 3
    %p51 = por %p49, %p50
    %p53 = scmp.ne.s32.totalorder %s36, %s52
    %p54 = scmp.eq.s32.totalorder %s14, 0
    %p55 = por %p53, %p54
    %s56 = ssub.s32 %s15, %s27
    %p57 = scmp.eq.s32.totalorder %s56, 0
    %s59 = sadd.s32 %s58, 1
    %s60 = scalar_select %p57, %s58, %s59
    %p63 = pneg %p57
    %p64 = scmp.eq.s32.totalorder %s8, 3
    %p65 = por %p63, %p64
    %p66 = scmp.ne.s32.totalorder %s58, %s61
    %p67 = scmp.eq.s32.totalorder %s8, 0
    %p68 = por %p66, %p67
    %p69 = scmp.ne.s32.totalorder %s58, %s61
    %p70 = scmp.eq.s32.totalorder %s13, 3
    %p71 = por %p69, %p70
    %p72 = scmp.ne.s32.totalorder %s61, %s62
    %p73 = scmp.eq.s32.totalorder %s13, 0
    %p74 = por %p72, %p73
    %p75 = scmp.ne.s32.totalorder %s61, %s62
    %p76 = scmp.eq.s32.totalorder %s14, 3
    %p77 = por %p75, %p76
    %p79 = scmp.ne.s32.totalorder %s62, %s78
    %p80 = scmp.eq.s32.totalorder %s14, 0
    %p81 = por %p79, %p80
    %s82 = ssub.s32 %s15, %s27
    %s83 = ssub.s32 %s16, %s23
    %s84 = sor.u32 %s82, %s83
    %p85 = scmp.eq.s32.totalorder %s84, 0
    %s87 = sadd.s32 %s86, 1
    %s88 = scalar_select %p85, %s86, %s87
    %p91 = pneg %p85
    %p92 = scmp.eq.s32.totalorder %s8, 3
    %p93 = por %p91, %p92
    %p94 = scmp.ne.s32.totalorder %s86, %s89
    %p95 = scmp.eq.s32.totalorder %s8, 0
    %p96 = por %p94, %p95
    %p97 = scmp.ne.s32.totalorder %s86, %s89
    %p98 = scmp.eq.s32.totalorder %s13, 3
    %p99 = por %p97, %p98
    %p100 = scmp.ne.s32.totalorder %s89, %s90
    %p101 = scmp.eq.s32.totalorder %s13, 0
    %p102 = por %p100, %p101
    %p103 = scmp.ne.s32.totalorder %s89, %s90
    %p104 = scmp.eq.s32.totalorder %s14, 3
    %p105 = por %p103, %p104
    %p107 = scmp.ne.s32.totalorder %s90, %s106
    %p108 = scmp.eq.s32.totalorder %s14, 0
    %p109 = por %p107, %p108
    %p110 = scmp.le.s32.totalorder 1, %s8
    %p111 = scmp.lt.s32.totalorder %s8, 5
    %p112 = pnand %p110, %p111
    %p113 = pneg %p112
    // Predicated region
    $region9: #{generator_forward.7} parent=5 // pred_check
      _
    $region10: #{generator_forward.7} parent=5 // pred_check_branch
      %115 = sbr.rel (%p112) target = $region12
    $region11: #{generator_forward.7} parent=5 // pred_region
      %s116 = ssub.s32 %s8, 1
    $region12: #{generator_forward.7} parent=5 // pred_fallthru
      _
    %p117 = scmp.lt.s32.totalorder %s8, 4
    // Predicated region
    $region13: #{generator_forward.7} parent=5 // pred_check
      %p118 = pneg %p117
    $region14: #{generator_forward.7} parent=5 // pred_check_branch
      %120 = sbr.rel (%p118) target = $region16
    $region15: #{generator_forward.7} parent=5 // pred_region
      // Predicated region
      $region17: #{generator_forward.7} parent=15 // pred_check
        %p121 = pneg %p42
      $region18: #{generator_forward.7} parent=15 // pred_check_branch
        %123 = sbr.rel (%p121) target = $region20
      $region19: #{generator_forward.7} parent=15 // pred_region
        %s124 = smul.u32 50, %s16
        %p125 = scmp.lt.s32.totalorder %s15, 3
        %s126 = scalar_select %p125, %s15, 3
        %p127 = scmp.lt.s32.totalorder %s124, 49
        %s128 = scalar_select %p127, %s124, 49
        %s129 = smul.addr %s126, 50
        %s130 = sadd.s32 %s128, %s129
        %s131 = smul.addr %s130, 4
        %s132 = scalar_lea.vmem %s0, %s131
        %s133 = smul.u32 50, %s16
      $region20: #{generator_forward.7} parent=15 // pred_fallthru
        _
      // Predicated region
      $region21: #{generator_forward.7} parent=15 // pred_check
        %p134 = pneg %p68
      $region22: #{generator_forward.7} parent=15 // pred_check_branch
        %136 = sbr.rel (%p134) target = $region24
      $region23: #{generator_forward.7} parent=15 // pred_region
        %p137 = scmp.lt.s32.totalorder %s15, 3
        %s138 = scalar_select %p137, %s15, 3
        %s139 = smul.addr %s138, 14
        %s140 = smul.addr %s139, 4
        %s141 = scalar_lea.vmem %s1, %s140
      $region24: #{generator_forward.7} parent=15 // pred_fallthru
        _
    $region16: #{generator_forward.7} parent=5 // pred_fallthru
      _
    %p142 = scmp.le.s32.totalorder 1, %s8
    %p143 = scmp.lt.s32.totalorder %s8, 5
    %p144 = pnand %p142, %p143
    %p145 = pneg %p144
    // Predicated region
    $region25: #{generator_forward.7} parent=5 // pred_check
      _
    $region26: #{generator_forward.7} parent=5 // pred_check_branch
      %147 = sbr.rel (%p144) target = $region28
    $region27: #{generator_forward.7} parent=5 // pred_region
      %s148 = ssub.s32 %s8, 1
      %s149 = smul.u32 50, %s18
      %p150 = scmp.lt.s32.totalorder %s17, 3
      %s151 = scalar_select %p150, %s17, 3
      %p152 = scmp.lt.s32.totalorder %s149, 49
      %s153 = scalar_select %p152, %s149, 49
      %s154 = smul.addr %s151, 50
      %s155 = sadd.s32 %s153, %s154
      %s156 = smul.addr %s155, 4
      %s157 = scalar_lea.vmem %s0, %s156
      %p158 = pneg %p48
      %p159 = pneg %p45
      %p160 = scmp.lt.s32.totalorder %s17, 3
      %s161 = scalar_select %p160, %s17, 3
      %s162 = smul.addr %s161, 14
      %s163 = smul.addr %s162, 4
      %s164 = scalar_lea.vmem %s1, %s163
      %p165 = pneg %p74
      %p166 = pneg %p71
      %p167 = pneg %p102
      %p168 = pneg %p99
      %s169 = smul.u32 50, %s18
      %p170 = scmp.lt.s32.totalorder %s17, 3
      %s171 = scalar_select %p170, %s17, 3
      %p172 = scmp.lt.s32.totalorder %s169, 49
      %s173 = scalar_select %p172, %s169, 49
      %s174 = smul.addr %s171, 50
      %s175 = sadd.s32 %s173, %s174
      %s176 = smul.addr %s175, 8
      %s177 = scalar_lea.vmem %s2, %s176
      %s178 = smul.u32 50, %s18
      %p179 = scmp.lt.s32.totalorder %s17, 3
      %s180 = scalar_select %p179, %s17, 3
      %p181 = scmp.lt.s32.totalorder %s178, 49
      %s182 = scalar_select %p181, %s178, 49
      %s183 = smul.addr %s180, 50
      %s184 = sadd.s32 %s182, %s183
      %s185 = smul.addr %s184, 4
      %s186 = scalar_lea.vmem %s0, %s185
      %s187 = smul.u32 50, %s18
      %p188 = scmp.lt.s32.totalorder %s17, 3
      %s189 = scalar_select %p188, %s17, 3
      %s190 = smul.addr %s189, 14
      %s191 = smul.addr %s190, 4
      %s192 = scalar_lea.vmem %s1, %s191
      %s193 = smul.u32 50, %s18
      %p194 = scmp.lt.s32.totalorder %s17, 3
      %s195 = scalar_select %p194, %s17, 3
      %p196 = scmp.lt.s32.totalorder %s193, 49
      %s197 = scalar_select %p196, %s193, 49
      %s198 = smul.addr %s195, 50
      %s199 = sadd.s32 %s197, %s198
      %s200 = smul.addr %s199, 8
      %s201 = scalar_lea.vmem %s2, %s200
      %s202 = smul.u32 50, %s18
      %v204 = vld [vmem:[%s186] sm:$0xf]
      %v205 = vld [vmem:[%s186 + $0x4] sm:$0xf]
      %v206 = vld [vmem:[%s186 + $0x8] sm:$0xf]
      %v207 = vld [vmem:[%s186 + $0xc] sm:$0xf]
      %v208 = vld [vmem:[%s186 + $0x10] sm:$0xf]
      %v209 = vld [vmem:[%s186 + $0x14] sm:$0xf]
      %v210 = vld [vmem:[%s186 + $0x18] sm:$0xf]
      %v211 = vld [vmem:[%s186 + $0x1c] sm:$0xf]
      %v212 = vld [vmem:[%s186 + $0x20] sm:$0xf]
      %v213 = vld [vmem:[%s186 + $0x24] sm:$0xf]
      %v214 = vld [vmem:[%s186 + $0x28] sm:$0xf]
      %v215 = vld [vmem:[%s186 + $0x2c] sm:$0xf]
      %v216 = vld [vmem:[%s186 + $0x30] sm:$0xf]
      %v217 = vld [vmem:[%s186 + $0x34] sm:$0xf]
      %v218 = vld [vmem:[%s186 + $0x38] sm:$0xf]
      %v219 = vld [vmem:[%s186 + $0x3c] sm:$0xf]
      %v220 = vld [vmem:[%s186 + $0x40] sm:$0xf]
      %v221 = vld [vmem:[%s186 + $0x44] sm:$0xf]
      %v222 = vld [vmem:[%s186 + $0x48] sm:$0xf]
      %v223 = vld [vmem:[%s186 + $0x4c] sm:$0xf]
      %v224 = vld [vmem:[%s186 + $0x50] sm:$0xf]
      %v225 = vld [vmem:[%s186 + $0x54] sm:$0xf]
      %v226 = vld [vmem:[%s186 + $0x58] sm:$0xf]
      %v227 = vld [vmem:[%s186 + $0x5c] sm:$0xf]
      %v228 = vld [vmem:[%s186 + $0x60] sm:$0xf]
      %v229 = vld [vmem:[%s186 + $0x64] sm:$0xf]
      %v230 = vld [vmem:[%s186 + $0x68] sm:$0xf]
      %v231 = vld [vmem:[%s186 + $0x6c] sm:$0xf]
      %v232 = vld [vmem:[%s186 + $0x70] sm:$0xf]
      %v233 = vld [vmem:[%s186 + $0x74] sm:$0xf]
      %v234 = vld [vmem:[%s186 + $0x78] sm:$0xf]
      %v235 = vld [vmem:[%s186 + $0x7c] sm:$0xf]
      %v236 = vld [vmem:[%s186 + $0x80] sm:$0xf]
      %v237 = vld [vmem:[%s186 + $0x84] sm:$0xf]
      %v238 = vld [vmem:[%s186 + $0x88] sm:$0xf]
      %v239 = vld [vmem:[%s186 + $0x8c] sm:$0xf]
      %v240 = vld [vmem:[%s186 + $0x90] sm:$0xf]
      %v241 = vld [vmem:[%s186 + $0x94] sm:$0xf]
      %v242 = vld [vmem:[%s186 + $0x98] sm:$0xf]
      %v243 = vld [vmem:[%s186 + $0x9c] sm:$0xf]
      %v244 = vld [vmem:[%s186 + $0xa0] sm:$0xf]
      %v245 = vld [vmem:[%s186 + $0xa4] sm:$0xf]
      %v246 = vld [vmem:[%s186 + $0xa8] sm:$0xf]
      %v247 = vld [vmem:[%s186 + $0xac] sm:$0xf]
      %v248 = vld [vmem:[%s186 + $0xb0] sm:$0xf]
      %v249 = vld [vmem:[%s186 + $0xb4] sm:$0xf]
      %v250 = vld [vmem:[%s186 + $0xb8] sm:$0xf]
      %v251 = vld [vmem:[%s186 + $0xbc] sm:$0xf]
      %v252 = vld [vmem:[%s186 + $0xc0] sm:$0xf]
      %v253 = vld [vmem:[%s186 + $0xc4] sm:$0xf]
      %v254 = vld [vmem:[%s192] sm:$0xf]
      %v255 = vld [vmem:[%s192 + $0x4] sm:$0xf]
      %v256 = vld [vmem:[%s192 + $0x8] sm:$0xf]
      %v257 = vld [vmem:[%s192 + $0xc] sm:$0xf]
      %v258 = vld [vmem:[%s192 + $0x10] sm:$0xf]
      %v259 = vld [vmem:[%s192 + $0x14] sm:$0xf]
      %v260 = vld [vmem:[%s192 + $0x18] sm:$0xf]
      %v261 = vld [vmem:[%s192 + $0x1c] sm:$0xf]
      %v262 = vld [vmem:[%s192 + $0x20] sm:$0xf]
      %v263 = vld [vmem:[%s192 + $0x24] sm:$0xf]
      %v264 = vld [vmem:[%s192 + $0x28] sm:$0xf]
      %v265 = vld [vmem:[%s192 + $0x2c] sm:$0xf]
      %v266 = vld [vmem:[%s192 + $0x30] sm:$0xf]
      %v267 = vld [vmem:[%s192 + $0x34] sm:$0xf]
      %v318 = vunpack.c.l.b16 %v204
      %v319 = vunpack.c.l.b16 %v205
      %v320 = vunpack.c.l.b16 %v206
      %v321 = vunpack.c.l.b16 %v207
      %v322 = vunpack.c.l.b16 %v208
      %v323 = vunpack.c.l.b16 %v209
      %v324 = vunpack.c.l.b16 %v210
      %v325 = vunpack.c.l.b16 %v211
      %v326 = vunpack.c.l.b16 %v212
      %v327 = vunpack.c.l.b16 %v213
      %v328 = vunpack.c.l.b16 %v214
      %v329 = vunpack.c.l.b16 %v215
      %v330 = vunpack.c.l.b16 %v216
      %v331 = vunpack.c.l.b16 %v217
      %v332 = vunpack.c.l.b16 %v218
      %v333 = vunpack.c.l.b16 %v219
      %v334 = vunpack.c.l.b16 %v220
      %v335 = vunpack.c.l.b16 %v221
      %v336 = vunpack.c.l.b16 %v222
      %v337 = vunpack.c.l.b16 %v223
      %v338 = vunpack.c.l.b16 %v224
      %v339 = vunpack.c.l.b16 %v225
      %v340 = vunpack.c.l.b16 %v226
      %v341 = vunpack.c.l.b16 %v227
      %v342 = vunpack.c.l.b16 %v228
      %v343 = vunpack.c.l.b16 %v229
      %v344 = vunpack.c.l.b16 %v230
      %v345 = vunpack.c.l.b16 %v231
      %v346 = vunpack.c.l.b16 %v232
      %v347 = vunpack.c.l.b16 %v233
      %v348 = vunpack.c.l.b16 %v234
      %v349 = vunpack.c.l.b16 %v235
      %v350 = vunpack.c.l.b16 %v236
      %v351 = vunpack.c.l.b16 %v237
      %v352 = vunpack.c.l.b16 %v238
      %v353 = vunpack.c.l.b16 %v239
      %v354 = vunpack.c.l.b16 %v240
      %v355 = vunpack.c.l.b16 %v241
      %v356 = vunpack.c.l.b16 %v242
      %v357 = vunpack.c.l.b16 %v243
      %v358 = vunpack.c.l.b16 %v244
      %v359 = vunpack.c.l.b16 %v245
      %v360 = vunpack.c.l.b16 %v246
      %v361 = vunpack.c.l.b16 %v247
      %v362 = vunpack.c.l.b16 %v248
      %v363 = vunpack.c.l.b16 %v249
      %v364 = vunpack.c.l.b16 %v250
      %v365 = vunpack.c.l.b16 %v251
      %v366 = vunpack.c.l.b16 %v252
      %v367 = vunpack.c.l.b16 %v253
      %v368 = vpack.c.b16 %v319, %v318
      %v369 = vpack.c.b16 %v321, %v320
      %v370 = vpack.c.b16 %v323, %v322
      %v371 = vpack.c.b16 %v325, %v324
      %v372 = vpack.c.b16 %v327, %v326
      %v373 = vpack.c.b16 %v329, %v328
      %v374 = vpack.c.b16 %v331, %v330
      %v375 = vpack.c.b16 %v333, %v332
      %v376 = vpack.c.b16 %v335, %v334
      %v377 = vpack.c.b16 %v337, %v336
      %v378 = vpack.c.b16 %v339, %v338
      %v379 = vpack.c.b16 %v341, %v340
      %v380 = vpack.c.b16 %v343, %v342
      %v381 = vpack.c.b16 %v345, %v344
      %v382 = vpack.c.b16 %v347, %v346
      %v383 = vpack.c.b16 %v349, %v348
      %v384 = vpack.c.b16 %v351, %v350
      %v385 = vpack.c.b16 %v353, %v352
      %v386 = vpack.c.b16 %v355, %v354
      %v387 = vpack.c.b16 %v357, %v356
      %v388 = vpack.c.b16 %v359, %v358
      %v389 = vpack.c.b16 %v361, %v360
      %v390 = vpack.c.b16 %v363, %v362
      %v391 = vpack.c.b16 %v365, %v364
      %v392 = vpack.c.b16 %v367, %v366
      %v407 = vunpack.c.l.b16 %v254
      %v408 = vunpack.c.l.b16 %v255
      %v409 = vunpack.c.l.b16 %v256
      %v410 = vunpack.c.l.b16 %v257
      %v411 = vunpack.c.l.b16 %v258
      %v412 = vunpack.c.l.b16 %v259
      %v413 = vunpack.c.l.b16 %v260
      %v414 = vunpack.c.l.b16 %v261
      %v415 = vunpack.c.l.b16 %v262
      %v416 = vunpack.c.l.b16 %v263
      %v417 = vunpack.c.l.b16 %v264
      %v418 = vunpack.c.l.b16 %v265
      %v419 = vunpack.c.l.b16 %v266
      %v420 = vunpack.c.l.b16 %v267
      %v421 = vpack.c.b16 %v408, %v407
      %v422 = vpack.c.b16 %v410, %v409
      %v423 = vpack.c.b16 %v412, %v411
      %v424 = vpack.c.b16 %v414, %v413
      %v425 = vpack.c.b16 %v416, %v415
      %v426 = vpack.c.b16 %v418, %v417
      %v427 = vpack.c.b16 %v420, %v419
      %vm435 = vcmask 916480
      %v437 = vsel %vm435, %v368, 0
      %v440 = vsel %vm435, %v369, 0
      %v443 = vsel %vm435, %v370, 0
      %v446 = vsel %vm435, %v371, 0
      %v449 = vsel %vm435, %v372, 0
      %v452 = vsel %vm435, %v373, 0
      %v455 = vsel %vm435, %v374, 0
      %v458 = vsel %vm435, %v375, 0
      %v461 = vsel %vm435, %v376, 0
      %v464 = vsel %vm435, %v377, 0
      %v467 = vsel %vm435, %v378, 0
      %v470 = vsel %vm435, %v379, 0
      %v473 = vsel %vm435, %v380, 0
      %v476 = vsel %vm435, %v381, 0
      %v479 = vsel %vm435, %v382, 0
      %v482 = vsel %vm435, %v383, 0
      %v485 = vsel %vm435, %v384, 0
      %v488 = vsel %vm435, %v385, 0
      %v491 = vsel %vm435, %v386, 0
      %v494 = vsel %vm435, %v387, 0
      %v497 = vsel %vm435, %v388, 0
      %v500 = vsel %vm435, %v389, 0
      %v503 = vsel %vm435, %v390, 0
      %v506 = vsel %vm435, %v391, 0
      %v509 = vsel %vm435, %v392, 0
      %511 = vmatprep.subr.bf16.mxu0 0
      %512 = vmatpush1.bf16.msra.mxu0 0
      %513 = vmatprep.subr.bf16.mxu0 0
      %514 = vmatpush1.bf16.msra.mxu0 %v427
      %515 = vmatprep.subr.bf16.mxu0 0
      %516 = vmatpush1.bf16.msra.mxu0 %v426
      %517 = vmatprep.subr.bf16.mxu0 0
      %518 = vmatpush1.bf16.msra.mxu0 %v425
      %519 = vmatprep.subr.bf16.mxu0 0
      %520 = vmatpush1.bf16.msra.mxu0 %v424
      %521 = vmatprep.subr.bf16.mxu0 0
      %522 = vmatpush1.bf16.msra.mxu0 %v423
      %523 = vmatprep.subr.bf16.mxu0 0
      %524 = vmatpush1.bf16.msra.mxu0 %v422
      %525 = vmatprep.subr.bf16.mxu0 0
      %526 = vmatpush1.bf16.msra.mxu0 %v421
      %527 = vmatprep.subr.bf16.mxu0 0
      %528 = vmatpush2.bf16.msra.mxu0 0
      %529 = vmatprep.subr.bf16.mxu0 0
      %530 = vmatpush2.bf16.msra.mxu0 0
      %531 = vmatprep.subr.bf16.mxu0 0
      %532 = vmatpush2.bf16.msra.mxu0 0
      %533 = vmatprep.subr.bf16.mxu0 0
      %534 = vmatpush2.bf16.msra.mxu0 0
      %535 = vmatprep.subr.bf16.mxu0 0
      %536 = vmatpush2.bf16.msra.mxu0 0
      %537 = vmatprep.subr.bf16.mxu0 0
      %538 = vmatpush2.bf16.msra.mxu0 0
      %539 = vmatprep.subr.bf16.mxu0 0
      %540 = vmatpush2.bf16.msra.mxu0 0
      %541 = vmatprep.subr.bf16.mxu0 0
      %542 = vmatpush2.bf16.msra.mxu0 0
      %543 = vmatprep.mubr.bf16.mxu0 0
      %544 = vmatmul.mubr.bf16.gmra.mxu0 %v437
      %v545 = vpop.f32.mrf.mxu0
      %v546 = vadd.f32 0.0, %v545
      %v547 = vpop.f32.mrf.mxu0
      %v548 = vpop.f32.mrf.mxu0
      %v549 = vadd.f32 0.0, %v548
      %v550 = vpop.f32.mrf.mxu0
      %551 = vmatprep.mubr.bf16.mxu0 0
      %552 = vmatmul.mubr.bf16.gmra.mxu0 %v440
      %v553 = vpop.f32.mrf.mxu0
      %v554 = vadd.f32 0.0, %v553
      %v555 = vpop.f32.mrf.mxu0
      %v556 = vpop.f32.mrf.mxu0
      %v557 = vadd.f32 0.0, %v556
      %v558 = vpop.f32.mrf.mxu0
      %559 = vmatprep.mubr.bf16.mxu0 0
      %560 = vmatmul.mubr.bf16.gmra.mxu0 %v443
      %v561 = vpop.f32.mrf.mxu0
      %v562 = vadd.f32 0.0, %v561
      %v563 = vpop.f32.mrf.mxu0
      %v564 = vpop.f32.mrf.mxu0
      %v565 = vadd.f32 0.0, %v564
      %v566 = vpop.f32.mrf.mxu0
      %567 = vmatprep.mubr.bf16.mxu0 0
      %568 = vmatmul.mubr.bf16.gmra.mxu0 %v446
      %v569 = vpop.f32.mrf.mxu0
      %v570 = vadd.f32 0.0, %v569
      %v571 = vpop.f32.mrf.mxu0
      %v572 = vpop.f32.mrf.mxu0
      %v573 = vadd.f32 0.0, %v572
      %v574 = vpop.f32.mrf.mxu0
      %575 = vmatprep.mubr.bf16.mxu0 0
      %576 = vmatmul.mubr.bf16.gmra.mxu0 %v449
      %v577 = vpop.f32.mrf.mxu0
      %v578 = vadd.f32 0.0, %v577
      %v579 = vpop.f32.mrf.mxu0
      %v580 = vpop.f32.mrf.mxu0
      %v581 = vadd.f32 0.0, %v580
      %v582 = vpop.f32.mrf.mxu0
      %583 = vmatprep.mubr.bf16.mxu0 0
      %584 = vmatmul.mubr.bf16.gmra.mxu0 %v452
      %v585 = vpop.f32.mrf.mxu0
      %v586 = vadd.f32 0.0, %v585
      %v587 = vpop.f32.mrf.mxu0
      %v588 = vpop.f32.mrf.mxu0
      %v589 = vadd.f32 0.0, %v588
      %v590 = vpop.f32.mrf.mxu0
      %591 = vmatprep.mubr.bf16.mxu0 0
      %592 = vmatmul.mubr.bf16.gmra.mxu0 %v455
      %v593 = vpop.f32.mrf.mxu0
      %v594 = vadd.f32 0.0, %v593
      %v595 = vpop.f32.mrf.mxu0
      %v596 = vpop.f32.mrf.mxu0
      %v597 = vadd.f32 0.0, %v596
      %v598 = vpop.f32.mrf.mxu0
      %599 = vmatprep.mubr.bf16.mxu0 0
      %600 = vmatmul.mubr.bf16.gmra.mxu0 %v458
      %v601 = vpop.f32.mrf.mxu0
      %v602 = vadd.f32 0.0, %v601
      %v603 = vpop.f32.mrf.mxu0
      %v604 = vpop.f32.mrf.mxu0
      %v605 = vadd.f32 0.0, %v604
      %v606 = vpop.f32.mrf.mxu0
      %607 = vmatprep.mubr.bf16.mxu0 0
      %608 = vmatmul.mubr.bf16.gmra.mxu0 %v461
      %v609 = vpop.f32.mrf.mxu0
      %v610 = vadd.f32 0.0, %v609
      %v611 = vpop.f32.mrf.mxu0
      %v612 = vpop.f32.mrf.mxu0
      %v613 = vadd.f32 0.0, %v612
      %v614 = vpop.f32.mrf.mxu0
      %615 = vmatprep.mubr.bf16.mxu0 0
      %616 = vmatmul.mubr.bf16.gmra.mxu0 %v464
      %v617 = vpop.f32.mrf.mxu0
      %v618 = vadd.f32 0.0, %v617
      %v619 = vpop.f32.mrf.mxu0
      %v620 = vpop.f32.mrf.mxu0
      %v621 = vadd.f32 0.0, %v620
      %v622 = vpop.f32.mrf.mxu0
      %623 = vmatprep.mubr.bf16.mxu0 0
      %624 = vmatmul.mubr.bf16.gmra.mxu0 %v467
      %v625 = vpop.f32.mrf.mxu0
      %v626 = vadd.f32 0.0, %v625
      %v627 = vpop.f32.mrf.mxu0
      %v628 = vpop.f32.mrf.mxu0
      %v629 = vadd.f32 0.0, %v628
      %v630 = vpop.f32.mrf.mxu0
      %631 = vmatprep.mubr.bf16.mxu0 0
      %632 = vmatmul.mubr.bf16.gmra.mxu0 %v470
      %v633 = vpop.f32.mrf.mxu0
      %v634 = vadd.f32 0.0, %v633
      %v635 = vpop.f32.mrf.mxu0
      %v636 = vpop.f32.mrf.mxu0
      %v637 = vadd.f32 0.0, %v636
      %v638 = vpop.f32.mrf.mxu0
      %639 = vmatprep.mubr.bf16.mxu0 0
      %640 = vmatmul.mubr.bf16.gmra.mxu0 %v473
      %v641 = vpop.f32.mrf.mxu0
      %v642 = vadd.f32 0.0, %v641
      %v643 = vpop.f32.mrf.mxu0
      %v644 = vpop.f32.mrf.mxu0
      %v645 = vadd.f32 0.0, %v644
      %v646 = vpop.f32.mrf.mxu0
      %647 = vmatprep.mubr.bf16.mxu0 0
      %648 = vmatmul.mubr.bf16.gmra.mxu0 %v476
      %v649 = vpop.f32.mrf.mxu0
      %v650 = vadd.f32 0.0, %v649
      %v651 = vpop.f32.mrf.mxu0
      %v652 = vpop.f32.mrf.mxu0
      %v653 = vadd.f32 0.0, %v652
      %v654 = vpop.f32.mrf.mxu0
      %655 = vmatprep.mubr.bf16.mxu0 0
      %656 = vmatmul.mubr.bf16.gmra.mxu0 %v479
      %v657 = vpop.f32.mrf.mxu0
      %v658 = vadd.f32 0.0, %v657
      %v659 = vpop.f32.mrf.mxu0
      %v660 = vpop.f32.mrf.mxu0
      %v661 = vadd.f32 0.0, %v660
      %v662 = vpop.f32.mrf.mxu0
      %663 = vmatprep.mubr.bf16.mxu0 0
      %664 = vmatmul.mubr.bf16.gmra.mxu0 %v482
      %v665 = vpop.f32.mrf.mxu0
      %v666 = vadd.f32 0.0, %v665
      %v667 = vpop.f32.mrf.mxu0
      %v668 = vpop.f32.mrf.mxu0
      %v669 = vadd.f32 0.0, %v668
      %v670 = vpop.f32.mrf.mxu0
      %671 = vmatprep.mubr.bf16.mxu0 0
      %672 = vmatmul.mubr.bf16.gmra.mxu0 %v485
      %v673 = vpop.f32.mrf.mxu0
      %v674 = vadd.f32 0.0, %v673
      %v675 = vpop.f32.mrf.mxu0
      %v676 = vpop.f32.mrf.mxu0
      %v677 = vadd.f32 0.0, %v676
      %v678 = vpop.f32.mrf.mxu0
      %679 = vmatprep.mubr.bf16.mxu0 0
      %680 = vmatmul.mubr.bf16.gmra.mxu0 %v488
      %v681 = vpop.f32.mrf.mxu0
      %v682 = vadd.f32 0.0, %v681
      %v683 = vpop.f32.mrf.mxu0
      %v684 = vpop.f32.mrf.mxu0
      %v685 = vadd.f32 0.0, %v684
      %v686 = vpop.f32.mrf.mxu0
      %687 = vmatprep.mubr.bf16.mxu0 0
      %688 = vmatmul.mubr.bf16.gmra.mxu0 %v491
      %v689 = vpop.f32.mrf.mxu0
      %v690 = vadd.f32 0.0, %v689
      %v691 = vpop.f32.mrf.mxu0
      %v692 = vpop.f32.mrf.mxu0
      %v693 = vadd.f32 0.0, %v692
      %v694 = vpop.f32.mrf.mxu0
      %695 = vmatprep.mubr.bf16.mxu0 0
      %696 = vmatmul.mubr.bf16.gmra.mxu0 %v494
      %v697 = vpop.f32.mrf.mxu0
      %v698 = vadd.f32 0.0, %v697
      %v699 = vpop.f32.mrf.mxu0
      %v700 = vpop.f32.mrf.mxu0
      %v701 = vadd.f32 0.0, %v700
      %v702 = vpop.f32.mrf.mxu0
      %703 = vmatprep.mubr.bf16.mxu0 0
      %704 = vmatmul.mubr.bf16.gmra.mxu0 %v497
      %v705 = vpop.f32.mrf.mxu0
      %v706 = vadd.f32 0.0, %v705
      %v707 = vpop.f32.mrf.mxu0
      %v708 = vpop.f32.mrf.mxu0
      %v709 = vadd.f32 0.0, %v708
      %v710 = vpop.f32.mrf.mxu0
      %711 = vmatprep.mubr.bf16.mxu0 0
      %712 = vmatmul.mubr.bf16.gmra.mxu0 %v500
      %v713 = vpop.f32.mrf.mxu0
      %v714 = vadd.f32 0.0, %v713
      %v715 = vpop.f32.mrf.mxu0
      %v716 = vpop.f32.mrf.mxu0
      %v717 = vadd.f32 0.0, %v716
      %v718 = vpop.f32.mrf.mxu0
      %719 = vmatprep.mubr.bf16.mxu0 0
      %720 = vmatmul.mubr.bf16.gmra.mxu0 %v503
      %v721 = vpop.f32.mrf.mxu0
      %v722 = vadd.f32 0.0, %v721
      %v723 = vpop.f32.mrf.mxu0
      %v724 = vpop.f32.mrf.mxu0
      %v725 = vadd.f32 0.0, %v724
      %v726 = vpop.f32.mrf.mxu0
      %727 = vmatprep.mubr.bf16.mxu0 0
      %728 = vmatmul.mubr.bf16.gmra.mxu0 %v506
      %v729 = vpop.f32.mrf.mxu0
      %v730 = vadd.f32 0.0, %v729
      %v731 = vpop.f32.mrf.mxu0
      %v732 = vpop.f32.mrf.mxu0
      %v733 = vadd.f32 0.0, %v732
      %v734 = vpop.f32.mrf.mxu0
      %735 = vmatprep.mubr.bf16.mxu0 0
      %736 = vmatmul.mubr.bf16.gmra.mxu0 %v509
      %v737 = vpop.f32.mrf.mxu0
      %v738 = vadd.f32 0.0, %v737
      %v739 = vpop.f32.mrf.mxu0
      %v740 = vpop.f32.mrf.mxu0
      %v741 = vadd.f32 0.0, %v740
      %v742 = vpop.f32.mrf.mxu0
      %743 = vdwg.mxu0
      %v744 = vtanh.pop %v546
      %v745 = vtanh.pop %v549
      %v746 = vtanh.pop %v554
      %v747 = vtanh.pop %v557
      %v748 = vtanh.pop %v562
      %v749 = vtanh.pop %v565
      %v750 = vtanh.pop %v570
      %v751 = vtanh.pop %v573
      %v752 = vtanh.pop %v578
      %v753 = vtanh.pop %v581
      %v754 = vtanh.pop %v586
      %v755 = vtanh.pop %v589
      %v756 = vtanh.pop %v594
      %v757 = vtanh.pop %v597
      %v758 = vtanh.pop %v602
      %v759 = vtanh.pop %v605
      %v760 = vtanh.pop %v610
      %v761 = vtanh.pop %v613
      %v762 = vtanh.pop %v618
      %v763 = vtanh.pop %v621
      %v764 = vtanh.pop %v626
      %v765 = vtanh.pop %v629
      %v766 = vtanh.pop %v634
      %v767 = vtanh.pop %v637
      %v768 = vtanh.pop %v642
      %v769 = vtanh.pop %v645
      %v770 = vtanh.pop %v650
      %v771 = vtanh.pop %v653
      %v772 = vtanh.pop %v658
      %v773 = vtanh.pop %v661
      %v774 = vtanh.pop %v666
      %v775 = vtanh.pop %v669
      %v776 = vtanh.pop %v674
      %v777 = vtanh.pop %v677
      %v778 = vtanh.pop %v682
      %v779 = vtanh.pop %v685
      %v780 = vtanh.pop %v690
      %v781 = vtanh.pop %v693
      %v782 = vtanh.pop %v698
      %v783 = vtanh.pop %v701
      %v784 = vtanh.pop %v706
      %v785 = vtanh.pop %v709
      %v786 = vtanh.pop %v714
      %v787 = vtanh.pop %v717
      %v788 = vtanh.pop %v722
      %v789 = vtanh.pop %v725
      %v790 = vtanh.pop %v730
      %v791 = vtanh.pop %v733
      %v792 = vtanh.pop %v738
      %v793 = vtanh.pop %v741
      %794 = vst [vmem:[%s201] sm:$0xff] %v744
      %795 = vst [vmem:[%s201 + $0x8] sm:$0xff] %v745
      %796 = vst [vmem:[%s201 + $0x10] sm:$0xff] %v746
      %797 = vst [vmem:[%s201 + $0x18] sm:$0xff] %v747
      %798 = vst [vmem:[%s201 + $0x20] sm:$0xff] %v748
      %799 = vst [vmem:[%s201 + $0x28] sm:$0xff] %v749
      %800 = vst [vmem:[%s201 + $0x30] sm:$0xff] %v750
      %801 = vst [vmem:[%s201 + $0x38] sm:$0xff] %v751
      %802 = vst [vmem:[%s201 + $0x40] sm:$0xff] %v752
      %803 = vst [vmem:[%s201 + $0x48] sm:$0xff] %v753
      %804 = vst [vmem:[%s201 + $0x50] sm:$0xff] %v754
      %805 = vst [vmem:[%s201 + $0x58] sm:$0xff] %v755
      %806 = vst [vmem:[%s201 + $0x60] sm:$0xff] %v756
      %807 = vst [vmem:[%s201 + $0x68] sm:$0xff] %v757
      %808 = vst [vmem:[%s201 + $0x70] sm:$0xff] %v758
      %809 = vst [vmem:[%s201 + $0x78] sm:$0xff] %v759
      %810 = vst [vmem:[%s201 + $0x80] sm:$0xff] %v760
      %811 = vst [vmem:[%s201 + $0x88] sm:$0xff] %v761
      %812 = vst [vmem:[%s201 + $0x90] sm:$0xff] %v762
      %813 = vst [vmem:[%s201 + $0x98] sm:$0xff] %v763
      %814 = vst [vmem:[%s201 + $0xa0] sm:$0xff] %v764
      %815 = vst [vmem:[%s201 + $0xa8] sm:$0xff] %v765
      %816 = vst [vmem:[%s201 + $0xb0] sm:$0xff] %v766
      %817 = vst [vmem:[%s201 + $0xb8] sm:$0xff] %v767
      %818 = vst [vmem:[%s201 + $0xc0] sm:$0xff] %v768
      %819 = vst [vmem:[%s201 + $0xc8] sm:$0xff] %v769
      %820 = vst [vmem:[%s201 + $0xd0] sm:$0xff] %v770
      %821 = vst [vmem:[%s201 + $0xd8] sm:$0xff] %v771
      %822 = vst [vmem:[%s201 + $0xe0] sm:$0xff] %v772
      %823 = vst [vmem:[%s201 + $0xe8] sm:$0xff] %v773
      %824 = vst [vmem:[%s201 + $0xf0] sm:$0xff] %v774
      %825 = vst [vmem:[%s201 + $0xf8] sm:$0xff] %v775
      %826 = vst [vmem:[%s201 + $0x100] sm:$0xff] %v776
      %827 = vst [vmem:[%s201 + $0x108] sm:$0xff] %v777
      %828 = vst [vmem:[%s201 + $0x110] sm:$0xff] %v778
      %829 = vst [vmem:[%s201 + $0x118] sm:$0xff] %v779
      %830 = vst [vmem:[%s201 + $0x120] sm:$0xff] %v780
      %831 = vst [vmem:[%s201 + $0x128] sm:$0xff] %v781
      %832 = vst [vmem:[%s201 + $0x130] sm:$0xff] %v782
      %833 = vst [vmem:[%s201 + $0x138] sm:$0xff] %v783
      %834 = vst [vmem:[%s201 + $0x140] sm:$0xff] %v784
      %835 = vst [vmem:[%s201 + $0x148] sm:$0xff] %v785
      %836 = vst [vmem:[%s201 + $0x150] sm:$0xff] %v786
      %837 = vst [vmem:[%s201 + $0x158] sm:$0xff] %v787
      %838 = vst [vmem:[%s201 + $0x160] sm:$0xff] %v788
      %839 = vst [vmem:[%s201 + $0x168] sm:$0xff] %v789
      %840 = vst [vmem:[%s201 + $0x170] sm:$0xff] %v790
      %841 = vst [vmem:[%s201 + $0x178] sm:$0xff] %v791
      %842 = vst [vmem:[%s201 + $0x180] sm:$0xff] %v792
      %843 = vst [vmem:[%s201 + $0x188] sm:$0xff] %v793
      %s844 = smul.u32 50, %s18
      %p845 = scmp.lt.s32.totalorder %s17, 3
      %s846 = scalar_select %p845, %s17, 3
      %p847 = scmp.lt.s32.totalorder %s844, 49
      %s848 = scalar_select %p847, %s844, 49
      %s849 = smul.addr %s846, 50
      %s850 = sadd.s32 %s848, %s849
      %s851 = smul.addr %s850, 8
      %s852 = scalar_lea.vmem %s2, %s851
      // Predicated region
      $region29: #{generator_forward.7} parent=27 // pred_check
        %p853 = pneg %p99
      $region30: #{generator_forward.7} parent=27 // pred_check_branch
        %855 = sbr.rel (%p853) target = $region32
      $region31: #{generator_forward.7} parent=27 // pred_region
        %s856 = smul.u32 50, %s18
      $region32: #{generator_forward.7} parent=27 // pred_fallthru
        _
    $region28: #{generator_forward.7} parent=5 // pred_fallthru
      _
    %p857 = scmp.le.s32.totalorder 2, %s8
    // Predicated region
    $region33: #{generator_forward.7} parent=5 // pred_check
      %p858 = pneg %p857
    $region34: #{generator_forward.7} parent=5 // pred_check_branch
      %860 = sbr.rel (%p858) target = $region36
    $region35: #{generator_forward.7} parent=5 // pred_region
      %s861 = ssub.s32 %s8, 2
      // Predicated region
      $region37: #{generator_forward.7} parent=35 // pred_check
        %p862 = pneg %p105
      $region38: #{generator_forward.7} parent=35 // pred_check_branch
        %864 = sbr.rel (%p862) target = $region40
      $region39: #{generator_forward.7} parent=35 // pred_region
        %s865 = smul.u32 50, %s20
        %p866 = scmp.lt.s32.totalorder %s19, 3
        %s867 = scalar_select %p866, %s19, 3
        %p868 = scmp.lt.s32.totalorder %s865, 49
        %s869 = scalar_select %p868, %s865, 49
        %s870 = smul.addr %s867, 50
        %s871 = sadd.s32 %s869, %s870
        %s872 = smul.addr %s871, 8
        %s873 = scalar_lea.vmem %s2, %s872
      $region40: #{generator_forward.7} parent=35 // pred_fallthru
        _
    $region36: #{generator_forward.7} parent=5 // pred_fallthru
      _
  $region6: #{generator_forward.7} parent=0 // loop_footer
    %s12 = sadd.s32 1, %s8
  $region7: #{generator_forward.7} parent=0 // loop_footer_branch
    %7 = sbr.rel target = $region3
  $region8: #{generator_forward.7} parent=0 // loop_exit
    _

</llo_original>
